<compile_context>
chip_gen: v7x
topology: tpu7x:2x2x1
jax: 0.10.0
libtpu: 0.0.40
codegen_flags: <defaults>
</compile_context>

<pallas_src>
import jax
import jax.numpy as jnp
from jax.experimental import pallas as pl
from jax.experimental.pallas import tpu as pltpu


_VMEM_LIMIT = 32 * 1024 * 1024   # per-call footprint is ~10-15 MiB, fits v5e/v6e/v7x


# ----------------------------------------------------------------------------
# Kernel: fused space-to-depth conv  out[t,w,:] = relu(b + sum_r a[t,r,w,:] @ W[r])
# ----------------------------------------------------------------------------
def _patch_gemm_kernel(a_ref, w_ref, b_ref, *o_refs):
    # a_ref: (th, p, tw, p*C) bf16   w_ref: (p, p*C, Cout) bf16 (resident)
    # b_ref: (1, Cout) f32           o_refs: one or two of (th, tw, Cout) bf16/f32
    th, p, tw, pc = a_ref.shape
    cout = w_ref.shape[2]

    # p MXU dots with f32 accumulation (bf16 operands are MXU-native).
    # The (th, tw, pc) -> (th*tw, pc) merge is layout-preserving: tile picking
    # guarantees tw % 8 == 0 whenever th > 1 (else it is a trivial squeeze).
    a0 = a_ref[:, 0, :, :].reshape(th * tw, pc)
    acc = jnp.dot(a0, w_ref[0], preferred_element_type=jnp.float32)
    for r in range(1, p):                                   # static unroll, p in {2,4}
        a_r = a_ref[:, r, :, :].reshape(th * tw, pc)
        acc = acc + jnp.dot(a_r, w_ref[r], preferred_element_type=jnp.float32)

    acc = jnp.maximum(acc + b_ref[...], 0.0)                # pure-f32 epilogue (v5e-safe)
    acc = acc.reshape(th, tw, cout)
    for o_ref in o_refs:                                    # bf16 chain and/or f32 feature
        o_ref[...] = acc.astype(o_ref.dtype)


# ----------------------------------------------------------------------------
# Tiling
# ----------------------------------------------------------------------------
def _largest_divisor(n, cap, mult=1):
    """Largest d with n % d == 0, d <= cap, d % mult == 0 (None if no such d)."""
    for d in range(max(1, min(cap, n)), 0, -1):
        if n % d == 0 and d % mult == 0:
            return d
    return None


def _pick_tiles(rows, cols, cout):
    """(th patch-rows, tw patch-cols) per grid step.

    ~1k-4k output positions per step (scaled with Cout so the f32 accumulator
    tile stays ~2 MiB); tw is a multiple of 8 or the full width (legal blocks
    and layout-preserving in-kernel merges); >=2 grid steps whenever possible
    so both v7x TensorCores get work.
    """
    pos_target = int(min(4096, max(256, (2 << 20) // (cout * 4))))
    if cols > pos_target:
        tw = _largest_divisor(cols, pos_target, mult=8)
        if tw is None:                       # no multiple-of-8 divisor: full width
            tw = cols
        th = 1
    else:
        tw = cols
        th = (_largest_divisor(rows, max(1, pos_target // tw))
              if cols % 8 == 0 else 1)
    if (rows // th) * (cols // tw) < 2 and rows > 1:        # keep both TCs busy
        th = _largest_divisor(rows, max(1, rows // 2))
    return th, tw


# ----------------------------------------------------------------------------
# One stage = one pallas_call
# ----------------------------------------------------------------------------
def _stage_call(a4, w3, b, *, want_bf16, want_f32):
    rows, p, cols, pc = a4.shape
    cout = w3.shape[2]
    th, tw = _pick_tiles(rows, cols, cout)
    grid = (rows // th, cols // tw)

    out_block = pl.BlockSpec((th, tw, cout), lambda i, j: (i, j, 0))
    out_shapes, out_specs = [], []
    if want_bf16:                                           # feeds the next stage
        out_shapes.append(jax.ShapeDtypeStruct((rows, cols, cout), jnp.bfloat16))
        out_specs.append(out_block)
    if want_f32:                                            # returned feature map
        out_shapes.append(jax.ShapeDtypeStruct((rows, cols, cout), jnp.float32))
        out_specs.append(out_block)

    return pl.pallas_call(
        _patch_gemm_kernel,
        out_shape=tuple(out_shapes),
        grid_spec=pltpu.PrefetchScalarGridSpec(
            num_scalar_prefetch=0,
            grid=grid,
            in_specs=[
                pl.BlockSpec((th, p, tw, pc), lambda i, j: (i, 0, j, 0)),  # activations
                pl.BlockSpec((p, pc, cout), lambda i, j: (0, 0, 0)),       # resident W
                pl.BlockSpec((1, cout), lambda i, j: (0, 0)),              # resident b
            ],
            out_specs=tuple(out_specs),
        ),
        compiler_params=pltpu.CompilerParams(
            dimension_semantics=("parallel", "parallel"),
            vmem_limit_bytes=_VMEM_LIMIT,
        ),
    )(a4, w3, b.reshape(1, cout).astype(jnp.float32))


# (patch, Cin, Cout): patchify stride 4, then three stride-2 stages.
# Cumulative strides: 4, 8, 16, 32; features taken at strides 8/16/32.
_STAGES = ((4, 3, 128), (2, 128, 128), (2, 128, 256), (2, 256, 512))
_FEATURE_STAGES = (1, 2, 3)


@jax.jit
def _forward(params, x_nchw):
    # External API is NCHW (PyTorch convention); compute channels-last.
    x = jnp.transpose(x_nchw, (0, 2, 3, 1))
    N, H, W, C0 = x.shape
    ph, pw = (-H) % 32, (-W) % 32
    if ph or pw:                                            # pad to stride-32
        x = jnp.pad(x, ((0, 0), (0, ph), (0, pw), (0, 0)))
    Hp, Wp = H + ph, W + pw

    # Chain layout: (N*Hi, Wi, C) bf16.  Every per-stage re-view below is a
    # contiguous (free) reshape; the patch gather itself happens in the DMA.
    chain = x.astype(jnp.bfloat16).reshape(N * Hp, Wp, C0)
    rows, cols, cin = N * Hp, Wp, C0
    stride = 1
    feats = []
    for idx, ((p, _, cout), (w3, b)) in enumerate(zip(_STAGES, params)):
        rows //= p
        cols //= p
        stride *= p
        a4 = chain.reshape(rows, p, cols, p * cin)          # (N*Ho, p, Wo, p*C), free
        want_bf16 = idx < len(_STAGES) - 1
        want_f32 = idx in _FEATURE_STAGES
        outs = _stage_call(a4, w3, b, want_bf16=want_bf16, want_f32=want_f32)
        if want_f32:
            y32 = outs[-1]                                  # f32 feature output
            hf, wf = -(-H // stride), -(-W // stride)       # crop stride-32 padding
            feat = y32.reshape(N, rows // N, cols, cout)[:, :hf, :wf, :]
            feats.append(jnp.transpose(feat, (0, 3, 1, 2)))  # NCHW (PyTorch contract)
        if want_bf16:
            chain = outs[0]                                 # bf16 chain output
            cin = cout
    return feats


class FeatureExtractorPallas:
    """Synthetic multi-scale feature extractor (channels [128, 256, 512])."""

    channels = [128, 256, 512]

    def __init__(self, key):
        self.params = []
        for p, cin, cout in _STAGES:
            key, kw, kb = jax.random.split(key, 3)
            fan_in = p * p * cin
            # Weight stored as (p, p*C, Cout): row-major (sub-row r, sub-col, channel)
            # so the kernel can take whole leading-dim slices without relayout.
            w = (jax.random.normal(kw, (p, p * cin, cout), jnp.float32)
                 * (fan_in ** -0.5)).astype(jnp.bfloat16)
            b = jax.random.normal(kb, (cout,), jnp.float32) * 0.01
            self.params.append((w, b))

    def __call__(self, x_nchw):
        return _forward(self.params, x_nchw)


if __name__ == "__main__":
    key = jax.random.PRNGKey(0)
    key, kx = jax.random.split(key)
    # Small stride-32-compatible RGB input: N=2, C=3, H=W=64.
    x = jax.random.normal(kx, (2, 3, 64, 64), jnp.float32)

    model = FeatureExtractorPallas(key)
    feats = jax.block_until_ready(model(x))

    expected = [(2, 128, 8, 8), (2, 256, 4, 4), (2, 512, 2, 2)]
    assert [tuple(f.shape) for f in feats] == expected, [f.shape for f in feats]
    assert all(f.dtype == jnp.float32 for f in feats)
    assert all(bool(jnp.all(jnp.isfinite(f))) for f in feats)
    print("KERNEL_OK")
</pallas_src>

<mosaic_0001>
module attributes {stable_mosaic.version = 11 : i64} {
  func.func @_patch_gemm_kernel(%arg0: i32, %arg1: i32, %arg2: memref<16x4x16x12xbf16, #tpu.memory_space<vmem>>, %arg3: memref<4x12x128xbf16, #tpu.memory_space<vmem>>, %arg4: memref<1x128xf32, #tpu.memory_space<vmem>>, %arg5: memref<16x16x128xbf16, #tpu.memory_space<vmem>>) attributes {dimension_semantics = [#tpu.dimension_semantics<parallel>, #tpu.dimension_semantics<parallel>], iteration_bounds = array<i64: 2, 1>, scalar_prefetch = 0 : i64, scratch_operands = 0 : i64, tpu.core_type = #tpu.core_type<tc>, window_params = [{transform_indices = @transform_0, window_bounds = array<i64: 16, 4, 16, 12>}, {pipeline_mode = #tpu.pipeline_mode<synchronous>, transform_indices = @transform_1, window_bounds = array<i64: 4, 12, 128>}, {pipeline_mode = #tpu.pipeline_mode<synchronous>, transform_indices = @transform_2, window_bounds = array<i64: 1, 128>}, {transform_indices = @transform_3, window_bounds = array<i64: 16, 16, 128>}]} {
    %c0 = arith.constant 0 : index
    %c0_0 = arith.constant 0 : index
    %c0_1 = arith.constant 0 : index
    %c0_2 = arith.constant 0 : index
    %0 = vector.load %arg2[%c0, %c0_0, %c0_1, %c0_2] : memref<16x4x16x12xbf16, #tpu.memory_space<vmem>>, vector<16x1x16x12xbf16>
    %1 = vector.shape_cast %0 : vector<16x1x16x12xbf16> to vector<16x16x12xbf16>
    %2 = vector.shape_cast %1 : vector<16x16x12xbf16> to vector<256x12xbf16>
    %c0_3 = arith.constant 0 : index
    %c0_4 = arith.constant 0 : index
    %c0_5 = arith.constant 0 : index
    %3 = vector.load %arg3[%c0_3, %c0_4, %c0_5] : memref<4x12x128xbf16, #tpu.memory_space<vmem>>, vector<1x12x128xbf16>
    %4 = vector.shape_cast %3 : vector<1x12x128xbf16> to vector<12x128xbf16>
    %cst = arith.constant dense<0.000000e+00> : vector<256x128xf32>
    %5 = tpu.matmul %2, %4, %cst {dimension_numbers = #tpu.dot_dimension_numbers<[1], [0], [0], [1], [0, 0, 1, 1], [], []>} : vector<256x12xbf16>, vector<12x128xbf16>, vector<256x128xf32> -> vector<256x128xf32>
    %c0_6 = arith.constant 0 : index
    %c1 = arith.constant 1 : index
    %c0_7 = arith.constant 0 : index
    %c0_8 = arith.constant 0 : index
    %6 = vector.load %arg2[%c0_6, %c1, %c0_7, %c0_8] : memref<16x4x16x12xbf16, #tpu.memory_space<vmem>>, vector<16x1x16x12xbf16>
    %7 = vector.shape_cast %6 : vector<16x1x16x12xbf16> to vector<16x16x12xbf16>
    %8 = vector.shape_cast %7 : vector<16x16x12xbf16> to vector<256x12xbf16>
    %c1_9 = arith.constant 1 : index
    %c0_10 = arith.constant 0 : index
    %c0_11 = arith.constant 0 : index
    %9 = vector.load %arg3[%c1_9, %c0_10, %c0_11] : memref<4x12x128xbf16, #tpu.memory_space<vmem>>, vector<1x12x128xbf16>
    %10 = vector.shape_cast %9 : vector<1x12x128xbf16> to vector<12x128xbf16>
    %cst_12 = arith.constant dense<0.000000e+00> : vector<256x128xf32>
    %11 = tpu.matmul %8, %10, %cst_12 {dimension_numbers = #tpu.dot_dimension_numbers<[1], [0], [0], [1], [0, 0, 1, 1], [], []>} : vector<256x12xbf16>, vector<12x128xbf16>, vector<256x128xf32> -> vector<256x128xf32>
    %12 = arith.addf %5, %11 : vector<256x128xf32>
    %c0_13 = arith.constant 0 : index
    %c2 = arith.constant 2 : index
    %c0_14 = arith.constant 0 : index
    %c0_15 = arith.constant 0 : index
    %13 = vector.load %arg2[%c0_13, %c2, %c0_14, %c0_15] : memref<16x4x16x12xbf16, #tpu.memory_space<vmem>>, vector<16x1x16x12xbf16>
    %14 = vector.shape_cast %13 : vector<16x1x16x12xbf16> to vector<16x16x12xbf16>
    %15 = vector.shape_cast %14 : vector<16x16x12xbf16> to vector<256x12xbf16>
    %c2_16 = arith.constant 2 : index
    %c0_17 = arith.constant 0 : index
    %c0_18 = arith.constant 0 : index
    %16 = vector.load %arg3[%c2_16, %c0_17, %c0_18] : memref<4x12x128xbf16, #tpu.memory_space<vmem>>, vector<1x12x128xbf16>
    %17 = vector.shape_cast %16 : vector<1x12x128xbf16> to vector<12x128xbf16>
    %cst_19 = arith.constant dense<0.000000e+00> : vector<256x128xf32>
    %18 = tpu.matmul %15, %17, %cst_19 {dimension_numbers = #tpu.dot_dimension_numbers<[1], [0], [0], [1], [0, 0, 1, 1], [], []>} : vector<256x12xbf16>, vector<12x128xbf16>, vector<256x128xf32> -> vector<256x128xf32>
    %19 = arith.addf %12, %18 : vector<256x128xf32>
    %c0_20 = arith.constant 0 : index
    %c3 = arith.constant 3 : index
    %c0_21 = arith.constant 0 : index
    %c0_22 = arith.constant 0 : index
    %20 = vector.load %arg2[%c0_20, %c3, %c0_21, %c0_22] : memref<16x4x16x12xbf16, #tpu.memory_space<vmem>>, vector<16x1x16x12xbf16>
    %21 = vector.shape_cast %20 : vector<16x1x16x12xbf16> to vector<16x16x12xbf16>
    %22 = vector.shape_cast %21 : vector<16x16x12xbf16> to vector<256x12xbf16>
    %c3_23 = arith.constant 3 : index
    %c0_24 = arith.constant 0 : index
    %c0_25 = arith.constant 0 : index
    %23 = vector.load %arg3[%c3_23, %c0_24, %c0_25] : memref<4x12x128xbf16, #tpu.memory_space<vmem>>, vector<1x12x128xbf16>
    %24 = vector.shape_cast %23 : vector<1x12x128xbf16> to vector<12x128xbf16>
    %cst_26 = arith.constant dense<0.000000e+00> : vector<256x128xf32>
    %25 = tpu.matmul %22, %24, %cst_26 {dimension_numbers = #tpu.dot_dimension_numbers<[1], [0], [0], [1], [0, 0, 1, 1], [], []>} : vector<256x12xbf16>, vector<12x128xbf16>, vector<256x128xf32> -> vector<256x128xf32>
    %26 = arith.addf %19, %25 : vector<256x128xf32>
    %c0_27 = arith.constant 0 : index
    %c0_28 = arith.constant 0 : index
    %27 = vector.load %arg4[%c0_27, %c0_28] : memref<1x128xf32, #tpu.memory_space<vmem>>, vector<1x128xf32>
    %28 = vector.broadcast %27 : vector<1x128xf32> to vector<256x128xf32>
    %29 = arith.addf %26, %28 : vector<256x128xf32>
    %cst_29 = arith.constant 0.000000e+00 : f32
    %30 = vector.broadcast %cst_29 : f32 to vector<256x128xf32>
    %31 = arith.maximumf %29, %30 : vector<256x128xf32>
    %32 = vector.shape_cast %31 : vector<256x128xf32> to vector<16x16x128xf32>
    %33 = arith.truncf %32 : vector<16x16x128xf32> to vector<16x16x128xbf16>
    %c0_30 = arith.constant 0 : index
    %c0_31 = arith.constant 0 : index
    %c0_32 = arith.constant 0 : index
    %34 = vector.load %arg5[%c0_30, %c0_31, %c0_32] : memref<16x16x128xbf16, #tpu.memory_space<vmem>>, vector<16x16x128xbf16>
    tpu.vector_store %arg5[%c0_30, %c0_31, %c0_32], %33 {strides = array<i32>} : memref<16x16x128xbf16, #tpu.memory_space<vmem>>, vector<16x16x128xbf16>,
    return
  }
  func.func @transform_0(%arg0: i32, %arg1: i32) -> (i32, i32, i32, i32) {
    %c0_i32 = arith.constant 0 : i32
    %c0_i32_0 = arith.constant 0 : i32
    %c0_i32_1 = arith.constant 0 : i32
    return %arg0, %c0_i32, %arg1, %c0_i32_0 : i32, i32, i32, i32
  }
  func.func @transform_1(%arg0: i32, %arg1: i32) -> (i32, i32, i32) {
    %c0_i32 = arith.constant 0 : i32
    %c0_i32_0 = arith.constant 0 : i32
    %c0_i32_1 = arith.constant 0 : i32
    %c0_i32_2 = arith.constant 0 : i32
    return %c0_i32, %c0_i32_0, %c0_i32_1 : i32, i32, i32
  }
  func.func @transform_2(%arg0: i32, %arg1: i32) -> (i32, i32) {
    %c0_i32 = arith.constant 0 : i32
    %c0_i32_0 = arith.constant 0 : i32
    %c0_i32_1 = arith.constant 0 : i32
    return %c0_i32, %c0_i32_0 : i32, i32
  }
  func.func @transform_3(%arg0: i32, %arg1: i32) -> (i32, i32, i32) {
    %c0_i32 = arith.constant 0 : i32
    %c0_i32_0 = arith.constant 0 : i32
    return %arg0, %arg1, %c0_i32 : i32, i32, i32
  }
}

module attributes {stable_mosaic.version = 11 : i64} {
  func.func @_patch_gemm_kernel(%arg0: i32, %arg1: i32, %arg2: memref<8x2x8x256xbf16, #tpu.memory_space<vmem>>, %arg3: memref<2x256x128xbf16, #tpu.memory_space<vmem>>, %arg4: memref<1x128xf32, #tpu.memory_space<vmem>>, %arg5: memref<8x8x128xbf16, #tpu.memory_space<vmem>>, %arg6: memref<8x8x128xf32, #tpu.memory_space<vmem>>) attributes {dimension_semantics = [#tpu.dimension_semantics<parallel>, #tpu.dimension_semantics<parallel>], iteration_bounds = array<i64: 2, 1>, scalar_prefetch = 0 : i64, scratch_operands = 0 : i64, tpu.core_type = #tpu.core_type<tc>, window_params = [{transform_indices = @transform_0, window_bounds = array<i64: 8, 2, 8, 256>}, {pipeline_mode = #tpu.pipeline_mode<synchronous>, transform_indices = @transform_1, window_bounds = array<i64: 2, 256, 128>}, {pipeline_mode = #tpu.pipeline_mode<synchronous>, transform_indices = @transform_2, window_bounds = array<i64: 1, 128>}, {transform_indices = @transform_3, window_bounds = array<i64: 8, 8, 128>}, {transform_indices = @transform_4, window_bounds = array<i64: 8, 8, 128>}]} {
    %c0 = arith.constant 0 : index
    %c0_0 = arith.constant 0 : index
    %c0_1 = arith.constant 0 : index
    %c0_2 = arith.constant 0 : index
    %0 = vector.load %arg2[%c0, %c0_0, %c0_1, %c0_2] : memref<8x2x8x256xbf16, #tpu.memory_space<vmem>>, vector<8x1x8x256xbf16>
    %1 = vector.shape_cast %0 : vector<8x1x8x256xbf16> to vector<8x8x256xbf16>
    %2 = vector.shape_cast %1 : vector<8x8x256xbf16> to vector<64x256xbf16>
    %c0_3 = arith.constant 0 : index
    %c0_4 = arith.constant 0 : index
    %c0_5 = arith.constant 0 : index
    %3 = vector.load %arg3[%c0_3, %c0_4, %c0_5] : memref<2x256x128xbf16, #tpu.memory_space<vmem>>, vector<1x256x128xbf16>
    %4 = vector.shape_cast %3 : vector<1x256x128xbf16> to vector<256x128xbf16>
    %cst = arith.constant dense<0.000000e+00> : vector<64x128xf32>
    %5 = tpu.matmul %2, %4, %cst {dimension_numbers = #tpu.dot_dimension_numbers<[1], [0], [0], [1], [0, 0, 1, 1], [], []>} : vector<64x256xbf16>, vector<256x128xbf16>, vector<64x128xf32> -> vector<64x128xf32>
    %c0_6 = arith.constant 0 : index
    %c1 = arith.constant 1 : index
    %c0_7 = arith.constant 0 : index
    %c0_8 = arith.constant 0 : index
    %6 = vector.load %arg2[%c0_6, %c1, %c0_7, %c0_8] : memref<8x2x8x256xbf16, #tpu.memory_space<vmem>>, vector<8x1x8x256xbf16>
    %7 = vector.shape_cast %6 : vector<8x1x8x256xbf16> to vector<8x8x256xbf16>
    %8 = vector.shape_cast %7 : vector<8x8x256xbf16> to vector<64x256xbf16>
    %c1_9 = arith.constant 1 : index
    %c0_10 = arith.constant 0 : index
    %c0_11 = arith.constant 0 : index
    %9 = vector.load %arg3[%c1_9, %c0_10, %c0_11] : memref<2x256x128xbf16, #tpu.memory_space<vmem>>, vector<1x256x128xbf16>
    %10 = vector.shape_cast %9 : vector<1x256x128xbf16> to vector<256x128xbf16>
    %cst_12 = arith.constant dense<0.000000e+00> : vector<64x128xf32>
    %11 = tpu.matmul %8, %10, %cst_12 {dimension_numbers = #tpu.dot_dimension_numbers<[1], [0], [0], [1], [0, 0, 1, 1], [], []>} : vector<64x256xbf16>, vector<256x128xbf16>, vector<64x128xf32> -> vector<64x128xf32>
    %12 = arith.addf %5, %11 : vector<64x128xf32>
    %c0_13 = arith.constant 0 : index
    %c0_14 = arith.constant 0 : index
    %13 = vector.load %arg4[%c0_13, %c0_14] : memref<1x128xf32, #tpu.memory_space<vmem>>, vector<1x128xf32>
    %14 = vector.broadcast %13 : vector<1x128xf32> to vector<64x128xf32>
    %15 = arith.addf %12, %14 : vector<64x128xf32>
    %cst_15 = arith.constant 0.000000e+00 : f32
    %16 = vector.broadcast %cst_15 : f32 to vector<64x128xf32>
    %17 = arith.maximumf %15, %16 : vector<64x128xf32>
    %18 = vector.shape_cast %17 : vector<64x128xf32> to vector<8x8x128xf32>
    %19 = arith.truncf %18 : vector<8x8x128xf32> to vector<8x8x128xbf16>
    %c0_16 = arith.constant 0 : index
    %c0_17 = arith.constant 0 : index
    %c0_18 = arith.constant 0 : index
    %20 = vector.load %arg5[%c0_16, %c0_17, %c0_18] : memref<8x8x128xbf16, #tpu.memory_space<vmem>>, vector<8x8x128xbf16>
    tpu.vector_store %arg5[%c0_16, %c0_17, %c0_18], %19 {strides = array<i32>} : memref<8x8x128xbf16, #tpu.memory_space<vmem>>, vector<8x8x128xbf16>,
    %c0_19 = arith.constant 0 : index
    %c0_20 = arith.constant 0 : index
    %c0_21 = arith.constant 0 : index
    %21 = vector.load %arg6[%c0_19, %c0_20, %c0_21] : memref<8x8x128xf32, #tpu.memory_space<vmem>>, vector<8x8x128xf32>
    tpu.vector_store %arg6[%c0_19, %c0_20, %c0_21], %18 {strides = array<i32>} : memref<8x8x128xf32, #tpu.memory_space<vmem>>, vector<8x8x128xf32>,
    return
  }
  func.func @transform_0(%arg0: i32, %arg1: i32) -> (i32, i32, i32, i32) {
    %c0_i32 = arith.constant 0 : i32
    %c0_i32_0 = arith.constant 0 : i32
    %c0_i32_1 = arith.constant 0 : i32
    return %arg0, %c0_i32, %arg1, %c0_i32_0 : i32, i32, i32, i32
  }
  func.func @transform_1(%arg0: i32, %arg1: i32) -> (i32, i32, i32) {
    %c0_i32 = arith.constant 0 : i32
    %c0_i32_0 = arith.constant 0 : i32
    %c0_i32_1 = arith.constant 0 : i32
    %c0_i32_2 = arith.constant 0 : i32
    return %c0_i32, %c0_i32_0, %c0_i32_1 : i32, i32, i32
  }
  func.func @transform_2(%arg0: i32, %arg1: i32) -> (i32, i32) {
    %c0_i32 = arith.constant 0 : i32
    %c0_i32_0 = arith.constant 0 : i32
    %c0_i32_1 = arith.constant 0 : i32
    return %c0_i32, %c0_i32_0 : i32, i32
  }
  func.func @transform_3(%arg0: i32, %arg1: i32) -> (i32, i32, i32) {
    %c0_i32 = arith.constant 0 : i32
    %c0_i32_0 = arith.constant 0 : i32
    return %arg0, %arg1, %c0_i32 : i32, i32, i32
  }
  func.func @transform_4(%arg0: i32, %arg1: i32) -> (i32, i32, i32) {
    %c0_i32 = arith.constant 0 : i32
    %c0_i32_0 = arith.constant 0 : i32
    return %arg0, %arg1, %c0_i32 : i32, i32, i32
  }
}

module attributes {stable_mosaic.version = 11 : i64} {
  func.func @_patch_gemm_kernel(%arg0: i32, %arg1: i32, %arg2: memref<1x2x4x256xbf16, #tpu.memory_space<vmem>>, %arg3: memref<2x256x256xbf16, #tpu.memory_space<vmem>>, %arg4: memref<1x256xf32, #tpu.memory_space<vmem>>, %arg5: memref<1x4x256xbf16, #tpu.memory_space<vmem>>, %arg6: memref<1x4x256xf32, #tpu.memory_space<vmem>>) attributes {dimension_semantics = [#tpu.dimension_semantics<parallel>, #tpu.dimension_semantics<parallel>], iteration_bounds = array<i64: 8, 1>, scalar_prefetch = 0 : i64, scratch_operands = 0 : i64, tpu.core_type = #tpu.core_type<tc>, window_params = [{transform_indices = @transform_0, window_bounds = array<i64: 1, 2, 4, 256>}, {pipeline_mode = #tpu.pipeline_mode<synchronous>, transform_indices = @transform_1, window_bounds = array<i64: 2, 256, 256>}, {pipeline_mode = #tpu.pipeline_mode<synchronous>, transform_indices = @transform_2, window_bounds = array<i64: 1, 256>}, {transform_indices = @transform_3, window_bounds = array<i64: 1, 4, 256>}, {transform_indices = @transform_4, window_bounds = array<i64: 1, 4, 256>}]} {
    %c0 = arith.constant 0 : index
    %c0_0 = arith.constant 0 : index
    %c0_1 = arith.constant 0 : index
    %c0_2 = arith.constant 0 : index
    %0 = vector.load %arg2[%c0, %c0_0, %c0_1, %c0_2] : memref<1x2x4x256xbf16, #tpu.memory_space<vmem>>, vector<1x1x4x256xbf16>
    %1 = vector.shape_cast %0 : vector<1x1x4x256xbf16> to vector<1x4x256xbf16>
    %2 = vector.shape_cast %1 : vector<1x4x256xbf16> to vector<4x256xbf16>
    %c0_3 = arith.constant 0 : index
    %c0_4 = arith.constant 0 : index
    %c0_5 = arith.constant 0 : index
    %3 = vector.load %arg3[%c0_3, %c0_4, %c0_5] : memref<2x256x256xbf16, #tpu.memory_space<vmem>>, vector<1x256x256xbf16>
    %4 = vector.shape_cast %3 : vector<1x256x256xbf16> to vector<256x256xbf16>
    %cst = arith.constant dense<0.000000e+00> : vector<4x256xf32>
    %5 = tpu.matmul %2, %4, %cst {dimension_numbers = #tpu.dot_dimension_numbers<[1], [0], [0], [1], [0, 0, 1, 1], [], []>} : vector<4x256xbf16>, vector<256x256xbf16>, vector<4x256xf32> -> vector<4x256xf32>
    %c0_6 = arith.constant 0 : index
    %c1 = arith.constant 1 : index
    %c0_7 = arith.constant 0 : index
    %c0_8 = arith.constant 0 : index
    %6 = vector.load %arg2[%c0_6, %c1, %c0_7, %c0_8] : memref<1x2x4x256xbf16, #tpu.memory_space<vmem>>, vector<1x1x4x256xbf16>
    %7 = vector.shape_cast %6 : vector<1x1x4x256xbf16> to vector<1x4x256xbf16>
    %8 = vector.shape_cast %7 : vector<1x4x256xbf16> to vector<4x256xbf16>
    %c1_9 = arith.constant 1 : index
    %c0_10 = arith.constant 0 : index
    %c0_11 = arith.constant 0 : index
    %9 = vector.load %arg3[%c1_9, %c0_10, %c0_11] : memref<2x256x256xbf16, #tpu.memory_space<vmem>>, vector<1x256x256xbf16>
    %10 = vector.shape_cast %9 : vector<1x256x256xbf16> to vector<256x256xbf16>
    %cst_12 = arith.constant dense<0.000000e+00> : vector<4x256xf32>
    %11 = tpu.matmul %8, %10, %cst_12 {dimension_numbers = #tpu.dot_dimension_numbers<[1], [0], [0], [1], [0, 0, 1, 1], [], []>} : vector<4x256xbf16>, vector<256x256xbf16>, vector<4x256xf32> -> vector<4x256xf32>
    %12 = arith.addf %5, %11 : vector<4x256xf32>
    %c0_13 = arith.constant 0 : index
    %c0_14 = arith.constant 0 : index
    %13 = vector.load %arg4[%c0_13, %c0_14] : memref<1x256xf32, #tpu.memory_space<vmem>>, vector<1x256xf32>
    %14 = vector.broadcast %13 : vector<1x256xf32> to vector<4x256xf32>
    %15 = arith.addf %12, %14 : vector<4x256xf32>
    %cst_15 = arith.constant 0.000000e+00 : f32
    %16 = vector.broadcast %cst_15 : f32 to vector<4x256xf32>
    %17 = arith.maximumf %15, %16 : vector<4x256xf32>
    %18 = vector.shape_cast %17 : vector<4x256xf32> to vector<1x4x256xf32>
    %19 = arith.truncf %18 : vector<1x4x256xf32> to vector<1x4x256xbf16>
    %c0_16 = arith.constant 0 : index
    %c0_17 = arith.constant 0 : index
    %c0_18 = arith.constant 0 : index
    %20 = vector.load %arg5[%c0_16, %c0_17, %c0_18] : memref<1x4x256xbf16, #tpu.memory_space<vmem>>, vector<1x4x256xbf16>
    tpu.vector_store %arg5[%c0_16, %c0_17, %c0_18], %19 {strides = array<i32>} : memref<1x4x256xbf16, #tpu.memory_space<vmem>>, vector<1x4x256xbf16>,
    %c0_19 = arith.constant 0 : index
    %c0_20 = arith.constant 0 : index
    %c0_21 = arith.constant 0 : index
    %21 = vector.load %arg6[%c0_19, %c0_20, %c0_21] : memref<1x4x256xf32, #tpu.memory_space<vmem>>, vector<1x4x256xf32>
    tpu.vector_store %arg6[%c0_19, %c0_20, %c0_21], %18 {strides = array<i32>} : memref<1x4x256xf32, #tpu.memory_space<vmem>>, vector<1x4x256xf32>,
    return
  }
  func.func @transform_0(%arg0: i32, %arg1: i32) -> (i32, i32, i32, i32) {
    %c0_i32 = arith.constant 0 : i32
    %c0_i32_0 = arith.constant 0 : i32
    %c0_i32_1 = arith.constant 0 : i32
    return %arg0, %c0_i32, %arg1, %c0_i32_0 : i32, i32, i32, i32
  }
  func.func @transform_1(%arg0: i32, %arg1: i32) -> (i32, i32, i32) {
    %c0_i32 = arith.constant 0 : i32
    %c0_i32_0 = arith.constant 0 : i32
    %c0_i32_1 = arith.constant 0 : i32
    %c0_i32_2 = arith.constant 0 : i32
    return %c0_i32, %c0_i32_0, %c0_i32_1 : i32, i32, i32
  }
  func.func @transform_2(%arg0: i32, %arg1: i32) -> (i32, i32) {
    %c0_i32 = arith.constant 0 : i32
    %c0_i32_0 = arith.constant 0 : i32
    %c0_i32_1 = arith.constant 0 : i32
    return %c0_i32, %c0_i32_0 : i32, i32
  }
  func.func @transform_3(%arg0: i32, %arg1: i32) -> (i32, i32, i32) {
    %c0_i32 = arith.constant 0 : i32
    %c0_i32_0 = arith.constant 0 : i32
    return %arg0, %arg1, %c0_i32 : i32, i32, i32
  }
  func.func @transform_4(%arg0: i32, %arg1: i32) -> (i32, i32, i32) {
    %c0_i32 = arith.constant 0 : i32
    %c0_i32_0 = arith.constant 0 : i32
    return %arg0, %arg1, %c0_i32 : i32, i32, i32
  }
}

module attributes {stable_mosaic.version = 11 : i64} {
  func.func @_patch_gemm_kernel(%arg0: i32, %arg1: i32, %arg2: memref<1x2x2x512xbf16, #tpu.memory_space<vmem>>, %arg3: memref<2x512x512xbf16, #tpu.memory_space<vmem>>, %arg4: memref<1x512xf32, #tpu.memory_space<vmem>>, %arg5: memref<1x2x512xf32, #tpu.memory_space<vmem>>) attributes {dimension_semantics = [#tpu.dimension_semantics<parallel>, #tpu.dimension_semantics<parallel>], iteration_bounds = array<i64: 4, 1>, scalar_prefetch = 0 : i64, scratch_operands = 0 : i64, tpu.core_type = #tpu.core_type<tc>, window_params = [{transform_indices = @transform_0, window_bounds = array<i64: 1, 2, 2, 512>}, {pipeline_mode = #tpu.pipeline_mode<synchronous>, transform_indices = @transform_1, window_bounds = array<i64: 2, 512, 512>}, {pipeline_mode = #tpu.pipeline_mode<synchronous>, transform_indices = @transform_2, window_bounds = array<i64: 1, 512>}, {transform_indices = @transform_3, window_bounds = array<i64: 1, 2, 512>}]} {
    %c0 = arith.constant 0 : index
    %c0_0 = arith.constant 0 : index
    %c0_1 = arith.constant 0 : index
    %c0_2 = arith.constant 0 : index
    %0 = vector.load %arg2[%c0, %c0_0, %c0_1, %c0_2] : memref<1x2x2x512xbf16, #tpu.memory_space<vmem>>, vector<1x1x2x512xbf16>
    %1 = vector.shape_cast %0 : vector<1x1x2x512xbf16> to vector<1x2x512xbf16>
    %2 = vector.shape_cast %1 : vector<1x2x512xbf16> to vector<2x512xbf16>
    %c0_3 = arith.constant 0 : index
    %c0_4 = arith.constant 0 : index
    %c0_5 = arith.constant 0 : index
    %3 = vector.load %arg3[%c0_3, %c0_4, %c0_5] : memref<2x512x512xbf16, #tpu.memory_space<vmem>>, vector<1x512x512xbf16>
    %4 = vector.shape_cast %3 : vector<1x512x512xbf16> to vector<512x512xbf16>
    %cst = arith.constant dense<0.000000e+00> : vector<2x512xf32>
    %5 = tpu.matmul %2, %4, %cst {dimension_numbers = #tpu.dot_dimension_numbers<[1], [0], [0], [1], [0, 0, 1, 1], [], []>} : vector<2x512xbf16>, vector<512x512xbf16>, vector<2x512xf32> -> vector<2x512xf32>
    %c0_6 = arith.constant 0 : index
    %c1 = arith.constant 1 : index
    %c0_7 = arith.constant 0 : index
    %c0_8 = arith.constant 0 : index
    %6 = vector.load %arg2[%c0_6, %c1, %c0_7, %c0_8] : memref<1x2x2x512xbf16, #tpu.memory_space<vmem>>, vector<1x1x2x512xbf16>
    %7 = vector.shape_cast %6 : vector<1x1x2x512xbf16> to vector<1x2x512xbf16>
    %8 = vector.shape_cast %7 : vector<1x2x512xbf16> to vector<2x512xbf16>
    %c1_9 = arith.constant 1 : index
    %c0_10 = arith.constant 0 : index
    %c0_11 = arith.constant 0 : index
    %9 = vector.load %arg3[%c1_9, %c0_10, %c0_11] : memref<2x512x512xbf16, #tpu.memory_space<vmem>>, vector<1x512x512xbf16>
    %10 = vector.shape_cast %9 : vector<1x512x512xbf16> to vector<512x512xbf16>
    %cst_12 = arith.constant dense<0.000000e+00> : vector<2x512xf32>
    %11 = tpu.matmul %8, %10, %cst_12 {dimension_numbers = #tpu.dot_dimension_numbers<[1], [0], [0], [1], [0, 0, 1, 1], [], []>} : vector<2x512xbf16>, vector<512x512xbf16>, vector<2x512xf32> -> vector<2x512xf32>
    %12 = arith.addf %5, %11 : vector<2x512xf32>
    %c0_13 = arith.constant 0 : index
    %c0_14 = arith.constant 0 : index
    %13 = vector.load %arg4[%c0_13, %c0_14] : memref<1x512xf32, #tpu.memory_space<vmem>>, vector<1x512xf32>
    %14 = vector.broadcast %13 : vector<1x512xf32> to vector<2x512xf32>
    %15 = arith.addf %12, %14 : vector<2x512xf32>
    %cst_15 = arith.constant 0.000000e+00 : f32
    %16 = vector.broadcast %cst_15 : f32 to vector<2x512xf32>
    %17 = arith.maximumf %15, %16 : vector<2x512xf32>
    %18 = vector.shape_cast %17 : vector<2x512xf32> to vector<1x2x512xf32>
    %c0_16 = arith.constant 0 : index
    %c0_17 = arith.constant 0 : index
    %c0_18 = arith.constant 0 : index
    %19 = vector.load %arg5[%c0_16, %c0_17, %c0_18] : memref<1x2x512xf32, #tpu.memory_space<vmem>>, vector<1x2x512xf32>
    tpu.vector_store %arg5[%c0_16, %c0_17, %c0_18], %18 {strides = array<i32>} : memref<1x2x512xf32, #tpu.memory_space<vmem>>, vector<1x2x512xf32>,
    return
  }
  func.func @transform_0(%arg0: i32, %arg1: i32) -> (i32, i32, i32, i32) {
    %c0_i32 = arith.constant 0 : i32
    %c0_i32_0 = arith.constant 0 : i32
    %c0_i32_1 = arith.constant 0 : i32
    return %arg0, %c0_i32, %arg1, %c0_i32_0 : i32, i32, i32, i32
  }
  func.func @transform_1(%arg0: i32, %arg1: i32) -> (i32, i32, i32) {
    %c0_i32 = arith.constant 0 : i32
    %c0_i32_0 = arith.constant 0 : i32
    %c0_i32_1 = arith.constant 0 : i32
    %c0_i32_2 = arith.constant 0 : i32
    return %c0_i32, %c0_i32_0, %c0_i32_1 : i32, i32, i32
  }
  func.func @transform_2(%arg0: i32, %arg1: i32) -> (i32, i32) {
    %c0_i32 = arith.constant 0 : i32
    %c0_i32_0 = arith.constant 0 : i32
    %c0_i32_1 = arith.constant 0 : i32
    return %c0_i32, %c0_i32_0 : i32, i32
  }
  func.func @transform_3(%arg0: i32, %arg1: i32) -> (i32, i32, i32) {
    %c0_i32 = arith.constant 0 : i32
    %c0_i32_0 = arith.constant 0 : i32
    return %arg0, %arg1, %c0_i32 : i32, i32, i32
  }
}

</mosaic_0001>

<llo_original>
// kernel: _forward.5
$region0: #{_forward.5}
  #allocation0 [shape = 'u32[]', space=smem, size = 0x4, offset = 0x4, fixed_abs, tag = 'smem constant byte address 0x4 - core index']
  #allocation1 [shape = 'u32[144,128]{1,0:T(1,128)}', space=vmem, size = 0x12000, scoped, tag = 'internal scratch']
  %s0 = inlined_call_operand.vmem [shape: bf16[16,2,8,256], index: 0, kind: input, shape index: {}]
  %s1 = inlined_call_operand.vmem [shape: bf16[2,256,128], index: 1, kind: input, shape index: {}]
  %s2 = inlined_call_operand.vmem [shape: f32[1,128], index: 2, kind: input, shape index: {}]
  %s3 = inlined_call_operand.vmem [shape: bf16[16,8,128], index: 3, kind: output, shape index: {0}]
  %s4 = inlined_call_operand.hbm [shape: f32[16,8,128], index: 4, kind: output, shape index: {1}]
  %5 = xla_tuple %s3, %s4
  %s6 = sld [smem:[#allocation0]]
  $region53: #{_forward.5} parent=0
    _
  %s8 = ssub.s32 1, %s6
  %s9 = scalar_select 0, %s8, %s6
  $region1: #{_forward.5} parent=0
    #allocation2 [shape = 'u8[65536]{0}', space=vmem, size = 0x10000, scoped, tag = 'output window, operand 1']
    #allocation3 [shape = 's32[2]{0}', space=sflag, size = 0x8, scoped, tag = 'scoped memory for _forward.5']
    %10 = vsyncpa [#allocation3], 0
    %s11 = scalar_lea.sflag [#allocation3], 1
    %12 = vsyncpa %s11, 0
    loop: start=0, step=1, limit=4
    $region2: #{_forward.5} parent=1 // loop_pre_header
      _
    $region3: #{_forward.5} parent=1 // loop_header
      %s14 = sphi 0, %s18
      %p15 = scmp.ge.s32.totalorder %s14, 4
      %s21 = sphi 0, %s33
      %s22 = sphi 0, %s29
      %s23 = sphi 0, %s21
      %s24 = sphi 0, %s22
      %s25 = sphi 0, %s23
      %s26 = sphi 0, %s24
      %s38 = sphi 0, %s40
      %s41 = sphi 0, %s38
      %s42 = sphi 0, %s41
      %s58 = sphi 0, %s42
      %s62 = sphi 0, %s62
      %s64 = sphi 0, %s62
      %s65 = sphi 0, %s64
      %s79 = sphi 0, %s65
      %s83 = sphi 0, %s83
      %s85 = sphi 0, %s83
      %s86 = sphi 0, %s85
      %s100 = sphi 0, %s86
      %s108 = sphi 0, %s110
      %s111 = sphi 0, %s108
      %s112 = sphi 0, %s111
      %s128 = sphi 0, %s112
      %s136 = sphi 0, %s138
      %s139 = sphi 0, %s136
      %s140 = sphi 0, %s139
      %s156 = sphi 0, %s140
    $region4: #{_forward.5} parent=1 // loop_header_branch
      %17 = sbr.rel (%p15) target = $region8
    $region5: #{_forward.5} parent=1 // loop_body
      %s19 = ssub.s32 %s14, 1
      %s20 = ssub.s32 %s14, 2
      %s27 = sadd.s32 1, %s22
      %p28 = scmp.ge.s32.totalorder %s27, 1
      %s29 = scalar_select %p28, 0, %s27
      %s30 = sadd.s32 1, %s21
      %s31 = scalar_select %p28, %s30, %s21
      %p32 = scmp.ge.s32.totalorder %s31, 2
      %s33 = scalar_select %p32, 0, %s31
      %s34 = ssub.s32 %s21, %s33
      %s35 = ssub.s32 %s22, %s29
      %s36 = sor.u32 %s34, %s35
      %p37 = scmp.eq.s32.totalorder %s36, 0
      %s39 = sadd.s32 %s38, 1
      %s40 = scalar_select %p37, %s38, %s39
      %p43 = pneg %p37
      %p44 = scmp.eq.s32.totalorder %s14, 1
      %p45 = por %p43, %p44
      %p46 = scmp.ne.s32.totalorder %s38, %s41
      %p47 = scmp.eq.s32.totalorder %s14, 0
      %p48 = por %p46, %p47
      %p49 = scmp.ne.s32.totalorder %s38, %s41
      %p50 = scmp.eq.s32.totalorder %s19, 1
      %p51 = por %p49, %p50
      %p52 = scmp.ne.s32.totalorder %s41, %s42
      %p53 = scmp.eq.s32.totalorder %s19, 0
      %p54 = por %p52, %p53
      %p55 = scmp.ne.s32.totalorder %s41, %s42
      %p56 = scmp.eq.s32.totalorder %s20, 1
      %p57 = por %p55, %p56
      %p59 = scmp.ne.s32.totalorder %s42, %s58
      %p60 = scmp.eq.s32.totalorder %s20, 0
      %p61 = por %p59, %p60
      %s63 = sadd.s32 %s62, 1
      %p66 = scmp.eq.s32.totalorder %s14, 1
      %p67 = scmp.ne.s32.totalorder %s62, %s64
      %p68 = scmp.eq.s32.totalorder %s14, 0
      %p69 = por %p67, %p68
      %p70 = scmp.ne.s32.totalorder %s62, %s64
      %p71 = scmp.eq.s32.totalorder %s19, 1
      %p72 = por %p70, %p71
      %p73 = scmp.ne.s32.totalorder %s64, %s65
      %p74 = scmp.eq.s32.totalorder %s19, 0
      %p75 = por %p73, %p74
      %p76 = scmp.ne.s32.totalorder %s64, %s65
      %p77 = scmp.eq.s32.totalorder %s20, 1
      %p78 = por %p76, %p77
      %p80 = scmp.ne.s32.totalorder %s65, %s79
      %p81 = scmp.eq.s32.totalorder %s20, 0
      %p82 = por %p80, %p81
      %s84 = sadd.s32 %s83, 1
      %p87 = scmp.eq.s32.totalorder %s14, 1
      %p88 = scmp.ne.s32.totalorder %s83, %s85
      %p89 = scmp.eq.s32.totalorder %s14, 0
      %p90 = por %p88, %p89
      %p91 = scmp.ne.s32.totalorder %s83, %s85
      %p92 = scmp.eq.s32.totalorder %s19, 1
      %p93 = por %p91, %p92
      %p94 = scmp.ne.s32.totalorder %s85, %s86
      %p95 = scmp.eq.s32.totalorder %s19, 0
      %p96 = por %p94, %p95
      %p97 = scmp.ne.s32.totalorder %s85, %s86
      %p98 = scmp.eq.s32.totalorder %s20, 1
      %p99 = por %p97, %p98
      %p101 = scmp.ne.s32.totalorder %s86, %s100
      %p102 = scmp.eq.s32.totalorder %s20, 0
      %p103 = por %p101, %p102
      %s104 = ssub.s32 %s21, %s33
      %s105 = ssub.s32 %s22, %s29
      %s106 = sor.u32 %s104, %s105
      %p107 = scmp.eq.s32.totalorder %s106, 0
      %s109 = sadd.s32 %s108, 1
      %s110 = scalar_select %p107, %s108, %s109
      %p113 = pneg %p107
      %p114 = scmp.eq.s32.totalorder %s14, 1
      %p115 = por %p113, %p114
      %p116 = scmp.ne.s32.totalorder %s108, %s111
      %p117 = scmp.eq.s32.totalorder %s14, 0
      %p118 = por %p116, %p117
      %p119 = scmp.ne.s32.totalorder %s108, %s111
      %p120 = scmp.eq.s32.totalorder %s19, 1
      %p121 = por %p119, %p120
      %p122 = scmp.ne.s32.totalorder %s111, %s112
      %p123 = scmp.eq.s32.totalorder %s19, 0
      %p124 = por %p122, %p123
      %p125 = scmp.ne.s32.totalorder %s111, %s112
      %p126 = scmp.eq.s32.totalorder %s20, 1
      %p127 = por %p125, %p126
      %p129 = scmp.ne.s32.totalorder %s112, %s128
      %p130 = scmp.eq.s32.totalorder %s20, 0
      %p131 = por %p129, %p130
      %s132 = ssub.s32 %s21, %s33
      %s133 = ssub.s32 %s22, %s29
      %s134 = sor.u32 %s132, %s133
      %p135 = scmp.eq.s32.totalorder %s134, 0
      %s137 = sadd.s32 %s136, 1
      %s138 = scalar_select %p135, %s136, %s137
      %p141 = pneg %p135
      %p142 = scmp.eq.s32.totalorder %s14, 1
      %p143 = por %p141, %p142
      %p144 = scmp.ne.s32.totalorder %s136, %s139
      %p145 = scmp.eq.s32.totalorder %s14, 0
      %p146 = por %p144, %p145
      %p147 = scmp.ne.s32.totalorder %s136, %s139
      %p148 = scmp.eq.s32.totalorder %s19, 1
      %p149 = por %p147, %p148
      %p150 = scmp.ne.s32.totalorder %s139, %s140
      %p151 = scmp.eq.s32.totalorder %s19, 0
      %p152 = por %p150, %p151
      %p153 = scmp.ne.s32.totalorder %s139, %s140
      %p154 = scmp.eq.s32.totalorder %s20, 1
      %p155 = por %p153, %p154
      %p157 = scmp.ne.s32.totalorder %s140, %s156
      %p158 = scmp.eq.s32.totalorder %s20, 0
      %p159 = por %p157, %p158
      %p160 = scmp.le.s32.totalorder 1, %s14
      %p161 = scmp.lt.s32.totalorder %s14, 3
      %p162 = pnand %p160, %p161
      %p163 = pneg %p162
      // Predicated region
      $region9: #{_forward.5} parent=5 // pred_check
        _
      $region10: #{_forward.5} parent=5 // pred_check_branch
        %165 = sbr.rel (%p162) target = $region12
      $region11: #{_forward.5} parent=5 // pred_region
        %s166 = ssub.s32 %s14, 1
        // Predicated region
        $region13: #{_forward.5} parent=11 // pred_check
          %p167 = pneg %p75
        $region14: #{_forward.5} parent=11 // pred_check_branch
          %169 = sbr.rel (%p167) target = $region16
        $region15: #{_forward.5} parent=11 // pred_region
          _
        $region16: #{_forward.5} parent=11 // pred_fallthru
          _
        // Predicated region
        $region17: #{_forward.5} parent=11 // pred_check
          %p170 = pneg %p96
        $region18: #{_forward.5} parent=11 // pred_check_branch
          %172 = sbr.rel (%p170) target = $region20
        $region19: #{_forward.5} parent=11 // pred_region
          _
        $region20: #{_forward.5} parent=11 // pred_fallthru
          _
      $region12: #{_forward.5} parent=5 // pred_fallthru
        _
      %p173 = scmp.lt.s32.totalorder %s14, 2
      // Predicated region
      $region21: #{_forward.5} parent=5 // pred_check
        %p174 = pneg %p173
      $region22: #{_forward.5} parent=5 // pred_check_branch
        %176 = sbr.rel (%p174) target = $region24
      $region23: #{_forward.5} parent=5 // pred_region
        // Predicated region
        $region25: #{_forward.5} parent=23 // pred_check
          %p177 = pneg %p48
        $region26: #{_forward.5} parent=23 // pred_check_branch
          %179 = sbr.rel (%p177) target = $region28
        $region27: #{_forward.5} parent=23 // pred_region
          %s180 = smul.u32 8, %s21
          %p181 = scmp.lt.s32.totalorder %s180, 15
          %s182 = scalar_select %p181, %s180, 15
          %p183 = scmp.lt.s32.totalorder %s22, 0
          %s184 = scalar_select %p183, %s22, 0
          %s185 = smul.addr %s184, 2
          %s186 = smul.addr %s182, 4
          %s187 = sadd.s32 %s185, %s186
          %s188 = smul.addr %s187, 4
          %s189 = scalar_lea.vmem %s0, %s188
          %s190 = smul.u32 8, %s21
        $region28: #{_forward.5} parent=23 // pred_fallthru
          _
      $region24: #{_forward.5} parent=5 // pred_fallthru
        _
      %p191 = scmp.le.s32.totalorder 1, %s14
      %p192 = scmp.lt.s32.totalorder %s14, 3
      %p193 = pnand %p191, %p192
      %p194 = pneg %p193
      // Predicated region
      $region29: #{_forward.5} parent=5 // pred_check
        _
      $region30: #{_forward.5} parent=5 // pred_check_branch
        %196 = sbr.rel (%p193) target = $region32
      $region31: #{_forward.5} parent=5 // pred_region
        %s197 = ssub.s32 %s14, 1
        %s198 = smul.u32 8, %s23
        %p199 = scmp.lt.s32.totalorder %s198, 15
        %s200 = scalar_select %p199, %s198, 15
        %p201 = scmp.lt.s32.totalorder %s24, 0
        %s202 = scalar_select %p201, %s24, 0
        %s203 = smul.addr %s202, 2
        %s204 = smul.addr %s200, 4
        %s205 = sadd.s32 %s203, %s204
        %s206 = smul.addr %s205, 4
        %s207 = scalar_lea.vmem %s0, %s206
        %p208 = pneg %p54
        %p209 = pneg %p51
        %p210 = pneg %p75
        %p211 = pneg %p72
        %p212 = pneg %p96
        %p213 = pneg %p93
        %p214 = pneg %p124
        %p215 = pneg %p121
        %s216 = smul.u32 8, %s23
        %p217 = scmp.lt.s32.totalorder %s216, 15
        %s218 = scalar_select %p217, %s216, 15
        %p219 = scmp.lt.s32.totalorder %s24, 0
        %s220 = scalar_select %p219, %s24, 0
        %s221 = sadd.s32 %s220, %s218
        %s222 = smul.addr %s221, 4
        %s223 = scalar_lea.vmem %s3, %s222
        %p224 = pneg %p152
        %p225 = pneg %p149
        %s226 = sand.u32 %s139, 1
        %s227 = scalar_lea.sflag [#allocation3], %s226
        %s228 = sand.u32 %s139, 1
        %s229 = smul.addr %s228, 64
        %s230 = scalar_lea.vmem [#allocation2], %s229
        %s231 = smul.u32 8, %s23
        %p232 = scmp.lt.s32.totalorder %s231, 15
        %s233 = scalar_select %p232, %s231, 15
        %p234 = scmp.lt.s32.totalorder %s24, 0
        %s235 = scalar_select %p234, %s24, 0
        %s236 = smul.addr %s235, 2
        %s237 = smul.addr %s233, 4
        %s238 = sadd.s32 %s236, %s237
        %s239 = smul.addr %s238, 4
        %s240 = scalar_lea.vmem %s0, %s239
        %s241 = smul.u32 8, %s23
        %s242 = smul.u32 8, %s23
        %p243 = scmp.lt.s32.totalorder %s242, 15
        %s244 = scalar_select %p243, %s242, 15
        %p245 = scmp.lt.s32.totalorder %s24, 0
        %s246 = scalar_select %p245, %s24, 0
        %s247 = sadd.s32 %s246, %s244
        %s248 = smul.addr %s247, 4
        %s249 = scalar_lea.vmem %s3, %s248
        %s250 = smul.u32 8, %s23
        %s251 = smul.u32 8, %s23
        %v253 = vld [vmem:[%s240] sm:$0xff]
        %v254 = vld [vmem:[%s240 + $0x10] sm:$0xff]
        %v255 = vld [vmem:[%s240 + $0x20] sm:$0xff]
        %v256 = vld [vmem:[%s240 + $0x30] sm:$0xff]
        %v257 = vld [vmem:[%s240 + $0x40] sm:$0xff]
        %v258 = vld [vmem:[%s240 + $0x50] sm:$0xff]
        %v259 = vld [vmem:[%s240 + $0x60] sm:$0xff]
        %v260 = vld [vmem:[%s240 + $0x70] sm:$0xff]
        %v261 = vld [vmem:[%s1] sm:$0xf]
        %v262 = vld [vmem:[%s1 + $0x4] sm:$0xf]
        %v263 = vld [vmem:[%s1 + $0x8] sm:$0xf]
        %v264 = vld [vmem:[%s1 + $0xc] sm:$0xf]
        %v265 = vld [vmem:[%s1 + $0x10] sm:$0xf]
        %v266 = vld [vmem:[%s1 + $0x14] sm:$0xf]
        %v267 = vld [vmem:[%s1 + $0x18] sm:$0xf]
        %v268 = vld [vmem:[%s1 + $0x1c] sm:$0xf]
        %v269 = vld [vmem:[%s1 + $0x20] sm:$0xf]
        %v270 = vld [vmem:[%s1 + $0x24] sm:$0xf]
        %v271 = vld [vmem:[%s1 + $0x28] sm:$0xf]
        %v272 = vld [vmem:[%s1 + $0x2c] sm:$0xf]
        %v273 = vld [vmem:[%s1 + $0x30] sm:$0xf]
        %v274 = vld [vmem:[%s1 + $0x34] sm:$0xf]
        %v275 = vld [vmem:[%s1 + $0x38] sm:$0xf]
        %v276 = vld [vmem:[%s1 + $0x3c] sm:$0xf]
        %v277 = vld [vmem:[%s1 + $0x40] sm:$0xf]
        %v278 = vld [vmem:[%s1 + $0x44] sm:$0xf]
        %v279 = vld [vmem:[%s1 + $0x48] sm:$0xf]
        %v280 = vld [vmem:[%s1 + $0x4c] sm:$0xf]
        %v281 = vld [vmem:[%s1 + $0x50] sm:$0xf]
        %v282 = vld [vmem:[%s1 + $0x54] sm:$0xf]
        %v283 = vld [vmem:[%s1 + $0x58] sm:$0xf]
        %v284 = vld [vmem:[%s1 + $0x5c] sm:$0xf]
        %v285 = vld [vmem:[%s1 + $0x60] sm:$0xf]
        %v286 = vld [vmem:[%s1 + $0x64] sm:$0xf]
        %v287 = vld [vmem:[%s1 + $0x68] sm:$0xf]
        %v288 = vld [vmem:[%s1 + $0x6c] sm:$0xf]
        %v289 = vld [vmem:[%s1 + $0x70] sm:$0xf]
        %v290 = vld [vmem:[%s1 + $0x74] sm:$0xf]
        %v291 = vld [vmem:[%s1 + $0x78] sm:$0xf]
        %v292 = vld [vmem:[%s1 + $0x7c] sm:$0xf]
        %s293 = scalar_lea.vmem %s240, 8
        %v294 = vld [vmem:[%s293] sm:$0xff]
        %v295 = vld [vmem:[%s293 + $0x10] sm:$0xff]
        %v296 = vld [vmem:[%s293 + $0x20] sm:$0xff]
        %v297 = vld [vmem:[%s293 + $0x30] sm:$0xff]
        %v298 = vld [vmem:[%s293 + $0x40] sm:$0xff]
        %v299 = vld [vmem:[%s293 + $0x50] sm:$0xff]
        %v300 = vld [vmem:[%s293 + $0x60] sm:$0xff]
        %v301 = vld [vmem:[%s293 + $0x70] sm:$0xff]
        %s302 = scalar_lea.vmem %s1, 128
        %v303 = vld [vmem:[%s302] sm:$0xf]
        %v304 = vld [vmem:[%s302 + $0x4] sm:$0xf]
        %v305 = vld [vmem:[%s302 + $0x8] sm:$0xf]
        %v306 = vld [vmem:[%s302 + $0xc] sm:$0xf]
        %v307 = vld [vmem:[%s302 + $0x10] sm:$0xf]
        %v308 = vld [vmem:[%s302 + $0x14] sm:$0xf]
        %v309 = vld [vmem:[%s302 + $0x18] sm:$0xf]
        %v310 = vld [vmem:[%s302 + $0x1c] sm:$0xf]
        %v311 = vld [vmem:[%s302 + $0x20] sm:$0xf]
        %v312 = vld [vmem:[%s302 + $0x24] sm:$0xf]
        %v313 = vld [vmem:[%s302 + $0x28] sm:$0xf]
        %v314 = vld [vmem:[%s302 + $0x2c] sm:$0xf]
        %v315 = vld [vmem:[%s302 + $0x30] sm:$0xf]
        %v316 = vld [vmem:[%s302 + $0x34] sm:$0xf]
        %v317 = vld [vmem:[%s302 + $0x38] sm:$0xf]
        %v318 = vld [vmem:[%s302 + $0x3c] sm:$0xf]
        %v319 = vld [vmem:[%s302 + $0x40] sm:$0xf]
        %v320 = vld [vmem:[%s302 + $0x44] sm:$0xf]
        %v321 = vld [vmem:[%s302 + $0x48] sm:$0xf]
        %v322 = vld [vmem:[%s302 + $0x4c] sm:$0xf]
        %v323 = vld [vmem:[%s302 + $0x50] sm:$0xf]
        %v324 = vld [vmem:[%s302 + $0x54] sm:$0xf]
        %v325 = vld [vmem:[%s302 + $0x58] sm:$0xf]
        %v326 = vld [vmem:[%s302 + $0x5c] sm:$0xf]
        %v327 = vld [vmem:[%s302 + $0x60] sm:$0xf]
        %v328 = vld [vmem:[%s302 + $0x64] sm:$0xf]
        %v329 = vld [vmem:[%s302 + $0x68] sm:$0xf]
        %v330 = vld [vmem:[%s302 + $0x6c] sm:$0xf]
        %v331 = vld [vmem:[%s302 + $0x70] sm:$0xf]
        %v332 = vld [vmem:[%s302 + $0x74] sm:$0xf]
        %v333 = vld [vmem:[%s302 + $0x78] sm:$0xf]
        %v334 = vld [vmem:[%s302 + $0x7c] sm:$0xf]
        %v343 = vunpack.c.l.b16 %v294
        %v344 = vunpack.c.h.b16 %v294
        %v345 = vunpack.c.l.b16 %v295
        %v346 = vunpack.c.h.b16 %v295
        %v347 = vunpack.c.l.b16 %v296
        %v348 = vunpack.c.h.b16 %v296
        %v349 = vunpack.c.l.b16 %v297
        %v350 = vunpack.c.h.b16 %v297
        %v351 = vunpack.c.l.b16 %v298
        %v352 = vunpack.c.h.b16 %v298
        %v353 = vunpack.c.l.b16 %v299
        %v354 = vunpack.c.h.b16 %v299
        %v355 = vunpack.c.l.b16 %v300
        %v356 = vunpack.c.h.b16 %v300
        %v357 = vunpack.c.l.b16 %v301
        %v358 = vunpack.c.h.b16 %v301
        %v359 = vpack.c.b16 %v345, %v343
        %v360 = vpack.c.b16 %v346, %v344
        %v361 = vpack.c.b16 %v349, %v347
        %v362 = vpack.c.b16 %v350, %v348
        %v363 = vpack.c.b16 %v353, %v351
        %v364 = vpack.c.b16 %v354, %v352
        %v365 = vpack.c.b16 %v357, %v355
        %v366 = vpack.c.b16 %v358, %v356
        %v407 = vunpack.c.l.b16 %v303
        %v408 = vunpack.c.l.b16 %v304
        %v409 = vunpack.c.l.b16 %v305
        %v410 = vunpack.c.l.b16 %v306
        %v411 = vunpack.c.l.b16 %v307
        %v412 = vunpack.c.l.b16 %v308
        %v413 = vunpack.c.l.b16 %v309
        %v414 = vunpack.c.l.b16 %v310
        %v415 = vunpack.c.l.b16 %v311
        %v416 = vunpack.c.l.b16 %v312
        %v417 = vunpack.c.l.b16 %v313
        %v418 = vunpack.c.l.b16 %v314
        %v419 = vunpack.c.l.b16 %v315
        %v420 = vunpack.c.l.b16 %v316
        %v421 = vunpack.c.l.b16 %v317
        %v422 = vunpack.c.l.b16 %v318
        %v423 = vunpack.c.l.b16 %v319
        %v424 = vunpack.c.l.b16 %v320
        %v425 = vunpack.c.l.b16 %v321
        %v426 = vunpack.c.l.b16 %v322
        %v427 = vunpack.c.l.b16 %v323
        %v428 = vunpack.c.l.b16 %v324
        %v429 = vunpack.c.l.b16 %v325
        %v430 = vunpack.c.l.b16 %v326
        %v431 = vunpack.c.l.b16 %v327
        %v432 = vunpack.c.l.b16 %v328
        %v433 = vunpack.c.l.b16 %v329
        %v434 = vunpack.c.l.b16 %v330
        %v435 = vunpack.c.l.b16 %v331
        %v436 = vunpack.c.l.b16 %v332
        %v437 = vunpack.c.l.b16 %v333
        %v438 = vunpack.c.l.b16 %v334
        %v439 = vpack.c.b16 %v408, %v407
        %v440 = vpack.c.b16 %v410, %v409
        %v441 = vpack.c.b16 %v412, %v411
        %v442 = vpack.c.b16 %v414, %v413
        %v443 = vpack.c.b16 %v416, %v415
        %v444 = vpack.c.b16 %v418, %v417
        %v445 = vpack.c.b16 %v420, %v419
        %v446 = vpack.c.b16 %v422, %v421
        %v447 = vpack.c.b16 %v424, %v423
        %v448 = vpack.c.b16 %v426, %v425
        %v449 = vpack.c.b16 %v428, %v427
        %v450 = vpack.c.b16 %v430, %v429
        %v451 = vpack.c.b16 %v432, %v431
        %v452 = vpack.c.b16 %v434, %v433
        %v453 = vpack.c.b16 %v436, %v435
        %v454 = vpack.c.b16 %v438, %v437
        %471 = vmatprep.subr.bf16.mxu0 0
        %472 = vmatpush1.bf16.msra.mxu0 %v439
        %473 = vmatprep.subr.bf16.mxu0 0
        %474 = vmatpush1.bf16.msra.mxu0 %v440
        %475 = vmatprep.subr.bf16.mxu0 0
        %476 = vmatpush1.bf16.msra.mxu0 %v441
        %477 = vmatprep.subr.bf16.mxu0 0
        %478 = vmatpush1.bf16.msra.mxu0 %v442
        %479 = vmatprep.subr.bf16.mxu0 0
        %480 = vmatpush1.bf16.msra.mxu0 %v443
        %481 = vmatprep.subr.bf16.mxu0 0
        %482 = vmatpush1.bf16.msra.mxu0 %v444
        %483 = vmatprep.subr.bf16.mxu0 0
        %484 = vmatpush1.bf16.msra.mxu0 %v445
        %485 = vmatprep.subr.bf16.mxu0 0
        %486 = vmatpush1.bf16.msra.mxu0 %v446
        %487 = vmatprep.subr.bf16.mxu0 0
        %488 = vmatpush1.bf16.msra.mxu0 %v447
        %489 = vmatprep.subr.bf16.mxu0 0
        %490 = vmatpush1.bf16.msra.mxu0 %v448
        %491 = vmatprep.subr.bf16.mxu0 0
        %492 = vmatpush1.bf16.msra.mxu0 %v449
        %493 = vmatprep.subr.bf16.mxu0 0
        %494 = vmatpush1.bf16.msra.mxu0 %v450
        %495 = vmatprep.subr.bf16.mxu0 0
        %496 = vmatpush1.bf16.msra.mxu0 %v451
        %497 = vmatprep.subr.bf16.mxu0 0
        %498 = vmatpush1.bf16.msra.mxu0 %v452
        %499 = vmatprep.subr.bf16.mxu0 0
        %500 = vmatpush1.bf16.msra.mxu0 %v453
        %501 = vmatprep.subr.bf16.mxu0 0
        %502 = vmatpush1.bf16.msra.mxu0 %v454
        %503 = vmatprep.mubr.bf16.mxu0 %v360
        %504 = vmatmul.mubr.bf16.gmra.mrb[0].mxu0 %v359
        %v505 = vpop.f32.mrb[0].mxu0
        %v506 = vadd.f32 0.0, %v505
        %v507 = vpop.f32.mrb[0].mxu0
        %v508 = vpop.f32.mrb[0].mxu0
        %v509 = vadd.f32 0.0, %v508
        %v510 = vpop.f32.mrb[0].mxu0
        %511 = vmatprep.mubr.bf16.mxu0 %v362
        %512 = vmatmul.mubr.bf16.gmra.mrb[0].mxu0 %v361
        %v513 = vpop.f32.mrb[0].mxu0
        %v514 = vadd.f32 0.0, %v513
        %v515 = vpop.f32.mrb[0].mxu0
        %v516 = vpop.f32.mrb[0].mxu0
        %v517 = vadd.f32 0.0, %v516
        %v518 = vpop.f32.mrb[0].mxu0
        %519 = vmatprep.mubr.bf16.mxu0 %v364
        %520 = vmatmul.mubr.bf16.gmra.mrb[0].mxu0 %v363
        %v521 = vpop.f32.mrb[0].mxu0
        %v522 = vadd.f32 0.0, %v521
        %v523 = vpop.f32.mrb[0].mxu0
        %v524 = vpop.f32.mrb[0].mxu0
        %v525 = vadd.f32 0.0, %v524
        %v526 = vpop.f32.mrb[0].mxu0
        %527 = vmatprep.mubr.bf16.mxu0 %v366
        %528 = vmatmul.mubr.bf16.gmra.mrb[0].mxu0 %v365
        %v529 = vpop.f32.mrb[0].mxu0
        %v530 = vadd.f32 0.0, %v529
        %v531 = vpop.f32.mrb[0].mxu0
        %v532 = vpop.f32.mrb[0].mxu0
        %v533 = vadd.f32 0.0, %v532
        %v534 = vpop.f32.mrb[0].mxu0
        %535 = vdwg.mxu0
        %v544 = vunpack.c.l.b16 %v253
        %v545 = vunpack.c.h.b16 %v253
        %v546 = vunpack.c.l.b16 %v254
        %v547 = vunpack.c.h.b16 %v254
        %v548 = vunpack.c.l.b16 %v255
        %v549 = vunpack.c.h.b16 %v255
        %v550 = vunpack.c.l.b16 %v256
        %v551 = vunpack.c.h.b16 %v256
        %v552 = vunpack.c.l.b16 %v257
        %v553 = vunpack.c.h.b16 %v257
        %v554 = vunpack.c.l.b16 %v258
        %v555 = vunpack.c.h.b16 %v258
        %v556 = vunpack.c.l.b16 %v259
        %v557 = vunpack.c.h.b16 %v259
        %v558 = vunpack.c.l.b16 %v260
        %v559 = vunpack.c.h.b16 %v260
        %v560 = vpack.c.b16 %v546, %v544
        %v561 = vpack.c.b16 %v547, %v545
        %v562 = vpack.c.b16 %v550, %v548
        %v563 = vpack.c.b16 %v551, %v549
        %v564 = vpack.c.b16 %v554, %v552
        %v565 = vpack.c.b16 %v555, %v553
        %v566 = vpack.c.b16 %v558, %v556
        %v567 = vpack.c.b16 %v559, %v557
        %v608 = vunpack.c.l.b16 %v261
        %v609 = vunpack.c.l.b16 %v262
        %v610 = vunpack.c.l.b16 %v263
        %v611 = vunpack.c.l.b16 %v264
        %v612 = vunpack.c.l.b16 %v265
        %v613 = vunpack.c.l.b16 %v266
        %v614 = vunpack.c.l.b16 %v267
        %v615 = vunpack.c.l.b16 %v268
        %v616 = vunpack.c.l.b16 %v269
        %v617 = vunpack.c.l.b16 %v270
        %v618 = vunpack.c.l.b16 %v271
        %v619 = vunpack.c.l.b16 %v272
        %v620 = vunpack.c.l.b16 %v273
        %v621 = vunpack.c.l.b16 %v274
        %v622 = vunpack.c.l.b16 %v275
        %v623 = vunpack.c.l.b16 %v276
        %v624 = vunpack.c.l.b16 %v277
        %v625 = vunpack.c.l.b16 %v278
        %v626 = vunpack.c.l.b16 %v279
        %v627 = vunpack.c.l.b16 %v280
        %v628 = vunpack.c.l.b16 %v281
        %v629 = vunpack.c.l.b16 %v282
        %v630 = vunpack.c.l.b16 %v283
        %v631 = vunpack.c.l.b16 %v284
        %v632 = vunpack.c.l.b16 %v285
        %v633 = vunpack.c.l.b16 %v286
        %v634 = vunpack.c.l.b16 %v287
        %v635 = vunpack.c.l.b16 %v288
        %v636 = vunpack.c.l.b16 %v289
        %v637 = vunpack.c.l.b16 %v290
        %v638 = vunpack.c.l.b16 %v291
        %v639 = vunpack.c.l.b16 %v292
        %v640 = vpack.c.b16 %v609, %v608
        %v641 = vpack.c.b16 %v611, %v610
        %v642 = vpack.c.b16 %v613, %v612
        %v643 = vpack.c.b16 %v615, %v614
        %v644 = vpack.c.b16 %v617, %v616
        %v645 = vpack.c.b16 %v619, %v618
        %v646 = vpack.c.b16 %v621, %v620
        %v647 = vpack.c.b16 %v623, %v622
        %v648 = vpack.c.b16 %v625, %v624
        %v649 = vpack.c.b16 %v627, %v626
        %v650 = vpack.c.b16 %v629, %v628
        %v651 = vpack.c.b16 %v631, %v630
        %v652 = vpack.c.b16 %v633, %v632
        %v653 = vpack.c.b16 %v635, %v634
        %v654 = vpack.c.b16 %v637, %v636
        %v655 = vpack.c.b16 %v639, %v638
        %672 = vmatprep.subr.bf16.mxu0 0
        %673 = vmatpush1.bf16.msra.mxu0 %v640
        %674 = vmatprep.subr.bf16.mxu0 0
        %675 = vmatpush1.bf16.msra.mxu0 %v641
        %676 = vmatprep.subr.bf16.mxu0 0
        %677 = vmatpush1.bf16.msra.mxu0 %v642
        %678 = vmatprep.subr.bf16.mxu0 0
        %679 = vmatpush1.bf16.msra.mxu0 %v643
        %680 = vmatprep.subr.bf16.mxu0 0
        %681 = vmatpush1.bf16.msra.mxu0 %v644
        %682 = vmatprep.subr.bf16.mxu0 0
        %683 = vmatpush1.bf16.msra.mxu0 %v645
        %684 = vmatprep.subr.bf16.mxu0 0
        %685 = vmatpush1.bf16.msra.mxu0 %v646
        %686 = vmatprep.subr.bf16.mxu0 0
        %687 = vmatpush1.bf16.msra.mxu0 %v647
        %688 = vmatprep.subr.bf16.mxu0 0
        %689 = vmatpush1.bf16.msra.mxu0 %v648
        %690 = vmatprep.subr.bf16.mxu0 0
        %691 = vmatpush1.bf16.msra.mxu0 %v649
        %692 = vmatprep.subr.bf16.mxu0 0
        %693 = vmatpush1.bf16.msra.mxu0 %v650
        %694 = vmatprep.subr.bf16.mxu0 0
        %695 = vmatpush1.bf16.msra.mxu0 %v651
        %696 = vmatprep.subr.bf16.mxu0 0
        %697 = vmatpush1.bf16.msra.mxu0 %v652
        %698 = vmatprep.subr.bf16.mxu0 0
        %699 = vmatpush1.bf16.msra.mxu0 %v653
        %700 = vmatprep.subr.bf16.mxu0 0
        %701 = vmatpush1.bf16.msra.mxu0 %v654
        %702 = vmatprep.subr.bf16.mxu0 0
        %703 = vmatpush1.bf16.msra.mxu0 %v655
        %704 = vmatprep.mubr.bf16.mxu0 %v561
        %705 = vmatmul.mubr.bf16.gmra.mrb[0].mxu0 %v560
        %v706 = vpop.f32.mrb[0].mxu0
        %v707 = vadd.f32 %v506, %v706
        %v708 = vpop.f32.mrb[0].mxu0
        %v709 = vpop.f32.mrb[0].mxu0
        %v710 = vadd.f32 %v509, %v709
        %v711 = vpop.f32.mrb[0].mxu0
        %712 = vmatprep.mubr.bf16.mxu0 %v563
        %713 = vmatmul.mubr.bf16.gmra.mrb[0].mxu0 %v562
        %v714 = vpop.f32.mrb[0].mxu0
        %v715 = vadd.f32 %v514, %v714
        %v716 = vpop.f32.mrb[0].mxu0
        %v717 = vpop.f32.mrb[0].mxu0
        %v718 = vadd.f32 %v517, %v717
        %v719 = vpop.f32.mrb[0].mxu0
        %720 = vmatprep.mubr.bf16.mxu0 %v565
        %721 = vmatmul.mubr.bf16.gmra.mrb[0].mxu0 %v564
        %v722 = vpop.f32.mrb[0].mxu0
        %v723 = vadd.f32 %v522, %v722
        %v724 = vpop.f32.mrb[0].mxu0
        %v725 = vpop.f32.mrb[0].mxu0
        %v726 = vadd.f32 %v525, %v725
        %v727 = vpop.f32.mrb[0].mxu0
        %728 = vmatprep.mubr.bf16.mxu0 %v567
        %729 = vmatmul.mubr.bf16.gmra.mrb[0].mxu0 %v566
        %v730 = vpop.f32.mrb[0].mxu0
        %v731 = vadd.f32 %v530, %v730
        %v732 = vpop.f32.mrb[0].mxu0
        %v733 = vpop.f32.mrb[0].mxu0
        %v734 = vadd.f32 %v533, %v733
        %v735 = vpop.f32.mrb[0].mxu0
        %736 = vdwg.mxu0
        %v737 = vld [vmem:[%s2] sm:$0x1]
        %v739 = vlaneseq
        %v740 = vshrl.u32 %v739, 7
        %v741 = vsub.s32 0, %v740
        %v742 = vrot.slane %v737, %v741
        %v744 = vadd.f32 %v707, %v742
        %v745 = vadd.f32 %v710, %v742
        %v746 = vadd.f32 %v715, %v742
        %v747 = vadd.f32 %v718, %v742
        %v748 = vadd.f32 %v723, %v742
        %v749 = vadd.f32 %v726, %v742
        %v750 = vadd.f32 %v731, %v742
        %v751 = vadd.f32 %v734, %v742
        %v752 = vmax.f32 %v744, 0.0
        %v753 = vmax.f32 %v745, 0.0
        %v754 = vmax.f32 %v746, 0.0
        %v755 = vmax.f32 %v747, 0.0
        %v756 = vmax.f32 %v748, 0.0
        %v757 = vmax.f32 %v749, 0.0
        %v758 = vmax.f32 %v750, 0.0
        %v759 = vmax.f32 %v751, 0.0
        %v760 = vpack.c.bf16 %v752, %v752
        %v761 = vpack.c.bf16 %v753, %v753
        %v762 = vpack.c.bf16 %v754, %v754
        %v763 = vpack.c.bf16 %v755, %v755
        %v764 = vpack.c.bf16 %v756, %v756
        %v765 = vpack.c.bf16 %v757, %v757
        %v766 = vpack.c.bf16 %v758, %v758
        %v767 = vpack.c.bf16 %v759, %v759
        %768 = vst [vmem:[%s249] sm:$0xf] %v760
        %769 = vst [vmem:[%s249 + $0x4] sm:$0xf] %v761
        %770 = vst [vmem:[%s249 + $0x8] sm:$0xf] %v762
        %771 = vst [vmem:[%s249 + $0xc] sm:$0xf] %v763
        %772 = vst [vmem:[%s249 + $0x10] sm:$0xf] %v764
        %773 = vst [vmem:[%s249 + $0x14] sm:$0xf] %v765
        %774 = vst [vmem:[%s249 + $0x18] sm:$0xf] %v766
        %775 = vst [vmem:[%s249 + $0x1c] sm:$0xf] %v767
        %776 = vst [vmem:[%s230] sm:$0xff] %v752
        %777 = vst [vmem:[%s230 + $0x8] sm:$0xff] %v753
        %778 = vst [vmem:[%s230 + $0x10] sm:$0xff] %v754
        %779 = vst [vmem:[%s230 + $0x18] sm:$0xff] %v755
        %780 = vst [vmem:[%s230 + $0x20] sm:$0xff] %v756
        %781 = vst [vmem:[%s230 + $0x28] sm:$0xff] %v757
        %782 = vst [vmem:[%s230 + $0x30] sm:$0xff] %v758
        %783 = vst [vmem:[%s230 + $0x38] sm:$0xff] %v759
        %s784 = smul.u32 8, %s23
        %p785 = scmp.lt.s32.totalorder %s784, 15
        %s786 = scalar_select %p785, %s784, 15
        %p787 = scmp.lt.s32.totalorder %s24, 0
        %s788 = scalar_select %p787, %s24, 0
        %s789 = sadd.s32 %s788, %s786
        %s790 = smul.addr %s789, 4
        %s791 = scalar_lea.vmem %s3, %s790
        %s792 = sand.u32 %s139, 1
        %s793 = scalar_lea.sflag [#allocation3], %s792
        %s794 = sand.u32 %s139, 1
        %s795 = smul.addr %s794, 64
        %s796 = scalar_lea.vmem [#allocation2], %s795
        // Predicated region
        $region33: #{_forward.5} parent=31 // pred_check
          %p797 = pneg %p121
        $region34: #{_forward.5} parent=31 // pred_check_branch
          %799 = sbr.rel (%p797) target = $region36
        $region35: #{_forward.5} parent=31 // pred_region
          %s800 = smul.u32 8, %s23
        $region36: #{_forward.5} parent=31 // pred_fallthru
          _
        // Predicated region
        $region37: #{_forward.5} parent=31 // pred_check
          %p801 = pneg %p149
        $region38: #{_forward.5} parent=31 // pred_check_branch
          %803 = sbr.rel (%p801) target = $region40
        $region39: #{_forward.5} parent=31 // pred_region
          %s804 = smul.u32 8, %s23
          %s806 = ssub.s32 1024, 1024
          %807 = vsyncadd %s793, %s806
          %s808 = sadd.s32 %s24, %s804
          %s809 = smul.addr %s808, 128
          %s810 = scalar_lea.hbm %s4, %s809
          %s811 = sshll.u32 %s796, 4
          %s812 = int_to_ptr.vmem [resolvable:$true] %s811
          %817 = dma.vmem_to_hbm [thread:$0]  %s812, 1024, %s810, %s793, 128, 128, 8
        $region40: #{_forward.5} parent=31 // pred_fallthru
          _
      $region32: #{_forward.5} parent=5 // pred_fallthru
        _
      %p818 = scmp.le.s32.totalorder 2, %s14
      // Predicated region
      $region41: #{_forward.5} parent=5 // pred_check
        %p819 = pneg %p818
      $region42: #{_forward.5} parent=5 // pred_check_branch
        %821 = sbr.rel (%p819) target = $region44
      $region43: #{_forward.5} parent=5 // pred_region
        %s822 = ssub.s32 %s14, 2
        // Predicated region
        $region45: #{_forward.5} parent=43 // pred_check
          %p823 = pneg %p127
        $region46: #{_forward.5} parent=43 // pred_check_branch
          %825 = sbr.rel (%p823) target = $region48
        $region47: #{_forward.5} parent=43 // pred_region
          %s826 = smul.u32 8, %s25
          %p827 = scmp.lt.s32.totalorder %s826, 15
          %s828 = scalar_select %p827, %s826, 15
          %p829 = scmp.lt.s32.totalorder %s26, 0
          %s830 = scalar_select %p829, %s26, 0
          %s831 = sadd.s32 %s830, %s828
          %s832 = smul.addr %s831, 4
          %s833 = scalar_lea.vmem %s3, %s832
        $region48: #{_forward.5} parent=43 // pred_fallthru
          _
        // Predicated region
        $region49: #{_forward.5} parent=43 // pred_check
          %p834 = pneg %p155
        $region50: #{_forward.5} parent=43 // pred_check_branch
          %836 = sbr.rel (%p834) target = $region52
        $region51: #{_forward.5} parent=43 // pred_region
          %s837 = sand.u32 %s140, 1
          %s838 = scalar_lea.sflag [#allocation3], %s837
          %s839 = sand.u32 %s140, 1
          %s840 = smul.addr %s839, 64
          %s841 = scalar_lea.vmem [#allocation2], %s840
          %842 = dma.done %s838, 1024
        $region52: #{_forward.5} parent=43 // pred_fallthru
          _
      $region44: #{_forward.5} parent=5 // pred_fallthru
        _
    $region6: #{_forward.5} parent=1 // loop_footer
      %s18 = sadd.s32 1, %s14
    $region7: #{_forward.5} parent=1 // loop_footer_branch
      %13 = sbr.rel target = $region3
    $region8: #{_forward.5} parent=1 // loop_exit
      _
    %843 = vsyncpa [#allocation3], 1
    %s844 = scalar_lea.sflag [#allocation3], 1
    %845 = vsyncpa %s844, 1

// kernel: _forward.4
$region0: #{_forward.4}
  #allocation0 [shape = 'u32[]', space=smem, size = 0x4, offset = 0x4, fixed_abs, tag = 'smem constant byte address 0x4 - core index']
  #allocation1 [shape = 'u32[144,128]{1,0:T(1,128)}', space=vmem, size = 0x12000, scoped, tag = 'internal scratch']
  %s0 = inlined_call_operand.vmem [shape: bf16[32,4,16,12], index: 0, kind: input, shape index: {}]
  %s1 = inlined_call_operand.vmem [shape: bf16[4,12,128], index: 1, kind: input, shape index: {}]
  %s2 = inlined_call_operand.vmem [shape: f32[1,128], index: 2, kind: input, shape index: {}]
  %s3 = inlined_call_operand.vmem [shape: bf16[32,16,128], index: 3, kind: output, shape index: {}]
  %s4 = sld [smem:[#allocation0]]
  $region45: #{_forward.4} parent=0
    _
  %s6 = ssub.s32 1, %s4
  %s7 = scalar_select 0, %s6, %s4
  loop: start=0, step=1, limit=4
  $region2: #{_forward.4} parent=0 // loop_pre_header
    _
  $region3: #{_forward.4} parent=0 // loop_header
    %s9 = sphi 0, %s13
    %p10 = scmp.ge.s32.totalorder %s9, 4
    %s16 = sphi 0, %s28
    %s17 = sphi 0, %s24
    %s18 = sphi 0, %s16
    %s19 = sphi 0, %s17
    %s20 = sphi 0, %s18
    %s21 = sphi 0, %s19
    %s33 = sphi 0, %s35
    %s36 = sphi 0, %s33
    %s37 = sphi 0, %s36
    %s53 = sphi 0, %s37
    %s57 = sphi 0, %s57
    %s59 = sphi 0, %s57
    %s60 = sphi 0, %s59
    %s74 = sphi 0, %s60
    %s78 = sphi 0, %s78
    %s80 = sphi 0, %s78
    %s81 = sphi 0, %s80
    %s95 = sphi 0, %s81
    %s103 = sphi 0, %s105
    %s106 = sphi 0, %s103
    %s107 = sphi 0, %s106
    %s123 = sphi 0, %s107
  $region4: #{_forward.4} parent=0 // loop_header_branch
    %12 = sbr.rel (%p10) target = $region8
  $region5: #{_forward.4} parent=0 // loop_body
    %s14 = ssub.s32 %s9, 1
    %s15 = ssub.s32 %s9, 2
    %s22 = sadd.s32 1, %s17
    %p23 = scmp.ge.s32.totalorder %s22, 1
    %s24 = scalar_select %p23, 0, %s22
    %s25 = sadd.s32 1, %s16
    %s26 = scalar_select %p23, %s25, %s16
    %p27 = scmp.ge.s32.totalorder %s26, 2
    %s28 = scalar_select %p27, 0, %s26
    %s29 = ssub.s32 %s16, %s28
    %s30 = ssub.s32 %s17, %s24
    %s31 = sor.u32 %s29, %s30
    %p32 = scmp.eq.s32.totalorder %s31, 0
    %s34 = sadd.s32 %s33, 1
    %s35 = scalar_select %p32, %s33, %s34
    %p38 = pneg %p32
    %p39 = scmp.eq.s32.totalorder %s9, 1
    %p40 = por %p38, %p39
    %p41 = scmp.ne.s32.totalorder %s33, %s36
    %p42 = scmp.eq.s32.totalorder %s9, 0
    %p43 = por %p41, %p42
    %p44 = scmp.ne.s32.totalorder %s33, %s36
    %p45 = scmp.eq.s32.totalorder %s14, 1
    %p46 = por %p44, %p45
    %p47 = scmp.ne.s32.totalorder %s36, %s37
    %p48 = scmp.eq.s32.totalorder %s14, 0
    %p49 = por %p47, %p48
    %p50 = scmp.ne.s32.totalorder %s36, %s37
    %p51 = scmp.eq.s32.totalorder %s15, 1
    %p52 = por %p50, %p51
    %p54 = scmp.ne.s32.totalorder %s37, %s53
    %p55 = scmp.eq.s32.totalorder %s15, 0
    %p56 = por %p54, %p55
    %s58 = sadd.s32 %s57, 1
    %p61 = scmp.eq.s32.totalorder %s9, 1
    %p62 = scmp.ne.s32.totalorder %s57, %s59
    %p63 = scmp.eq.s32.totalorder %s9, 0
    %p64 = por %p62, %p63
    %p65 = scmp.ne.s32.totalorder %s57, %s59
    %p66 = scmp.eq.s32.totalorder %s14, 1
    %p67 = por %p65, %p66
    %p68 = scmp.ne.s32.totalorder %s59, %s60
    %p69 = scmp.eq.s32.totalorder %s14, 0
    %p70 = por %p68, %p69
    %p71 = scmp.ne.s32.totalorder %s59, %s60
    %p72 = scmp.eq.s32.totalorder %s15, 1
    %p73 = por %p71, %p72
    %p75 = scmp.ne.s32.totalorder %s60, %s74
    %p76 = scmp.eq.s32.totalorder %s15, 0
    %p77 = por %p75, %p76
    %s79 = sadd.s32 %s78, 1
    %p82 = scmp.eq.s32.totalorder %s9, 1
    %p83 = scmp.ne.s32.totalorder %s78, %s80
    %p84 = scmp.eq.s32.totalorder %s9, 0
    %p85 = por %p83, %p84
    %p86 = scmp.ne.s32.totalorder %s78, %s80
    %p87 = scmp.eq.s32.totalorder %s14, 1
    %p88 = por %p86, %p87
    %p89 = scmp.ne.s32.totalorder %s80, %s81
    %p90 = scmp.eq.s32.totalorder %s14, 0
    %p91 = por %p89, %p90
    %p92 = scmp.ne.s32.totalorder %s80, %s81
    %p93 = scmp.eq.s32.totalorder %s15, 1
    %p94 = por %p92, %p93
    %p96 = scmp.ne.s32.totalorder %s81, %s95
    %p97 = scmp.eq.s32.totalorder %s15, 0
    %p98 = por %p96, %p97
    %s99 = ssub.s32 %s16, %s28
    %s100 = ssub.s32 %s17, %s24
    %s101 = sor.u32 %s99, %s100
    %p102 = scmp.eq.s32.totalorder %s101, 0
    %s104 = sadd.s32 %s103, 1
    %s105 = scalar_select %p102, %s103, %s104
    %p108 = pneg %p102
    %p109 = scmp.eq.s32.totalorder %s9, 1
    %p110 = por %p108, %p109
    %p111 = scmp.ne.s32.totalorder %s103, %s106
    %p112 = scmp.eq.s32.totalorder %s9, 0
    %p113 = por %p111, %p112
    %p114 = scmp.ne.s32.totalorder %s103, %s106
    %p115 = scmp.eq.s32.totalorder %s14, 1
    %p116 = por %p114, %p115
    %p117 = scmp.ne.s32.totalorder %s106, %s107
    %p118 = scmp.eq.s32.totalorder %s14, 0
    %p119 = por %p117, %p118
    %p120 = scmp.ne.s32.totalorder %s106, %s107
    %p121 = scmp.eq.s32.totalorder %s15, 1
    %p122 = por %p120, %p121
    %p124 = scmp.ne.s32.totalorder %s107, %s123
    %p125 = scmp.eq.s32.totalorder %s15, 0
    %p126 = por %p124, %p125
    %p127 = scmp.le.s32.totalorder 1, %s9
    %p128 = scmp.lt.s32.totalorder %s9, 3
    %p129 = pnand %p127, %p128
    %p130 = pneg %p129
    // Predicated region
    $region9: #{_forward.4} parent=5 // pred_check
      _
    $region10: #{_forward.4} parent=5 // pred_check_branch
      %132 = sbr.rel (%p129) target = $region12
    $region11: #{_forward.4} parent=5 // pred_region
      %s133 = ssub.s32 %s9, 1
      // Predicated region
      $region13: #{_forward.4} parent=11 // pred_check
        %p134 = pneg %p70
      $region14: #{_forward.4} parent=11 // pred_check_branch
        %136 = sbr.rel (%p134) target = $region16
      $region15: #{_forward.4} parent=11 // pred_region
        _
      $region16: #{_forward.4} parent=11 // pred_fallthru
        _
      // Predicated region
      $region17: #{_forward.4} parent=11 // pred_check
        %p137 = pneg %p91
      $region18: #{_forward.4} parent=11 // pred_check_branch
        %139 = sbr.rel (%p137) target = $region20
      $region19: #{_forward.4} parent=11 // pred_region
        _
      $region20: #{_forward.4} parent=11 // pred_fallthru
        _
    $region12: #{_forward.4} parent=5 // pred_fallthru
      _
    %p140 = scmp.lt.s32.totalorder %s9, 2
    // Predicated region
    $region21: #{_forward.4} parent=5 // pred_check
      %p141 = pneg %p140
    $region22: #{_forward.4} parent=5 // pred_check_branch
      %143 = sbr.rel (%p141) target = $region24
    $region23: #{_forward.4} parent=5 // pred_region
      // Predicated region
      $region25: #{_forward.4} parent=23 // pred_check
        %p144 = pneg %p43
      $region26: #{_forward.4} parent=23 // pred_check_branch
        %146 = sbr.rel (%p144) target = $region28
      $region27: #{_forward.4} parent=23 // pred_region
        %s147 = smul.u32 16, %s16
        %s148 = smul.u32 2, %s17
        %p149 = scmp.lt.s32.totalorder %s147, 31
        %s150 = scalar_select %p149, %s147, 31
        %p151 = scmp.lt.s32.totalorder %s148, 1
        %s152 = scalar_select %p151, %s148, 1
        %s153 = smul.addr %s150, 8
        %s154 = sadd.s32 %s152, %s153
        %s155 = smul.addr %s154, 4
        %s156 = scalar_lea.vmem %s0, %s155
        %s157 = smul.u32 16, %s16
        %s158 = smul.u32 2, %s17
      $region28: #{_forward.4} parent=23 // pred_fallthru
        _
    $region24: #{_forward.4} parent=5 // pred_fallthru
      _
    %p159 = scmp.le.s32.totalorder 1, %s9
    %p160 = scmp.lt.s32.totalorder %s9, 3
    %p161 = pnand %p159, %p160
    %p162 = pneg %p161
    // Predicated region
    $region29: #{_forward.4} parent=5 // pred_check
      _
    $region30: #{_forward.4} parent=5 // pred_check_branch
      %164 = sbr.rel (%p161) target = $region32
    $region31: #{_forward.4} parent=5 // pred_region
      %s165 = ssub.s32 %s9, 1
      %s166 = smul.u32 16, %s18
      %s167 = smul.u32 2, %s19
      %p168 = scmp.lt.s32.totalorder %s166, 31
      %s169 = scalar_select %p168, %s166, 31
      %p170 = scmp.lt.s32.totalorder %s167, 1
      %s171 = scalar_select %p170, %s167, 1
      %s172 = smul.addr %s169, 8
      %s173 = sadd.s32 %s171, %s172
      %s174 = smul.addr %s173, 4
      %s175 = scalar_lea.vmem %s0, %s174
      %p176 = pneg %p49
      %p177 = pneg %p46
      %p178 = pneg %p70
      %p179 = pneg %p67
      %p180 = pneg %p91
      %p181 = pneg %p88
      %p182 = pneg %p119
      %p183 = pneg %p116
      %s184 = smul.u32 16, %s18
      %s185 = smul.u32 2, %s19
      %p186 = scmp.lt.s32.totalorder %s184, 31
      %s187 = scalar_select %p186, %s184, 31
      %p188 = scmp.lt.s32.totalorder %s185, 1
      %s189 = scalar_select %p188, %s185, 1
      %s190 = smul.addr %s187, 2
      %s191 = sadd.s32 %s189, %s190
      %s192 = smul.addr %s191, 4
      %s193 = scalar_lea.vmem %s3, %s192
      %s194 = smul.u32 16, %s18
      %s195 = smul.u32 2, %s19
      %p196 = scmp.lt.s32.totalorder %s194, 31
      %s197 = scalar_select %p196, %s194, 31
      %p198 = scmp.lt.s32.totalorder %s195, 1
      %s199 = scalar_select %p198, %s195, 1
      %s200 = smul.addr %s197, 8
      %s201 = sadd.s32 %s199, %s200
      %s202 = smul.addr %s201, 4
      %s203 = scalar_lea.vmem %s0, %s202
      %s204 = smul.u32 16, %s18
      %s205 = smul.u32 2, %s19
      %s206 = smul.u32 16, %s18
      %s207 = smul.u32 2, %s19
      %p208 = scmp.lt.s32.totalorder %s206, 31
      %s209 = scalar_select %p208, %s206, 31
      %p210 = scmp.lt.s32.totalorder %s207, 1
      %s211 = scalar_select %p210, %s207, 1
      %s212 = smul.addr %s209, 2
      %s213 = sadd.s32 %s211, %s212
      %s214 = smul.addr %s213, 4
      %s215 = scalar_lea.vmem %s3, %s214
      %s216 = smul.u32 16, %s18
      %s217 = smul.u32 2, %s19
      %v219 = vld [vmem:[%s203] sm:$0xf]
      %v220 = vld [vmem:[%s203 + $0x4] sm:$0xf]
      %v221 = vld [vmem:[%s203 + $0x20] sm:$0xf]
      %v222 = vld [vmem:[%s203 + $0x24] sm:$0xf]
      %v223 = vld [vmem:[%s203 + $0x40] sm:$0xf]
      %v224 = vld [vmem:[%s203 + $0x44] sm:$0xf]
      %v225 = vld [vmem:[%s203 + $0x60] sm:$0xf]
      %v226 = vld [vmem:[%s203 + $0x64] sm:$0xf]
      %v227 = vld [vmem:[%s203 + $0x80] sm:$0xf]
      %v228 = vld [vmem:[%s203 + $0x84] sm:$0xf]
      %v229 = vld [vmem:[%s203 + $0xa0] sm:$0xf]
      %v230 = vld [vmem:[%s203 + $0xa4] sm:$0xf]
      %v231 = vld [vmem:[%s203 + $0xc0] sm:$0xf]
      %v232 = vld [vmem:[%s203 + $0xc4] sm:$0xf]
      %v233 = vld [vmem:[%s203 + $0xe0] sm:$0xf]
      %v234 = vld [vmem:[%s203 + $0xe4] sm:$0xf]
      %v235 = vld [vmem:[%s203 + $0x100] sm:$0xf]
      %v236 = vld [vmem:[%s203 + $0x104] sm:$0xf]
      %v237 = vld [vmem:[%s203 + $0x120] sm:$0xf]
      %v238 = vld [vmem:[%s203 + $0x124] sm:$0xf]
      %v239 = vld [vmem:[%s203 + $0x140] sm:$0xf]
      %v240 = vld [vmem:[%s203 + $0x144] sm:$0xf]
      %v241 = vld [vmem:[%s203 + $0x160] sm:$0xf]
      %v242 = vld [vmem:[%s203 + $0x164] sm:$0xf]
      %v243 = vld [vmem:[%s203 + $0x180] sm:$0xf]
      %v244 = vld [vmem:[%s203 + $0x184] sm:$0xf]
      %v245 = vld [vmem:[%s203 + $0x1a0] sm:$0xf]
      %v246 = vld [vmem:[%s203 + $0x1a4] sm:$0xf]
      %v247 = vld [vmem:[%s203 + $0x1c0] sm:$0xf]
      %v248 = vld [vmem:[%s203 + $0x1c4] sm:$0xf]
      %v249 = vld [vmem:[%s203 + $0x1e0] sm:$0xf]
      %v250 = vld [vmem:[%s203 + $0x1e4] sm:$0xf]
      %v251 = vld [vmem:[%s1] sm:$0xf]
      %v252 = vld [vmem:[%s1 + $0x4] sm:$0x3]
      %s253 = scalar_lea.vmem %s203, 8
      %v254 = vld [vmem:[%s253] sm:$0xf]
      %v255 = vld [vmem:[%s253 + $0x4] sm:$0xf]
      %v256 = vld [vmem:[%s253 + $0x20] sm:$0xf]
      %v257 = vld [vmem:[%s253 + $0x24] sm:$0xf]
      %v258 = vld [vmem:[%s253 + $0x40] sm:$0xf]
      %v259 = vld [vmem:[%s253 + $0x44] sm:$0xf]
      %v260 = vld [vmem:[%s253 + $0x60] sm:$0xf]
      %v261 = vld [vmem:[%s253 + $0x64] sm:$0xf]
      %v262 = vld [vmem:[%s253 + $0x80] sm:$0xf]
      %v263 = vld [vmem:[%s253 + $0x84] sm:$0xf]
      %v264 = vld [vmem:[%s253 + $0xa0] sm:$0xf]
      %v265 = vld [vmem:[%s253 + $0xa4] sm:$0xf]
      %v266 = vld [vmem:[%s253 + $0xc0] sm:$0xf]
      %v267 = vld [vmem:[%s253 + $0xc4] sm:$0xf]
      %v268 = vld [vmem:[%s253 + $0xe0] sm:$0xf]
      %v269 = vld [vmem:[%s253 + $0xe4] sm:$0xf]
      %v270 = vld [vmem:[%s253 + $0x100] sm:$0xf]
      %v271 = vld [vmem:[%s253 + $0x104] sm:$0xf]
      %v272 = vld [vmem:[%s253 + $0x120] sm:$0xf]
      %v273 = vld [vmem:[%s253 + $0x124] sm:$0xf]
      %v274 = vld [vmem:[%s253 + $0x140] sm:$0xf]
      %v275 = vld [vmem:[%s253 + $0x144] sm:$0xf]
      %v276 = vld [vmem:[%s253 + $0x160] sm:$0xf]
      %v277 = vld [vmem:[%s253 + $0x164] sm:$0xf]
      %v278 = vld [vmem:[%s253 + $0x180] sm:$0xf]
      %v279 = vld [vmem:[%s253 + $0x184] sm:$0xf]
      %v280 = vld [vmem:[%s253 + $0x1a0] sm:$0xf]
      %v281 = vld [vmem:[%s253 + $0x1a4] sm:$0xf]
      %v282 = vld [vmem:[%s253 + $0x1c0] sm:$0xf]
      %v283 = vld [vmem:[%s253 + $0x1c4] sm:$0xf]
      %v284 = vld [vmem:[%s253 + $0x1e0] sm:$0xf]
      %v285 = vld [vmem:[%s253 + $0x1e4] sm:$0xf]
      %s286 = scalar_lea.vmem %s1, 8
      %v287 = vld [vmem:[%s286] sm:$0xf]
      %v288 = vld [vmem:[%s286 + $0x4] sm:$0x3]
      %v321 = vunpack.c.l.b16 %v254
      %v322 = vunpack.c.l.b16 %v255
      %v323 = vunpack.c.l.b16 %v256
      %v324 = vunpack.c.l.b16 %v257
      %v325 = vunpack.c.l.b16 %v258
      %v326 = vunpack.c.l.b16 %v259
      %v327 = vunpack.c.l.b16 %v260
      %v328 = vunpack.c.l.b16 %v261
      %v329 = vunpack.c.l.b16 %v262
      %v330 = vunpack.c.l.b16 %v263
      %v331 = vunpack.c.l.b16 %v264
      %v332 = vunpack.c.l.b16 %v265
      %v333 = vunpack.c.l.b16 %v266
      %v334 = vunpack.c.l.b16 %v267
      %v335 = vunpack.c.l.b16 %v268
      %v336 = vunpack.c.l.b16 %v269
      %v337 = vunpack.c.l.b16 %v270
      %v338 = vunpack.c.l.b16 %v271
      %v339 = vunpack.c.l.b16 %v272
      %v340 = vunpack.c.l.b16 %v273
      %v341 = vunpack.c.l.b16 %v274
      %v342 = vunpack.c.l.b16 %v275
      %v343 = vunpack.c.l.b16 %v276
      %v344 = vunpack.c.l.b16 %v277
      %v345 = vunpack.c.l.b16 %v278
      %v346 = vunpack.c.l.b16 %v279
      %v347 = vunpack.c.l.b16 %v280
      %v348 = vunpack.c.l.b16 %v281
      %v349 = vunpack.c.l.b16 %v282
      %v350 = vunpack.c.l.b16 %v283
      %v351 = vunpack.c.l.b16 %v284
      %v352 = vunpack.c.l.b16 %v285
      %v353 = vpack.c.b16 %v322, %v321
      %v354 = vpack.c.b16 %v324, %v323
      %v355 = vpack.c.b16 %v326, %v325
      %v356 = vpack.c.b16 %v328, %v327
      %v357 = vpack.c.b16 %v330, %v329
      %v358 = vpack.c.b16 %v332, %v331
      %v359 = vpack.c.b16 %v334, %v333
      %v360 = vpack.c.b16 %v336, %v335
      %v361 = vpack.c.b16 %v338, %v337
      %v362 = vpack.c.b16 %v340, %v339
      %v363 = vpack.c.b16 %v342, %v341
      %v364 = vpack.c.b16 %v344, %v343
      %v365 = vpack.c.b16 %v346, %v345
      %v366 = vpack.c.b16 %v348, %v347
      %v367 = vpack.c.b16 %v350, %v349
      %v368 = vpack.c.b16 %v352, %v351
      %v371 = vunpack.c.l.b16 %v287
      %v372 = vunpack.c.l.b16 %v288
      %v373 = vpack.c.b16 %v372, %v371
      %vm374 = vcmask 97280
      %v376 = vsel %vm374, %v353, 0
      %v379 = vsel %vm374, %v354, 0
      %v382 = vsel %vm374, %v355, 0
      %v385 = vsel %vm374, %v356, 0
      %v388 = vsel %vm374, %v357, 0
      %v391 = vsel %vm374, %v358, 0
      %v394 = vsel %vm374, %v359, 0
      %v397 = vsel %vm374, %v360, 0
      %v400 = vsel %vm374, %v361, 0
      %v403 = vsel %vm374, %v362, 0
      %v406 = vsel %vm374, %v363, 0
      %v409 = vsel %vm374, %v364, 0
      %v412 = vsel %vm374, %v365, 0
      %v415 = vsel %vm374, %v366, 0
      %v418 = vsel %vm374, %v367, 0
      %v421 = vsel %vm374, %v368, 0
      %vm423 = vcmask 1045504
      %v425 = vsel %vm423, %v373, 0
      %427 = vmatprep.subr.bf16.mxu0 0
      %428 = vmatpush1.bf16.msra.mxu0 %v425
      %429 = vmatprep.subr.bf16.mxu0 0
      %430 = vmatpush1.bf16.msra.mxu0 0
      %431 = vmatprep.subr.bf16.mxu0 0
      %432 = vmatpush1.bf16.msra.mxu0 0
      %433 = vmatprep.subr.bf16.mxu0 0
      %434 = vmatpush1.bf16.msra.mxu0 0
      %435 = vmatprep.subr.bf16.mxu0 0
      %436 = vmatpush1.bf16.msra.mxu0 0
      %437 = vmatprep.subr.bf16.mxu0 0
      %438 = vmatpush1.bf16.msra.mxu0 0
      %439 = vmatprep.subr.bf16.mxu0 0
      %440 = vmatpush1.bf16.msra.mxu0 0
      %441 = vmatprep.subr.bf16.mxu0 0
      %442 = vmatpush1.bf16.msra.mxu0 0
      %443 = vmatprep.subr.bf16.mxu0 0
      %444 = vmatpush1.bf16.msra.mxu0 0
      %445 = vmatprep.subr.bf16.mxu0 0
      %446 = vmatpush1.bf16.msra.mxu0 0
      %447 = vmatprep.subr.bf16.mxu0 0
      %448 = vmatpush1.bf16.msra.mxu0 0
      %449 = vmatprep.subr.bf16.mxu0 0
      %450 = vmatpush1.bf16.msra.mxu0 0
      %451 = vmatprep.subr.bf16.mxu0 0
      %452 = vmatpush1.bf16.msra.mxu0 0
      %453 = vmatprep.subr.bf16.mxu0 0
      %454 = vmatpush1.bf16.msra.mxu0 0
      %455 = vmatprep.subr.bf16.mxu0 0
      %456 = vmatpush1.bf16.msra.mxu0 0
      %457 = vmatprep.subr.bf16.mxu0 0
      %458 = vmatpush1.bf16.msra.mxu0 0
      %459 = vmatprep.mubr.bf16.mxu0 0
      %460 = vmatmul.mubr.bf16.gmra.mrb[0].mxu0 %v376
      %v461 = vpop.f32.mrb[0].mxu0
      %v462 = vadd.f32 0.0, %v461
      %v463 = vpop.f32.mrb[0].mxu0
      %v464 = vpop.f32.mrb[0].mxu0
      %v465 = vadd.f32 0.0, %v464
      %v466 = vpop.f32.mrb[0].mxu0
      %467 = vmatprep.mubr.bf16.mxu0 0
      %468 = vmatmul.mubr.bf16.gmra.mrb[0].mxu0 %v379
      %v469 = vpop.f32.mrb[0].mxu0
      %v470 = vadd.f32 0.0, %v469
      %v471 = vpop.f32.mrb[0].mxu0
      %v472 = vpop.f32.mrb[0].mxu0
      %v473 = vadd.f32 0.0, %v472
      %v474 = vpop.f32.mrb[0].mxu0
      %475 = vmatprep.mubr.bf16.mxu0 0
      %476 = vmatmul.mubr.bf16.gmra.mrb[0].mxu0 %v382
      %v477 = vpop.f32.mrb[0].mxu0
      %v478 = vadd.f32 0.0, %v477
      %v479 = vpop.f32.mrb[0].mxu0
      %v480 = vpop.f32.mrb[0].mxu0
      %v481 = vadd.f32 0.0, %v480
      %v482 = vpop.f32.mrb[0].mxu0
      %483 = vmatprep.mubr.bf16.mxu0 0
      %484 = vmatmul.mubr.bf16.gmra.mrb[0].mxu0 %v385
      %v485 = vpop.f32.mrb[0].mxu0
      %v486 = vadd.f32 0.0, %v485
      %v487 = vpop.f32.mrb[0].mxu0
      %v488 = vpop.f32.mrb[0].mxu0
      %v489 = vadd.f32 0.0, %v488
      %v490 = vpop.f32.mrb[0].mxu0
      %491 = vmatprep.mubr.bf16.mxu0 0
      %492 = vmatmul.mubr.bf16.gmra.mrb[0].mxu0 %v388
      %v493 = vpop.f32.mrb[0].mxu0
      %v494 = vadd.f32 0.0, %v493
      %v495 = vpop.f32.mrb[0].mxu0
      %v496 = vpop.f32.mrb[0].mxu0
      %v497 = vadd.f32 0.0, %v496
      %v498 = vpop.f32.mrb[0].mxu0
      %499 = vmatprep.mubr.bf16.mxu0 0
      %500 = vmatmul.mubr.bf16.gmra.mrb[0].mxu0 %v391
      %v501 = vpop.f32.mrb[0].mxu0
      %v502 = vadd.f32 0.0, %v501
      %v503 = vpop.f32.mrb[0].mxu0
      %v504 = vpop.f32.mrb[0].mxu0
      %v505 = vadd.f32 0.0, %v504
      %v506 = vpop.f32.mrb[0].mxu0
      %507 = vmatprep.mubr.bf16.mxu0 0
      %508 = vmatmul.mubr.bf16.gmra.mrb[0].mxu0 %v394
      %v509 = vpop.f32.mrb[0].mxu0
      %v510 = vadd.f32 0.0, %v509
      %v511 = vpop.f32.mrb[0].mxu0
      %v512 = vpop.f32.mrb[0].mxu0
      %v513 = vadd.f32 0.0, %v512
      %v514 = vpop.f32.mrb[0].mxu0
      %515 = vmatprep.mubr.bf16.mxu0 0
      %516 = vmatmul.mubr.bf16.gmra.mrb[0].mxu0 %v397
      %v517 = vpop.f32.mrb[0].mxu0
      %v518 = vadd.f32 0.0, %v517
      %v519 = vpop.f32.mrb[0].mxu0
      %v520 = vpop.f32.mrb[0].mxu0
      %v521 = vadd.f32 0.0, %v520
      %v522 = vpop.f32.mrb[0].mxu0
      %523 = vmatprep.mubr.bf16.mxu0 0
      %524 = vmatmul.mubr.bf16.gmra.mrb[0].mxu0 %v400
      %v525 = vpop.f32.mrb[0].mxu0
      %v526 = vadd.f32 0.0, %v525
      %v527 = vpop.f32.mrb[0].mxu0
      %v528 = vpop.f32.mrb[0].mxu0
      %v529 = vadd.f32 0.0, %v528
      %v530 = vpop.f32.mrb[0].mxu0
      %531 = vmatprep.mubr.bf16.mxu0 0
      %532 = vmatmul.mubr.bf16.gmra.mrb[0].mxu0 %v403
      %v533 = vpop.f32.mrb[0].mxu0
      %v534 = vadd.f32 0.0, %v533
      %v535 = vpop.f32.mrb[0].mxu0
      %v536 = vpop.f32.mrb[0].mxu0
      %v537 = vadd.f32 0.0, %v536
      %v538 = vpop.f32.mrb[0].mxu0
      %539 = vmatprep.mubr.bf16.mxu0 0
      %540 = vmatmul.mubr.bf16.gmra.mrb[0].mxu0 %v406
      %v541 = vpop.f32.mrb[0].mxu0
      %v542 = vadd.f32 0.0, %v541
      %v543 = vpop.f32.mrb[0].mxu0
      %v544 = vpop.f32.mrb[0].mxu0
      %v545 = vadd.f32 0.0, %v544
      %v546 = vpop.f32.mrb[0].mxu0
      %547 = vmatprep.mubr.bf16.mxu0 0
      %548 = vmatmul.mubr.bf16.gmra.mrb[0].mxu0 %v409
      %v549 = vpop.f32.mrb[0].mxu0
      %v550 = vadd.f32 0.0, %v549
      %v551 = vpop.f32.mrb[0].mxu0
      %v552 = vpop.f32.mrb[0].mxu0
      %v553 = vadd.f32 0.0, %v552
      %v554 = vpop.f32.mrb[0].mxu0
      %555 = vmatprep.mubr.bf16.mxu0 0
      %556 = vmatmul.mubr.bf16.gmra.mrb[0].mxu0 %v412
      %v557 = vpop.f32.mrb[0].mxu0
      %v558 = vadd.f32 0.0, %v557
      %v559 = vpop.f32.mrb[0].mxu0
      %v560 = vpop.f32.mrb[0].mxu0
      %v561 = vadd.f32 0.0, %v560
      %v562 = vpop.f32.mrb[0].mxu0
      %563 = vmatprep.mubr.bf16.mxu0 0
      %564 = vmatmul.mubr.bf16.gmra.mrb[0].mxu0 %v415
      %v565 = vpop.f32.mrb[0].mxu0
      %v566 = vadd.f32 0.0, %v565
      %v567 = vpop.f32.mrb[0].mxu0
      %v568 = vpop.f32.mrb[0].mxu0
      %v569 = vadd.f32 0.0, %v568
      %v570 = vpop.f32.mrb[0].mxu0
      %571 = vmatprep.mubr.bf16.mxu0 0
      %572 = vmatmul.mubr.bf16.gmra.mrb[0].mxu0 %v418
      %v573 = vpop.f32.mrb[0].mxu0
      %v574 = vadd.f32 0.0, %v573
      %v575 = vpop.f32.mrb[0].mxu0
      %v576 = vpop.f32.mrb[0].mxu0
      %v577 = vadd.f32 0.0, %v576
      %v578 = vpop.f32.mrb[0].mxu0
      %579 = vmatprep.mubr.bf16.mxu0 0
      %580 = vmatmul.mubr.bf16.gmra.mrb[0].mxu0 %v421
      %v581 = vpop.f32.mrb[0].mxu0
      %v582 = vadd.f32 0.0, %v581
      %v583 = vpop.f32.mrb[0].mxu0
      %v584 = vpop.f32.mrb[0].mxu0
      %v585 = vadd.f32 0.0, %v584
      %v586 = vpop.f32.mrb[0].mxu0
      %587 = vdwg.mxu0
      %v620 = vunpack.c.l.b16 %v219
      %v621 = vunpack.c.l.b16 %v220
      %v622 = vunpack.c.l.b16 %v221
      %v623 = vunpack.c.l.b16 %v222
      %v624 = vunpack.c.l.b16 %v223
      %v625 = vunpack.c.l.b16 %v224
      %v626 = vunpack.c.l.b16 %v225
      %v627 = vunpack.c.l.b16 %v226
      %v628 = vunpack.c.l.b16 %v227
      %v629 = vunpack.c.l.b16 %v228
      %v630 = vunpack.c.l.b16 %v229
      %v631 = vunpack.c.l.b16 %v230
      %v632 = vunpack.c.l.b16 %v231
      %v633 = vunpack.c.l.b16 %v232
      %v634 = vunpack.c.l.b16 %v233
      %v635 = vunpack.c.l.b16 %v234
      %v636 = vunpack.c.l.b16 %v235
      %v637 = vunpack.c.l.b16 %v236
      %v638 = vunpack.c.l.b16 %v237
      %v639 = vunpack.c.l.b16 %v238
      %v640 = vunpack.c.l.b16 %v239
      %v641 = vunpack.c.l.b16 %v240
      %v642 = vunpack.c.l.b16 %v241
      %v643 = vunpack.c.l.b16 %v242
      %v644 = vunpack.c.l.b16 %v243
      %v645 = vunpack.c.l.b16 %v244
      %v646 = vunpack.c.l.b16 %v245
      %v647 = vunpack.c.l.b16 %v246
      %v648 = vunpack.c.l.b16 %v247
      %v649 = vunpack.c.l.b16 %v248
      %v650 = vunpack.c.l.b16 %v249
      %v651 = vunpack.c.l.b16 %v250
      %v652 = vpack.c.b16 %v621, %v620
      %v653 = vpack.c.b16 %v623, %v622
      %v654 = vpack.c.b16 %v625, %v624
      %v655 = vpack.c.b16 %v627, %v626
      %v656 = vpack.c.b16 %v629, %v628
      %v657 = vpack.c.b16 %v631, %v630
      %v658 = vpack.c.b16 %v633, %v632
      %v659 = vpack.c.b16 %v635, %v634
      %v660 = vpack.c.b16 %v637, %v636
      %v661 = vpack.c.b16 %v639, %v638
      %v662 = vpack.c.b16 %v641, %v640
      %v663 = vpack.c.b16 %v643, %v642
      %v664 = vpack.c.b16 %v645, %v644
      %v665 = vpack.c.b16 %v647, %v646
      %v666 = vpack.c.b16 %v649, %v648
      %v667 = vpack.c.b16 %v651, %v650
      %v670 = vunpack.c.l.b16 %v251
      %v671 = vunpack.c.l.b16 %v252
      %v672 = vpack.c.b16 %v671, %v670
      %v674 = vsel %vm374, %v652, 0
      %v677 = vsel %vm374, %v653, 0
      %v680 = vsel %vm374, %v654, 0
      %v683 = vsel %vm374, %v655, 0
      %v686 = vsel %vm374, %v656, 0
      %v689 = vsel %vm374, %v657, 0
      %v692 = vsel %vm374, %v658, 0
      %v695 = vsel %vm374, %v659, 0
      %v698 = vsel %vm374, %v660, 0
      %v701 = vsel %vm374, %v661, 0
      %v704 = vsel %vm374, %v662, 0
      %v707 = vsel %vm374, %v663, 0
      %v710 = vsel %vm374, %v664, 0
      %v713 = vsel %vm374, %v665, 0
      %v716 = vsel %vm374, %v666, 0
      %v719 = vsel %vm374, %v667, 0
      %v722 = vsel %vm423, %v672, 0
      %724 = vmatprep.subr.bf16.mxu0 0
      %725 = vmatpush1.bf16.msra.mxu0 %v722
      %726 = vmatprep.subr.bf16.mxu0 0
      %727 = vmatpush1.bf16.msra.mxu0 0
      %728 = vmatprep.subr.bf16.mxu0 0
      %729 = vmatpush1.bf16.msra.mxu0 0
      %730 = vmatprep.subr.bf16.mxu0 0
      %731 = vmatpush1.bf16.msra.mxu0 0
      %732 = vmatprep.subr.bf16.mxu0 0
      %733 = vmatpush1.bf16.msra.mxu0 0
      %734 = vmatprep.subr.bf16.mxu0 0
      %735 = vmatpush1.bf16.msra.mxu0 0
      %736 = vmatprep.subr.bf16.mxu0 0
      %737 = vmatpush1.bf16.msra.mxu0 0
      %738 = vmatprep.subr.bf16.mxu0 0
      %739 = vmatpush1.bf16.msra.mxu0 0
      %740 = vmatprep.subr.bf16.mxu0 0
      %741 = vmatpush1.bf16.msra.mxu0 0
      %742 = vmatprep.subr.bf16.mxu0 0
      %743 = vmatpush1.bf16.msra.mxu0 0
      %744 = vmatprep.subr.bf16.mxu0 0
      %745 = vmatpush1.bf16.msra.mxu0 0
      %746 = vmatprep.subr.bf16.mxu0 0
      %747 = vmatpush1.bf16.msra.mxu0 0
      %748 = vmatprep.subr.bf16.mxu0 0
      %749 = vmatpush1.bf16.msra.mxu0 0
      %750 = vmatprep.subr.bf16.mxu0 0
      %751 = vmatpush1.bf16.msra.mxu0 0
      %752 = vmatprep.subr.bf16.mxu0 0
      %753 = vmatpush1.bf16.msra.mxu0 0
      %754 = vmatprep.subr.bf16.mxu0 0
      %755 = vmatpush1.bf16.msra.mxu0 0
      %756 = vmatprep.mubr.bf16.mxu0 0
      %757 = vmatmul.mubr.bf16.gmra.mrb[0].mxu0 %v674
      %v758 = vpop.f32.mrb[0].mxu0
      %v759 = vadd.f32 %v462, %v758
      %v760 = vpop.f32.mrb[0].mxu0
      %v761 = vpop.f32.mrb[0].mxu0
      %v762 = vadd.f32 %v465, %v761
      %v763 = vpop.f32.mrb[0].mxu0
      %764 = vmatprep.mubr.bf16.mxu0 0
      %765 = vmatmul.mubr.bf16.gmra.mrb[0].mxu0 %v677
      %v766 = vpop.f32.mrb[0].mxu0
      %v767 = vadd.f32 %v470, %v766
      %v768 = vpop.f32.mrb[0].mxu0
      %v769 = vpop.f32.mrb[0].mxu0
      %v770 = vadd.f32 %v473, %v769
      %v771 = vpop.f32.mrb[0].mxu0
      %772 = vmatprep.mubr.bf16.mxu0 0
      %773 = vmatmul.mubr.bf16.gmra.mrb[0].mxu0 %v680
      %v774 = vpop.f32.mrb[0].mxu0
      %v775 = vadd.f32 %v478, %v774
      %v776 = vpop.f32.mrb[0].mxu0
      %v777 = vpop.f32.mrb[0].mxu0
      %v778 = vadd.f32 %v481, %v777
      %v779 = vpop.f32.mrb[0].mxu0
      %780 = vmatprep.mubr.bf16.mxu0 0
      %781 = vmatmul.mubr.bf16.gmra.mrb[0].mxu0 %v683
      %v782 = vpop.f32.mrb[0].mxu0
      %v783 = vadd.f32 %v486, %v782
      %v784 = vpop.f32.mrb[0].mxu0
      %v785 = vpop.f32.mrb[0].mxu0
      %v786 = vadd.f32 %v489, %v785
      %v787 = vpop.f32.mrb[0].mxu0
      %788 = vmatprep.mubr.bf16.mxu0 0
      %789 = vmatmul.mubr.bf16.gmra.mrb[0].mxu0 %v686
      %v790 = vpop.f32.mrb[0].mxu0
      %v791 = vadd.f32 %v494, %v790
      %v792 = vpop.f32.mrb[0].mxu0
      %v793 = vpop.f32.mrb[0].mxu0
      %v794 = vadd.f32 %v497, %v793
      %v795 = vpop.f32.mrb[0].mxu0
      %796 = vmatprep.mubr.bf16.mxu0 0
      %797 = vmatmul.mubr.bf16.gmra.mrb[0].mxu0 %v689
      %v798 = vpop.f32.mrb[0].mxu0
      %v799 = vadd.f32 %v502, %v798
      %v800 = vpop.f32.mrb[0].mxu0
      %v801 = vpop.f32.mrb[0].mxu0
      %v802 = vadd.f32 %v505, %v801
      %v803 = vpop.f32.mrb[0].mxu0
      %804 = vmatprep.mubr.bf16.mxu0 0
      %805 = vmatmul.mubr.bf16.gmra.mrb[0].mxu0 %v692
      %v806 = vpop.f32.mrb[0].mxu0
      %v807 = vadd.f32 %v510, %v806
      %v808 = vpop.f32.mrb[0].mxu0
      %v809 = vpop.f32.mrb[0].mxu0
      %v810 = vadd.f32 %v513, %v809
      %v811 = vpop.f32.mrb[0].mxu0
      %812 = vmatprep.mubr.bf16.mxu0 0
      %813 = vmatmul.mubr.bf16.gmra.mrb[0].mxu0 %v695
      %v814 = vpop.f32.mrb[0].mxu0
      %v815 = vadd.f32 %v518, %v814
      %v816 = vpop.f32.mrb[0].mxu0
      %v817 = vpop.f32.mrb[0].mxu0
      %v818 = vadd.f32 %v521, %v817
      %v819 = vpop.f32.mrb[0].mxu0
      %820 = vmatprep.mubr.bf16.mxu0 0
      %821 = vmatmul.mubr.bf16.gmra.mrb[0].mxu0 %v698
      %v822 = vpop.f32.mrb[0].mxu0
      %v823 = vadd.f32 %v526, %v822
      %v824 = vpop.f32.mrb[0].mxu0
      %v825 = vpop.f32.mrb[0].mxu0
      %v826 = vadd.f32 %v529, %v825
      %v827 = vpop.f32.mrb[0].mxu0
      %828 = vmatprep.mubr.bf16.mxu0 0
      %829 = vmatmul.mubr.bf16.gmra.mrb[0].mxu0 %v701
      %v830 = vpop.f32.mrb[0].mxu0
      %v831 = vadd.f32 %v534, %v830
      %v832 = vpop.f32.mrb[0].mxu0
      %v833 = vpop.f32.mrb[0].mxu0
      %v834 = vadd.f32 %v537, %v833
      %v835 = vpop.f32.mrb[0].mxu0
      %836 = vmatprep.mubr.bf16.mxu0 0
      %837 = vmatmul.mubr.bf16.gmra.mrb[0].mxu0 %v704
      %v838 = vpop.f32.mrb[0].mxu0
      %v839 = vadd.f32 %v542, %v838
      %v840 = vpop.f32.mrb[0].mxu0
      %v841 = vpop.f32.mrb[0].mxu0
      %v842 = vadd.f32 %v545, %v841
      %v843 = vpop.f32.mrb[0].mxu0
      %844 = vmatprep.mubr.bf16.mxu0 0
      %845 = vmatmul.mubr.bf16.gmra.mrb[0].mxu0 %v707
      %v846 = vpop.f32.mrb[0].mxu0
      %v847 = vadd.f32 %v550, %v846
      %v848 = vpop.f32.mrb[0].mxu0
      %v849 = vpop.f32.mrb[0].mxu0
      %v850 = vadd.f32 %v553, %v849
      %v851 = vpop.f32.mrb[0].mxu0
      %852 = vmatprep.mubr.bf16.mxu0 0
      %853 = vmatmul.mubr.bf16.gmra.mrb[0].mxu0 %v710
      %v854 = vpop.f32.mrb[0].mxu0
      %v855 = vadd.f32 %v558, %v854
      %v856 = vpop.f32.mrb[0].mxu0
      %v857 = vpop.f32.mrb[0].mxu0
      %v858 = vadd.f32 %v561, %v857
      %v859 = vpop.f32.mrb[0].mxu0
      %860 = vmatprep.mubr.bf16.mxu0 0
      %861 = vmatmul.mubr.bf16.gmra.mrb[0].mxu0 %v713
      %v862 = vpop.f32.mrb[0].mxu0
      %v863 = vadd.f32 %v566, %v862
      %v864 = vpop.f32.mrb[0].mxu0
      %v865 = vpop.f32.mrb[0].mxu0
      %v866 = vadd.f32 %v569, %v865
      %v867 = vpop.f32.mrb[0].mxu0
      %868 = vmatprep.mubr.bf16.mxu0 0
      %869 = vmatmul.mubr.bf16.gmra.mrb[0].mxu0 %v716
      %v870 = vpop.f32.mrb[0].mxu0
      %v871 = vadd.f32 %v574, %v870
      %v872 = vpop.f32.mrb[0].mxu0
      %v873 = vpop.f32.mrb[0].mxu0
      %v874 = vadd.f32 %v577, %v873
      %v875 = vpop.f32.mrb[0].mxu0
      %876 = vmatprep.mubr.bf16.mxu0 0
      %877 = vmatmul.mubr.bf16.gmra.mrb[0].mxu0 %v719
      %v878 = vpop.f32.mrb[0].mxu0
      %v879 = vadd.f32 %v582, %v878
      %v880 = vpop.f32.mrb[0].mxu0
      %v881 = vpop.f32.mrb[0].mxu0
      %v882 = vadd.f32 %v585, %v881
      %v883 = vpop.f32.mrb[0].mxu0
      %884 = vdwg.mxu0
      %s885 = scalar_lea.vmem %s203, 16
      %v886 = vld [vmem:[%s885] sm:$0xf]
      %v887 = vld [vmem:[%s885 + $0x4] sm:$0xf]
      %v888 = vld [vmem:[%s885 + $0x20] sm:$0xf]
      %v889 = vld [vmem:[%s885 + $0x24] sm:$0xf]
      %v890 = vld [vmem:[%s885 + $0x40] sm:$0xf]
      %v891 = vld [vmem:[%s885 + $0x44] sm:$0xf]
      %v892 = vld [vmem:[%s885 + $0x60] sm:$0xf]
      %v893 = vld [vmem:[%s885 + $0x64] sm:$0xf]
      %v894 = vld [vmem:[%s885 + $0x80] sm:$0xf]
      %v895 = vld [vmem:[%s885 + $0x84] sm:$0xf]
      %v896 = vld [vmem:[%s885 + $0xa0] sm:$0xf]
      %v897 = vld [vmem:[%s885 + $0xa4] sm:$0xf]
      %v898 = vld [vmem:[%s885 + $0xc0] sm:$0xf]
      %v899 = vld [vmem:[%s885 + $0xc4] sm:$0xf]
      %v900 = vld [vmem:[%s885 + $0xe0] sm:$0xf]
      %v901 = vld [vmem:[%s885 + $0xe4] sm:$0xf]
      %v902 = vld [vmem:[%s885 + $0x100] sm:$0xf]
      %v903 = vld [vmem:[%s885 + $0x104] sm:$0xf]
      %v904 = vld [vmem:[%s885 + $0x120] sm:$0xf]
      %v905 = vld [vmem:[%s885 + $0x124] sm:$0xf]
      %v906 = vld [vmem:[%s885 + $0x140] sm:$0xf]
      %v907 = vld [vmem:[%s885 + $0x144] sm:$0xf]
      %v908 = vld [vmem:[%s885 + $0x160] sm:$0xf]
      %v909 = vld [vmem:[%s885 + $0x164] sm:$0xf]
      %v910 = vld [vmem:[%s885 + $0x180] sm:$0xf]
      %v911 = vld [vmem:[%s885 + $0x184] sm:$0xf]
      %v912 = vld [vmem:[%s885 + $0x1a0] sm:$0xf]
      %v913 = vld [vmem:[%s885 + $0x1a4] sm:$0xf]
      %v914 = vld [vmem:[%s885 + $0x1c0] sm:$0xf]
      %v915 = vld [vmem:[%s885 + $0x1c4] sm:$0xf]
      %v916 = vld [vmem:[%s885 + $0x1e0] sm:$0xf]
      %v917 = vld [vmem:[%s885 + $0x1e4] sm:$0xf]
      %s918 = scalar_lea.vmem %s1, 16
      %v919 = vld [vmem:[%s918] sm:$0xf]
      %v920 = vld [vmem:[%s918 + $0x4] sm:$0x3]
      %v953 = vunpack.c.l.b16 %v886
      %v954 = vunpack.c.l.b16 %v887
      %v955 = vunpack.c.l.b16 %v888
      %v956 = vunpack.c.l.b16 %v889
      %v957 = vunpack.c.l.b16 %v890
      %v958 = vunpack.c.l.b16 %v891
      %v959 = vunpack.c.l.b16 %v892
      %v960 = vunpack.c.l.b16 %v893
      %v961 = vunpack.c.l.b16 %v894
      %v962 = vunpack.c.l.b16 %v895
      %v963 = vunpack.c.l.b16 %v896
      %v964 = vunpack.c.l.b16 %v897
      %v965 = vunpack.c.l.b16 %v898
      %v966 = vunpack.c.l.b16 %v899
      %v967 = vunpack.c.l.b16 %v900
      %v968 = vunpack.c.l.b16 %v901
      %v969 = vunpack.c.l.b16 %v902
      %v970 = vunpack.c.l.b16 %v903
      %v971 = vunpack.c.l.b16 %v904
      %v972 = vunpack.c.l.b16 %v905
      %v973 = vunpack.c.l.b16 %v906
      %v974 = vunpack.c.l.b16 %v907
      %v975 = vunpack.c.l.b16 %v908
      %v976 = vunpack.c.l.b16 %v909
      %v977 = vunpack.c.l.b16 %v910
      %v978 = vunpack.c.l.b16 %v911
      %v979 = vunpack.c.l.b16 %v912
      %v980 = vunpack.c.l.b16 %v913
      %v981 = vunpack.c.l.b16 %v914
      %v982 = vunpack.c.l.b16 %v915
      %v983 = vunpack.c.l.b16 %v916
      %v984 = vunpack.c.l.b16 %v917
      %v985 = vpack.c.b16 %v954, %v953
      %v986 = vpack.c.b16 %v956, %v955
      %v987 = vpack.c.b16 %v958, %v957
      %v988 = vpack.c.b16 %v960, %v959
      %v989 = vpack.c.b16 %v962, %v961
      %v990 = vpack.c.b16 %v964, %v963
      %v991 = vpack.c.b16 %v966, %v965
      %v992 = vpack.c.b16 %v968, %v967
      %v993 = vpack.c.b16 %v970, %v969
      %v994 = vpack.c.b16 %v972, %v971
      %v995 = vpack.c.b16 %v974, %v973
      %v996 = vpack.c.b16 %v976, %v975
      %v997 = vpack.c.b16 %v978, %v977
      %v998 = vpack.c.b16 %v980, %v979
      %v999 = vpack.c.b16 %v982, %v981
      %v1000 = vpack.c.b16 %v984, %v983
      %v1003 = vunpack.c.l.b16 %v919
      %v1004 = vunpack.c.l.b16 %v920
      %v1005 = vpack.c.b16 %v1004, %v1003
      %v1007 = vsel %vm374, %v985, 0
      %v1010 = vsel %vm374, %v986, 0
      %v1013 = vsel %vm374, %v987, 0
      %v1016 = vsel %vm374, %v988, 0
      %v1019 = vsel %vm374, %v989, 0
      %v1022 = vsel %vm374, %v990, 0
      %v1025 = vsel %vm374, %v991, 0
      %v1028 = vsel %vm374, %v992, 0
      %v1031 = vsel %vm374, %v993, 0
      %v1034 = vsel %vm374, %v994, 0
      %v1037 = vsel %vm374, %v995, 0
      %v1040 = vsel %vm374, %v996, 0
      %v1043 = vsel %vm374, %v997, 0
      %v1046 = vsel %vm374, %v998, 0
      %v1049 = vsel %vm374, %v999, 0
      %v1052 = vsel %vm374, %v1000, 0
      %v1055 = vsel %vm423, %v1005, 0
      %1057 = vmatprep.subr.bf16.mxu0 0
      %1058 = vmatpush1.bf16.msra.mxu0 %v1055
      %1059 = vmatprep.subr.bf16.mxu0 0
      %1060 = vmatpush1.bf16.msra.mxu0 0
      %1061 = vmatprep.subr.bf16.mxu0 0
      %1062 = vmatpush1.bf16.msra.mxu0 0
      %1063 = vmatprep.subr.bf16.mxu0 0
      %1064 = vmatpush1.bf16.msra.mxu0 0
      %1065 = vmatprep.subr.bf16.mxu0 0
      %1066 = vmatpush1.bf16.msra.mxu0 0
      %1067 = vmatprep.subr.bf16.mxu0 0
      %1068 = vmatpush1.bf16.msra.mxu0 0
      %1069 = vmatprep.subr.bf16.mxu0 0
      %1070 = vmatpush1.bf16.msra.mxu0 0
      %1071 = vmatprep.subr.bf16.mxu0 0
      %1072 = vmatpush1.bf16.msra.mxu0 0
      %1073 = vmatprep.subr.bf16.mxu0 0
      %1074 = vmatpush1.bf16.msra.mxu0 0
      %1075 = vmatprep.subr.bf16.mxu0 0
      %1076 = vmatpush1.bf16.msra.mxu0 0
      %1077 = vmatprep.subr.bf16.mxu0 0
      %1078 = vmatpush1.bf16.msra.mxu0 0
      %1079 = vmatprep.subr.bf16.mxu0 0
      %1080 = vmatpush1.bf16.msra.mxu0 0
      %1081 = vmatprep.subr.bf16.mxu0 0
      %1082 = vmatpush1.bf16.msra.mxu0 0
      %1083 = vmatprep.subr.bf16.mxu0 0
      %1084 = vmatpush1.bf16.msra.mxu0 0
      %1085 = vmatprep.subr.bf16.mxu0 0
      %1086 = vmatpush1.bf16.msra.mxu0 0
      %1087 = vmatprep.subr.bf16.mxu0 0
      %1088 = vmatpush1.bf16.msra.mxu0 0
      %1089 = vmatprep.mubr.bf16.mxu0 0
      %1090 = vmatmul.mubr.bf16.gmra.mrb[0].mxu0 %v1007
      %v1091 = vpop.f32.mrb[0].mxu0
      %v1092 = vadd.f32 0.0, %v1091
      %v1093 = vpop.f32.mrb[0].mxu0
      %v1094 = vpop.f32.mrb[0].mxu0
      %v1095 = vadd.f32 0.0, %v1094
      %v1096 = vpop.f32.mrb[0].mxu0
      %1097 = vmatprep.mubr.bf16.mxu0 0
      %1098 = vmatmul.mubr.bf16.gmra.mrb[0].mxu0 %v1010
      %v1099 = vpop.f32.mrb[0].mxu0
      %v1100 = vadd.f32 0.0, %v1099
      %v1101 = vpop.f32.mrb[0].mxu0
      %v1102 = vpop.f32.mrb[0].mxu0
      %v1103 = vadd.f32 0.0, %v1102
      %v1104 = vpop.f32.mrb[0].mxu0
      %1105 = vmatprep.mubr.bf16.mxu0 0
      %1106 = vmatmul.mubr.bf16.gmra.mrb[0].mxu0 %v1013
      %v1107 = vpop.f32.mrb[0].mxu0
      %v1108 = vadd.f32 0.0, %v1107
      %v1109 = vpop.f32.mrb[0].mxu0
      %v1110 = vpop.f32.mrb[0].mxu0
      %v1111 = vadd.f32 0.0, %v1110
      %v1112 = vpop.f32.mrb[0].mxu0
      %1113 = vmatprep.mubr.bf16.mxu0 0
      %1114 = vmatmul.mubr.bf16.gmra.mrb[0].mxu0 %v1016
      %v1115 = vpop.f32.mrb[0].mxu0
      %v1116 = vadd.f32 0.0, %v1115
      %v1117 = vpop.f32.mrb[0].mxu0
      %v1118 = vpop.f32.mrb[0].mxu0
      %v1119 = vadd.f32 0.0, %v1118
      %v1120 = vpop.f32.mrb[0].mxu0
      %1121 = vmatprep.mubr.bf16.mxu0 0
      %1122 = vmatmul.mubr.bf16.gmra.mrb[0].mxu0 %v1019
      %v1123 = vpop.f32.mrb[0].mxu0
      %v1124 = vadd.f32 0.0, %v1123
      %v1125 = vpop.f32.mrb[0].mxu0
      %v1126 = vpop.f32.mrb[0].mxu0
      %v1127 = vadd.f32 0.0, %v1126
      %v1128 = vpop.f32.mrb[0].mxu0
      %1129 = vmatprep.mubr.bf16.mxu0 0
      %1130 = vmatmul.mubr.bf16.gmra.mrb[0].mxu0 %v1022
      %v1131 = vpop.f32.mrb[0].mxu0
      %v1132 = vadd.f32 0.0, %v1131
      %v1133 = vpop.f32.mrb[0].mxu0
      %v1134 = vpop.f32.mrb[0].mxu0
      %v1135 = vadd.f32 0.0, %v1134
      %v1136 = vpop.f32.mrb[0].mxu0
      %1137 = vmatprep.mubr.bf16.mxu0 0
      %1138 = vmatmul.mubr.bf16.gmra.mrb[0].mxu0 %v1025
      %v1139 = vpop.f32.mrb[0].mxu0
      %v1140 = vadd.f32 0.0, %v1139
      %v1141 = vpop.f32.mrb[0].mxu0
      %v1142 = vpop.f32.mrb[0].mxu0
      %v1143 = vadd.f32 0.0, %v1142
      %v1144 = vpop.f32.mrb[0].mxu0
      %1145 = vmatprep.mubr.bf16.mxu0 0
      %1146 = vmatmul.mubr.bf16.gmra.mrb[0].mxu0 %v1028
      %v1147 = vpop.f32.mrb[0].mxu0
      %v1148 = vadd.f32 0.0, %v1147
      %v1149 = vpop.f32.mrb[0].mxu0
      %v1150 = vpop.f32.mrb[0].mxu0
      %v1151 = vadd.f32 0.0, %v1150
      %v1152 = vpop.f32.mrb[0].mxu0
      %1153 = vmatprep.mubr.bf16.mxu0 0
      %1154 = vmatmul.mubr.bf16.gmra.mrb[0].mxu0 %v1031
      %v1155 = vpop.f32.mrb[0].mxu0
      %v1156 = vadd.f32 0.0, %v1155
      %v1157 = vpop.f32.mrb[0].mxu0
      %v1158 = vpop.f32.mrb[0].mxu0
      %v1159 = vadd.f32 0.0, %v1158
      %v1160 = vpop.f32.mrb[0].mxu0
      %1161 = vmatprep.mubr.bf16.mxu0 0
      %1162 = vmatmul.mubr.bf16.gmra.mrb[0].mxu0 %v1034
      %v1163 = vpop.f32.mrb[0].mxu0
      %v1164 = vadd.f32 0.0, %v1163
      %v1165 = vpop.f32.mrb[0].mxu0
      %v1166 = vpop.f32.mrb[0].mxu0
      %v1167 = vadd.f32 0.0, %v1166
      %v1168 = vpop.f32.mrb[0].mxu0
      %1169 = vmatprep.mubr.bf16.mxu0 0
      %1170 = vmatmul.mubr.bf16.gmra.mrb[0].mxu0 %v1037
      %v1171 = vpop.f32.mrb[0].mxu0
      %v1172 = vadd.f32 0.0, %v1171
      %v1173 = vpop.f32.mrb[0].mxu0
      %v1174 = vpop.f32.mrb[0].mxu0
      %v1175 = vadd.f32 0.0, %v1174
      %v1176 = vpop.f32.mrb[0].mxu0
      %1177 = vmatprep.mubr.bf16.mxu0 0
      %1178 = vmatmul.mubr.bf16.gmra.mrb[0].mxu0 %v1040
      %v1179 = vpop.f32.mrb[0].mxu0
      %v1180 = vadd.f32 0.0, %v1179
      %v1181 = vpop.f32.mrb[0].mxu0
      %v1182 = vpop.f32.mrb[0].mxu0
      %v1183 = vadd.f32 0.0, %v1182
      %v1184 = vpop.f32.mrb[0].mxu0
      %1185 = vmatprep.mubr.bf16.mxu0 0
      %1186 = vmatmul.mubr.bf16.gmra.mrb[0].mxu0 %v1043
      %v1187 = vpop.f32.mrb[0].mxu0
      %v1188 = vadd.f32 0.0, %v1187
      %v1189 = vpop.f32.mrb[0].mxu0
      %v1190 = vpop.f32.mrb[0].mxu0
      %v1191 = vadd.f32 0.0, %v1190
      %v1192 = vpop.f32.mrb[0].mxu0
      %1193 = vmatprep.mubr.bf16.mxu0 0
      %1194 = vmatmul.mubr.bf16.gmra.mrb[0].mxu0 %v1046
      %v1195 = vpop.f32.mrb[0].mxu0
      %v1196 = vadd.f32 0.0, %v1195
      %v1197 = vpop.f32.mrb[0].mxu0
      %v1198 = vpop.f32.mrb[0].mxu0
      %v1199 = vadd.f32 0.0, %v1198
      %v1200 = vpop.f32.mrb[0].mxu0
      %1201 = vmatprep.mubr.bf16.mxu0 0
      %1202 = vmatmul.mubr.bf16.gmra.mrb[0].mxu0 %v1049
      %v1203 = vpop.f32.mrb[0].mxu0
      %v1204 = vadd.f32 0.0, %v1203
      %v1205 = vpop.f32.mrb[0].mxu0
      %v1206 = vpop.f32.mrb[0].mxu0
      %v1207 = vadd.f32 0.0, %v1206
      %v1208 = vpop.f32.mrb[0].mxu0
      %1209 = vmatprep.mubr.bf16.mxu0 0
      %1210 = vmatmul.mubr.bf16.gmra.mrb[0].mxu0 %v1052
      %v1211 = vpop.f32.mrb[0].mxu0
      %v1212 = vadd.f32 0.0, %v1211
      %v1213 = vpop.f32.mrb[0].mxu0
      %v1214 = vpop.f32.mrb[0].mxu0
      %v1215 = vadd.f32 0.0, %v1214
      %v1216 = vpop.f32.mrb[0].mxu0
      %1217 = vdwg.mxu0
      %v1218 = vadd.f32 %v759, %v1092
      %v1219 = vadd.f32 %v762, %v1095
      %v1220 = vadd.f32 %v767, %v1100
      %v1221 = vadd.f32 %v770, %v1103
      %v1222 = vadd.f32 %v775, %v1108
      %v1223 = vadd.f32 %v778, %v1111
      %v1224 = vadd.f32 %v783, %v1116
      %v1225 = vadd.f32 %v786, %v1119
      %v1226 = vadd.f32 %v791, %v1124
      %v1227 = vadd.f32 %v794, %v1127
      %v1228 = vadd.f32 %v799, %v1132
      %v1229 = vadd.f32 %v802, %v1135
      %v1230 = vadd.f32 %v807, %v1140
      %v1231 = vadd.f32 %v810, %v1143
      %v1232 = vadd.f32 %v815, %v1148
      %v1233 = vadd.f32 %v818, %v1151
      %v1234 = vadd.f32 %v823, %v1156
      %v1235 = vadd.f32 %v826, %v1159
      %v1236 = vadd.f32 %v831, %v1164
      %v1237 = vadd.f32 %v834, %v1167
      %v1238 = vadd.f32 %v839, %v1172
      %v1239 = vadd.f32 %v842, %v1175
      %v1240 = vadd.f32 %v847, %v1180
      %v1241 = vadd.f32 %v850, %v1183
      %v1242 = vadd.f32 %v855, %v1188
      %v1243 = vadd.f32 %v858, %v1191
      %v1244 = vadd.f32 %v863, %v1196
      %v1245 = vadd.f32 %v866, %v1199
      %v1246 = vadd.f32 %v871, %v1204
      %v1247 = vadd.f32 %v874, %v1207
      %v1248 = vadd.f32 %v879, %v1212
      %v1249 = vadd.f32 %v882, %v1215
      %s1250 = scalar_lea.vmem %s203, 24
      %v1251 = vld [vmem:[%s1250] sm:$0xf]
      %v1252 = vld [vmem:[%s1250 + $0x4] sm:$0xf]
      %v1253 = vld [vmem:[%s1250 + $0x20] sm:$0xf]
      %v1254 = vld [vmem:[%s1250 + $0x24] sm:$0xf]
      %v1255 = vld [vmem:[%s1250 + $0x40] sm:$0xf]
      %v1256 = vld [vmem:[%s1250 + $0x44] sm:$0xf]
      %v1257 = vld [vmem:[%s1250 + $0x60] sm:$0xf]
      %v1258 = vld [vmem:[%s1250 + $0x64] sm:$0xf]
      %v1259 = vld [vmem:[%s1250 + $0x80] sm:$0xf]
      %v1260 = vld [vmem:[%s1250 + $0x84] sm:$0xf]
      %v1261 = vld [vmem:[%s1250 + $0xa0] sm:$0xf]
      %v1262 = vld [vmem:[%s1250 + $0xa4] sm:$0xf]
      %v1263 = vld [vmem:[%s1250 + $0xc0] sm:$0xf]
      %v1264 = vld [vmem:[%s1250 + $0xc4] sm:$0xf]
      %v1265 = vld [vmem:[%s1250 + $0xe0] sm:$0xf]
      %v1266 = vld [vmem:[%s1250 + $0xe4] sm:$0xf]
      %v1267 = vld [vmem:[%s1250 + $0x100] sm:$0xf]
      %v1268 = vld [vmem:[%s1250 + $0x104] sm:$0xf]
      %v1269 = vld [vmem:[%s1250 + $0x120] sm:$0xf]
      %v1270 = vld [vmem:[%s1250 + $0x124] sm:$0xf]
      %v1271 = vld [vmem:[%s1250 + $0x140] sm:$0xf]
      %v1272 = vld [vmem:[%s1250 + $0x144] sm:$0xf]
      %v1273 = vld [vmem:[%s1250 + $0x160] sm:$0xf]
      %v1274 = vld [vmem:[%s1250 + $0x164] sm:$0xf]
      %v1275 = vld [vmem:[%s1250 + $0x180] sm:$0xf]
      %v1276 = vld [vmem:[%s1250 + $0x184] sm:$0xf]
      %v1277 = vld [vmem:[%s1250 + $0x1a0] sm:$0xf]
      %v1278 = vld [vmem:[%s1250 + $0x1a4] sm:$0xf]
      %v1279 = vld [vmem:[%s1250 + $0x1c0] sm:$0xf]
      %v1280 = vld [vmem:[%s1250 + $0x1c4] sm:$0xf]
      %v1281 = vld [vmem:[%s1250 + $0x1e0] sm:$0xf]
      %v1282 = vld [vmem:[%s1250 + $0x1e4] sm:$0xf]
      %s1283 = scalar_lea.vmem %s1, 24
      %v1284 = vld [vmem:[%s1283] sm:$0xf]
      %v1285 = vld [vmem:[%s1283 + $0x4] sm:$0x3]
      %v1318 = vunpack.c.l.b16 %v1251
      %v1319 = vunpack.c.l.b16 %v1252
      %v1320 = vunpack.c.l.b16 %v1253
      %v1321 = vunpack.c.l.b16 %v1254
      %v1322 = vunpack.c.l.b16 %v1255
      %v1323 = vunpack.c.l.b16 %v1256
      %v1324 = vunpack.c.l.b16 %v1257
      %v1325 = vunpack.c.l.b16 %v1258
      %v1326 = vunpack.c.l.b16 %v1259
      %v1327 = vunpack.c.l.b16 %v1260
      %v1328 = vunpack.c.l.b16 %v1261
      %v1329 = vunpack.c.l.b16 %v1262
      %v1330 = vunpack.c.l.b16 %v1263
      %v1331 = vunpack.c.l.b16 %v1264
      %v1332 = vunpack.c.l.b16 %v1265
      %v1333 = vunpack.c.l.b16 %v1266
      %v1334 = vunpack.c.l.b16 %v1267
      %v1335 = vunpack.c.l.b16 %v1268
      %v1336 = vunpack.c.l.b16 %v1269
      %v1337 = vunpack.c.l.b16 %v1270
      %v1338 = vunpack.c.l.b16 %v1271
      %v1339 = vunpack.c.l.b16 %v1272
      %v1340 = vunpack.c.l.b16 %v1273
      %v1341 = vunpack.c.l.b16 %v1274
      %v1342 = vunpack.c.l.b16 %v1275
      %v1343 = vunpack.c.l.b16 %v1276
      %v1344 = vunpack.c.l.b16 %v1277
      %v1345 = vunpack.c.l.b16 %v1278
      %v1346 = vunpack.c.l.b16 %v1279
      %v1347 = vunpack.c.l.b16 %v1280
      %v1348 = vunpack.c.l.b16 %v1281
      %v1349 = vunpack.c.l.b16 %v1282
      %v1350 = vpack.c.b16 %v1319, %v1318
      %v1351 = vpack.c.b16 %v1321, %v1320
      %v1352 = vpack.c.b16 %v1323, %v1322
      %v1353 = vpack.c.b16 %v1325, %v1324
      %v1354 = vpack.c.b16 %v1327, %v1326
      %v1355 = vpack.c.b16 %v1329, %v1328
      %v1356 = vpack.c.b16 %v1331, %v1330
      %v1357 = vpack.c.b16 %v1333, %v1332
      %v1358 = vpack.c.b16 %v1335, %v1334
      %v1359 = vpack.c.b16 %v1337, %v1336
      %v1360 = vpack.c.b16 %v1339, %v1338
      %v1361 = vpack.c.b16 %v1341, %v1340
      %v1362 = vpack.c.b16 %v1343, %v1342
      %v1363 = vpack.c.b16 %v1345, %v1344
      %v1364 = vpack.c.b16 %v1347, %v1346
      %v1365 = vpack.c.b16 %v1349, %v1348
      %v1368 = vunpack.c.l.b16 %v1284
      %v1369 = vunpack.c.l.b16 %v1285
      %v1370 = vpack.c.b16 %v1369, %v1368
      %v1372 = vsel %vm374, %v1350, 0
      %v1375 = vsel %vm374, %v1351, 0
      %v1378 = vsel %vm374, %v1352, 0
      %v1381 = vsel %vm374, %v1353, 0
      %v1384 = vsel %vm374, %v1354, 0
      %v1387 = vsel %vm374, %v1355, 0
      %v1390 = vsel %vm374, %v1356, 0
      %v1393 = vsel %vm374, %v1357, 0
      %v1396 = vsel %vm374, %v1358, 0
      %v1399 = vsel %vm374, %v1359, 0
      %v1402 = vsel %vm374, %v1360, 0
      %v1405 = vsel %vm374, %v1361, 0
      %v1408 = vsel %vm374, %v1362, 0
      %v1411 = vsel %vm374, %v1363, 0
      %v1414 = vsel %vm374, %v1364, 0
      %v1417 = vsel %vm374, %v1365, 0
      %v1420 = vsel %vm423, %v1370, 0
      %1422 = vmatprep.subr.bf16.mxu0 0
      %1423 = vmatpush1.bf16.msra.mxu0 %v1420
      %1424 = vmatprep.subr.bf16.mxu0 0
      %1425 = vmatpush1.bf16.msra.mxu0 0
      %1426 = vmatprep.subr.bf16.mxu0 0
      %1427 = vmatpush1.bf16.msra.mxu0 0
      %1428 = vmatprep.subr.bf16.mxu0 0
      %1429 = vmatpush1.bf16.msra.mxu0 0
      %1430 = vmatprep.subr.bf16.mxu0 0
      %1431 = vmatpush1.bf16.msra.mxu0 0
      %1432 = vmatprep.subr.bf16.mxu0 0
      %1433 = vmatpush1.bf16.msra.mxu0 0
      %1434 = vmatprep.subr.bf16.mxu0 0
      %1435 = vmatpush1.bf16.msra.mxu0 0
      %1436 = vmatprep.subr.bf16.mxu0 0
      %1437 = vmatpush1.bf16.msra.mxu0 0
      %1438 = vmatprep.subr.bf16.mxu0 0
      %1439 = vmatpush1.bf16.msra.mxu0 0
      %1440 = vmatprep.subr.bf16.mxu0 0
      %1441 = vmatpush1.bf16.msra.mxu0 0
      %1442 = vmatprep.subr.bf16.mxu0 0
      %1443 = vmatpush1.bf16.msra.mxu0 0
      %1444 = vmatprep.subr.bf16.mxu0 0
      %1445 = vmatpush1.bf16.msra.mxu0 0
      %1446 = vmatprep.subr.bf16.mxu0 0
      %1447 = vmatpush1.bf16.msra.mxu0 0
      %1448 = vmatprep.subr.bf16.mxu0 0
      %1449 = vmatpush1.bf16.msra.mxu0 0
      %1450 = vmatprep.subr.bf16.mxu0 0
      %1451 = vmatpush1.bf16.msra.mxu0 0
      %1452 = vmatprep.subr.bf16.mxu0 0
      %1453 = vmatpush1.bf16.msra.mxu0 0
      %1454 = vmatprep.mubr.bf16.mxu0 0
      %1455 = vmatmul.mubr.bf16.gmra.mrb[0].mxu0 %v1372
      %v1456 = vpop.f32.mrb[0].mxu0
      %v1457 = vadd.f32 0.0, %v1456
      %v1458 = vpop.f32.mrb[0].mxu0
      %v1459 = vpop.f32.mrb[0].mxu0
      %v1460 = vadd.f32 0.0, %v1459
      %v1461 = vpop.f32.mrb[0].mxu0
      %1462 = vmatprep.mubr.bf16.mxu0 0
      %1463 = vmatmul.mubr.bf16.gmra.mrb[0].mxu0 %v1375
      %v1464 = vpop.f32.mrb[0].mxu0
      %v1465 = vadd.f32 0.0, %v1464
      %v1466 = vpop.f32.mrb[0].mxu0
      %v1467 = vpop.f32.mrb[0].mxu0
      %v1468 = vadd.f32 0.0, %v1467
      %v1469 = vpop.f32.mrb[0].mxu0
      %1470 = vmatprep.mubr.bf16.mxu0 0
      %1471 = vmatmul.mubr.bf16.gmra.mrb[0].mxu0 %v1378
      %v1472 = vpop.f32.mrb[0].mxu0
      %v1473 = vadd.f32 0.0, %v1472
      %v1474 = vpop.f32.mrb[0].mxu0
      %v1475 = vpop.f32.mrb[0].mxu0
      %v1476 = vadd.f32 0.0, %v1475
      %v1477 = vpop.f32.mrb[0].mxu0
      %1478 = vmatprep.mubr.bf16.mxu0 0
      %1479 = vmatmul.mubr.bf16.gmra.mrb[0].mxu0 %v1381
      %v1480 = vpop.f32.mrb[0].mxu0
      %v1481 = vadd.f32 0.0, %v1480
      %v1482 = vpop.f32.mrb[0].mxu0
      %v1483 = vpop.f32.mrb[0].mxu0
      %v1484 = vadd.f32 0.0, %v1483
      %v1485 = vpop.f32.mrb[0].mxu0
      %1486 = vmatprep.mubr.bf16.mxu0 0
      %1487 = vmatmul.mubr.bf16.gmra.mrb[0].mxu0 %v1384
      %v1488 = vpop.f32.mrb[0].mxu0
      %v1489 = vadd.f32 0.0, %v1488
      %v1490 = vpop.f32.mrb[0].mxu0
      %v1491 = vpop.f32.mrb[0].mxu0
      %v1492 = vadd.f32 0.0, %v1491
      %v1493 = vpop.f32.mrb[0].mxu0
      %1494 = vmatprep.mubr.bf16.mxu0 0
      %1495 = vmatmul.mubr.bf16.gmra.mrb[0].mxu0 %v1387
      %v1496 = vpop.f32.mrb[0].mxu0
      %v1497 = vadd.f32 0.0, %v1496
      %v1498 = vpop.f32.mrb[0].mxu0
      %v1499 = vpop.f32.mrb[0].mxu0
      %v1500 = vadd.f32 0.0, %v1499
      %v1501 = vpop.f32.mrb[0].mxu0
      %1502 = vmatprep.mubr.bf16.mxu0 0
      %1503 = vmatmul.mubr.bf16.gmra.mrb[0].mxu0 %v1390
      %v1504 = vpop.f32.mrb[0].mxu0
      %v1505 = vadd.f32 0.0, %v1504
      %v1506 = vpop.f32.mrb[0].mxu0
      %v1507 = vpop.f32.mrb[0].mxu0
      %v1508 = vadd.f32 0.0, %v1507
      %v1509 = vpop.f32.mrb[0].mxu0
      %1510 = vmatprep.mubr.bf16.mxu0 0
      %1511 = vmatmul.mubr.bf16.gmra.mrb[0].mxu0 %v1393
      %v1512 = vpop.f32.mrb[0].mxu0
      %v1513 = vadd.f32 0.0, %v1512
      %v1514 = vpop.f32.mrb[0].mxu0
      %v1515 = vpop.f32.mrb[0].mxu0
      %v1516 = vadd.f32 0.0, %v1515
      %v1517 = vpop.f32.mrb[0].mxu0
      %1518 = vmatprep.mubr.bf16.mxu0 0
      %1519 = vmatmul.mubr.bf16.gmra.mrb[0].mxu0 %v1396
      %v1520 = vpop.f32.mrb[0].mxu0
      %v1521 = vadd.f32 0.0, %v1520
      %v1522 = vpop.f32.mrb[0].mxu0
      %v1523 = vpop.f32.mrb[0].mxu0
      %v1524 = vadd.f32 0.0, %v1523
      %v1525 = vpop.f32.mrb[0].mxu0
      %1526 = vmatprep.mubr.bf16.mxu0 0
      %1527 = vmatmul.mubr.bf16.gmra.mrb[0].mxu0 %v1399
      %v1528 = vpop.f32.mrb[0].mxu0
      %v1529 = vadd.f32 0.0, %v1528
      %v1530 = vpop.f32.mrb[0].mxu0
      %v1531 = vpop.f32.mrb[0].mxu0
      %v1532 = vadd.f32 0.0, %v1531
      %v1533 = vpop.f32.mrb[0].mxu0
      %1534 = vmatprep.mubr.bf16.mxu0 0
      %1535 = vmatmul.mubr.bf16.gmra.mrb[0].mxu0 %v1402
      %v1536 = vpop.f32.mrb[0].mxu0
      %v1537 = vadd.f32 0.0, %v1536
      %v1538 = vpop.f32.mrb[0].mxu0
      %v1539 = vpop.f32.mrb[0].mxu0
      %v1540 = vadd.f32 0.0, %v1539
      %v1541 = vpop.f32.mrb[0].mxu0
      %1542 = vmatprep.mubr.bf16.mxu0 0
      %1543 = vmatmul.mubr.bf16.gmra.mrb[0].mxu0 %v1405
      %v1544 = vpop.f32.mrb[0].mxu0
      %v1545 = vadd.f32 0.0, %v1544
      %v1546 = vpop.f32.mrb[0].mxu0
      %v1547 = vpop.f32.mrb[0].mxu0
      %v1548 = vadd.f32 0.0, %v1547
      %v1549 = vpop.f32.mrb[0].mxu0
      %1550 = vmatprep.mubr.bf16.mxu0 0
      %1551 = vmatmul.mubr.bf16.gmra.mrb[0].mxu0 %v1408
      %v1552 = vpop.f32.mrb[0].mxu0
      %v1553 = vadd.f32 0.0, %v1552
      %v1554 = vpop.f32.mrb[0].mxu0
      %v1555 = vpop.f32.mrb[0].mxu0
      %v1556 = vadd.f32 0.0, %v1555
      %v1557 = vpop.f32.mrb[0].mxu0
      %1558 = vmatprep.mubr.bf16.mxu0 0
      %1559 = vmatmul.mubr.bf16.gmra.mrb[0].mxu0 %v1411
      %v1560 = vpop.f32.mrb[0].mxu0
      %v1561 = vadd.f32 0.0, %v1560
      %v1562 = vpop.f32.mrb[0].mxu0
      %v1563 = vpop.f32.mrb[0].mxu0
      %v1564 = vadd.f32 0.0, %v1563
      %v1565 = vpop.f32.mrb[0].mxu0
      %1566 = vmatprep.mubr.bf16.mxu0 0
      %1567 = vmatmul.mubr.bf16.gmra.mrb[0].mxu0 %v1414
      %v1568 = vpop.f32.mrb[0].mxu0
      %v1569 = vadd.f32 0.0, %v1568
      %v1570 = vpop.f32.mrb[0].mxu0
      %v1571 = vpop.f32.mrb[0].mxu0
      %v1572 = vadd.f32 0.0, %v1571
      %v1573 = vpop.f32.mrb[0].mxu0
      %1574 = vmatprep.mubr.bf16.mxu0 0
      %1575 = vmatmul.mubr.bf16.gmra.mrb[0].mxu0 %v1417
      %v1576 = vpop.f32.mrb[0].mxu0
      %v1577 = vadd.f32 0.0, %v1576
      %v1578 = vpop.f32.mrb[0].mxu0
      %v1579 = vpop.f32.mrb[0].mxu0
      %v1580 = vadd.f32 0.0, %v1579
      %v1581 = vpop.f32.mrb[0].mxu0
      %1582 = vdwg.mxu0
      %v1583 = vadd.f32 %v1218, %v1457
      %v1584 = vadd.f32 %v1219, %v1460
      %v1585 = vadd.f32 %v1220, %v1465
      %v1586 = vadd.f32 %v1221, %v1468
      %v1587 = vadd.f32 %v1222, %v1473
      %v1588 = vadd.f32 %v1223, %v1476
      %v1589 = vadd.f32 %v1224, %v1481
      %v1590 = vadd.f32 %v1225, %v1484
      %v1591 = vadd.f32 %v1226, %v1489
      %v1592 = vadd.f32 %v1227, %v1492
      %v1593 = vadd.f32 %v1228, %v1497
      %v1594 = vadd.f32 %v1229, %v1500
      %v1595 = vadd.f32 %v1230, %v1505
      %v1596 = vadd.f32 %v1231, %v1508
      %v1597 = vadd.f32 %v1232, %v1513
      %v1598 = vadd.f32 %v1233, %v1516
      %v1599 = vadd.f32 %v1234, %v1521
      %v1600 = vadd.f32 %v1235, %v1524
      %v1601 = vadd.f32 %v1236, %v1529
      %v1602 = vadd.f32 %v1237, %v1532
      %v1603 = vadd.f32 %v1238, %v1537
      %v1604 = vadd.f32 %v1239, %v1540
      %v1605 = vadd.f32 %v1240, %v1545
      %v1606 = vadd.f32 %v1241, %v1548
      %v1607 = vadd.f32 %v1242, %v1553
      %v1608 = vadd.f32 %v1243, %v1556
      %v1609 = vadd.f32 %v1244, %v1561
      %v1610 = vadd.f32 %v1245, %v1564
      %v1611 = vadd.f32 %v1246, %v1569
      %v1612 = vadd.f32 %v1247, %v1572
      %v1613 = vadd.f32 %v1248, %v1577
      %v1614 = vadd.f32 %v1249, %v1580
      %v1615 = vld [vmem:[%s2] sm:$0x1]
      %v1617 = vlaneseq
      %v1618 = vshrl.u32 %v1617, 7
      %v1619 = vsub.s32 0, %v1618
      %v1620 = vrot.slane %v1615, %v1619
      %v1622 = vadd.f32 %v1583, %v1620
      %v1623 = vadd.f32 %v1584, %v1620
      %v1624 = vadd.f32 %v1585, %v1620
      %v1625 = vadd.f32 %v1586, %v1620
      %v1626 = vadd.f32 %v1587, %v1620
      %v1627 = vadd.f32 %v1588, %v1620
      %v1628 = vadd.f32 %v1589, %v1620
      %v1629 = vadd.f32 %v1590, %v1620
      %v1630 = vadd.f32 %v1591, %v1620
      %v1631 = vadd.f32 %v1592, %v1620
      %v1632 = vadd.f32 %v1593, %v1620
      %v1633 = vadd.f32 %v1594, %v1620
      %v1634 = vadd.f32 %v1595, %v1620
      %v1635 = vadd.f32 %v1596, %v1620
      %v1636 = vadd.f32 %v1597, %v1620
      %v1637 = vadd.f32 %v1598, %v1620
      %v1638 = vadd.f32 %v1599, %v1620
      %v1639 = vadd.f32 %v1600, %v1620
      %v1640 = vadd.f32 %v1601, %v1620
      %v1641 = vadd.f32 %v1602, %v1620
      %v1642 = vadd.f32 %v1603, %v1620
      %v1643 = vadd.f32 %v1604, %v1620
      %v1644 = vadd.f32 %v1605, %v1620
      %v1645 = vadd.f32 %v1606, %v1620
      %v1646 = vadd.f32 %v1607, %v1620
      %v1647 = vadd.f32 %v1608, %v1620
      %v1648 = vadd.f32 %v1609, %v1620
      %v1649 = vadd.f32 %v1610, %v1620
      %v1650 = vadd.f32 %v1611, %v1620
      %v1651 = vadd.f32 %v1612, %v1620
      %v1652 = vadd.f32 %v1613, %v1620
      %v1653 = vadd.f32 %v1614, %v1620
      %v1654 = vmax.f32 %v1622, 0.0
      %v1655 = vmax.f32 %v1623, 0.0
      %v1656 = vmax.f32 %v1624, 0.0
      %v1657 = vmax.f32 %v1625, 0.0
      %v1658 = vmax.f32 %v1626, 0.0
      %v1659 = vmax.f32 %v1627, 0.0
      %v1660 = vmax.f32 %v1628, 0.0
      %v1661 = vmax.f32 %v1629, 0.0
      %v1662 = vmax.f32 %v1630, 0.0
      %v1663 = vmax.f32 %v1631, 0.0
      %v1664 = vmax.f32 %v1632, 0.0
      %v1665 = vmax.f32 %v1633, 0.0
      %v1666 = vmax.f32 %v1634, 0.0
      %v1667 = vmax.f32 %v1635, 0.0
      %v1668 = vmax.f32 %v1636, 0.0
      %v1669 = vmax.f32 %v1637, 0.0
      %v1670 = vmax.f32 %v1638, 0.0
      %v1671 = vmax.f32 %v1639, 0.0
      %v1672 = vmax.f32 %v1640, 0.0
      %v1673 = vmax.f32 %v1641, 0.0
      %v1674 = vmax.f32 %v1642, 0.0
      %v1675 = vmax.f32 %v1643, 0.0
      %v1676 = vmax.f32 %v1644, 0.0
      %v1677 = vmax.f32 %v1645, 0.0
      %v1678 = vmax.f32 %v1646, 0.0
      %v1679 = vmax.f32 %v1647, 0.0
      %v1680 = vmax.f32 %v1648, 0.0
      %v1681 = vmax.f32 %v1649, 0.0
      %v1682 = vmax.f32 %v1650, 0.0
      %v1683 = vmax.f32 %v1651, 0.0
      %v1684 = vmax.f32 %v1652, 0.0
      %v1685 = vmax.f32 %v1653, 0.0
      %v1686 = vpack.c.bf16 %v1655, %v1654
      %v1687 = vpack.c.bf16 %v1657, %v1656
      %v1688 = vpack.c.bf16 %v1659, %v1658
      %v1689 = vpack.c.bf16 %v1661, %v1660
      %v1690 = vpack.c.bf16 %v1663, %v1662
      %v1691 = vpack.c.bf16 %v1665, %v1664
      %v1692 = vpack.c.bf16 %v1667, %v1666
      %v1693 = vpack.c.bf16 %v1669, %v1668
      %v1694 = vpack.c.bf16 %v1671, %v1670
      %v1695 = vpack.c.bf16 %v1673, %v1672
      %v1696 = vpack.c.bf16 %v1675, %v1674
      %v1697 = vpack.c.bf16 %v1677, %v1676
      %v1698 = vpack.c.bf16 %v1679, %v1678
      %v1699 = vpack.c.bf16 %v1681, %v1680
      %v1700 = vpack.c.bf16 %v1683, %v1682
      %v1701 = vpack.c.bf16 %v1685, %v1684
      %v1718 = vunpack.c.l.b16 %v1686
      %v1719 = vunpack.c.h.b16 %v1686
      %v1720 = vunpack.c.l.b16 %v1687
      %v1721 = vunpack.c.h.b16 %v1687
      %v1722 = vunpack.c.l.b16 %v1688
      %v1723 = vunpack.c.h.b16 %v1688
      %v1724 = vunpack.c.l.b16 %v1689
      %v1725 = vunpack.c.h.b16 %v1689
      %v1726 = vunpack.c.l.b16 %v1690
      %v1727 = vunpack.c.h.b16 %v1690
      %v1728 = vunpack.c.l.b16 %v1691
      %v1729 = vunpack.c.h.b16 %v1691
      %v1730 = vunpack.c.l.b16 %v1692
      %v1731 = vunpack.c.h.b16 %v1692
      %v1732 = vunpack.c.l.b16 %v1693
      %v1733 = vunpack.c.h.b16 %v1693
      %v1734 = vunpack.c.l.b16 %v1694
      %v1735 = vunpack.c.h.b16 %v1694
      %v1736 = vunpack.c.l.b16 %v1695
      %v1737 = vunpack.c.h.b16 %v1695
      %v1738 = vunpack.c.l.b16 %v1696
      %v1739 = vunpack.c.h.b16 %v1696
      %v1740 = vunpack.c.l.b16 %v1697
      %v1741 = vunpack.c.h.b16 %v1697
      %v1742 = vunpack.c.l.b16 %v1698
      %v1743 = vunpack.c.h.b16 %v1698
      %v1744 = vunpack.c.l.b16 %v1699
      %v1745 = vunpack.c.h.b16 %v1699
      %v1746 = vunpack.c.l.b16 %v1700
      %v1747 = vunpack.c.h.b16 %v1700
      %v1748 = vunpack.c.l.b16 %v1701
      %v1749 = vunpack.c.h.b16 %v1701
      %v1750 = vpack.c.b16 %v1718, %v1718
      %v1751 = vpack.c.b16 %v1719, %v1719
      %v1752 = vpack.c.b16 %v1720, %v1720
      %v1753 = vpack.c.b16 %v1721, %v1721
      %v1754 = vpack.c.b16 %v1722, %v1722
      %v1755 = vpack.c.b16 %v1723, %v1723
      %v1756 = vpack.c.b16 %v1724, %v1724
      %v1757 = vpack.c.b16 %v1725, %v1725
      %v1758 = vpack.c.b16 %v1726, %v1726
      %v1759 = vpack.c.b16 %v1727, %v1727
      %v1760 = vpack.c.b16 %v1728, %v1728
      %v1761 = vpack.c.b16 %v1729, %v1729
      %v1762 = vpack.c.b16 %v1730, %v1730
      %v1763 = vpack.c.b16 %v1731, %v1731
      %v1764 = vpack.c.b16 %v1732, %v1732
      %v1765 = vpack.c.b16 %v1733, %v1733
      %v1766 = vpack.c.b16 %v1734, %v1734
      %v1767 = vpack.c.b16 %v1735, %v1735
      %v1768 = vpack.c.b16 %v1736, %v1736
      %v1769 = vpack.c.b16 %v1737, %v1737
      %v1770 = vpack.c.b16 %v1738, %v1738
      %v1771 = vpack.c.b16 %v1739, %v1739
      %v1772 = vpack.c.b16 %v1740, %v1740
      %v1773 = vpack.c.b16 %v1741, %v1741
      %v1774 = vpack.c.b16 %v1742, %v1742
      %v1775 = vpack.c.b16 %v1743, %v1743
      %v1776 = vpack.c.b16 %v1744, %v1744
      %v1777 = vpack.c.b16 %v1745, %v1745
      %v1778 = vpack.c.b16 %v1746, %v1746
      %v1779 = vpack.c.b16 %v1747, %v1747
      %v1780 = vpack.c.b16 %v1748, %v1748
      %v1781 = vpack.c.b16 %v1749, %v1749
      %1814 = vst [vmem:[%s215] sm:$0xf] %v1750
      %1815 = vst [vmem:[%s215 + $0x4] sm:$0xf] %v1751
      %1816 = vst [vmem:[%s215 + $0x8] sm:$0xf] %v1752
      %1817 = vst [vmem:[%s215 + $0xc] sm:$0xf] %v1753
      %1818 = vst [vmem:[%s215 + $0x10] sm:$0xf] %v1754
      %1819 = vst [vmem:[%s215 + $0x14] sm:$0xf] %v1755
      %1820 = vst [vmem:[%s215 + $0x18] sm:$0xf] %v1756
      %1821 = vst [vmem:[%s215 + $0x1c] sm:$0xf] %v1757
      %1822 = vst [vmem:[%s215 + $0x20] sm:$0xf] %v1758
      %1823 = vst [vmem:[%s215 + $0x24] sm:$0xf] %v1759
      %1824 = vst [vmem:[%s215 + $0x28] sm:$0xf] %v1760
      %1825 = vst [vmem:[%s215 + $0x2c] sm:$0xf] %v1761
      %1826 = vst [vmem:[%s215 + $0x30] sm:$0xf] %v1762
      %1827 = vst [vmem:[%s215 + $0x34] sm:$0xf] %v1763
      %1828 = vst [vmem:[%s215 + $0x38] sm:$0xf] %v1764
      %1829 = vst [vmem:[%s215 + $0x3c] sm:$0xf] %v1765
      %1830 = vst [vmem:[%s215 + $0x40] sm:$0xf] %v1766
      %1831 = vst [vmem:[%s215 + $0x44] sm:$0xf] %v1767
      %1832 = vst [vmem:[%s215 + $0x48] sm:$0xf] %v1768
      %1833 = vst [vmem:[%s215 + $0x4c] sm:$0xf] %v1769
      %1834 = vst [vmem:[%s215 + $0x50] sm:$0xf] %v1770
      %1835 = vst [vmem:[%s215 + $0x54] sm:$0xf] %v1771
      %1836 = vst [vmem:[%s215 + $0x58] sm:$0xf] %v1772
      %1837 = vst [vmem:[%s215 + $0x5c] sm:$0xf] %v1773
      %1838 = vst [vmem:[%s215 + $0x60] sm:$0xf] %v1774
      %1839 = vst [vmem:[%s215 + $0x64] sm:$0xf] %v1775
      %1840 = vst [vmem:[%s215 + $0x68] sm:$0xf] %v1776
      %1841 = vst [vmem:[%s215 + $0x6c] sm:$0xf] %v1777
      %1842 = vst [vmem:[%s215 + $0x70] sm:$0xf] %v1778
      %1843 = vst [vmem:[%s215 + $0x74] sm:$0xf] %v1779
      %1844 = vst [vmem:[%s215 + $0x78] sm:$0xf] %v1780
      %1845 = vst [vmem:[%s215 + $0x7c] sm:$0xf] %v1781
      %s1846 = smul.u32 16, %s18
      %s1847 = smul.u32 2, %s19
      %p1848 = scmp.lt.s32.totalorder %s1846, 31
      %s1849 = scalar_select %p1848, %s1846, 31
      %p1850 = scmp.lt.s32.totalorder %s1847, 1
      %s1851 = scalar_select %p1850, %s1847, 1
      %s1852 = smul.addr %s1849, 2
      %s1853 = sadd.s32 %s1851, %s1852
      %s1854 = smul.addr %s1853, 4
      %s1855 = scalar_lea.vmem %s3, %s1854
      // Predicated region
      $region33: #{_forward.4} parent=31 // pred_check
        %p1856 = pneg %p116
      $region34: #{_forward.4} parent=31 // pred_check_branch
        %1858 = sbr.rel (%p1856) target = $region36
      $region35: #{_forward.4} parent=31 // pred_region
        %s1859 = smul.u32 16, %s18
        %s1860 = smul.u32 2, %s19
      $region36: #{_forward.4} parent=31 // pred_fallthru
        _
    $region32: #{_forward.4} parent=5 // pred_fallthru
      _
    %p1861 = scmp.le.s32.totalorder 2, %s9
    // Predicated region
    $region37: #{_forward.4} parent=5 // pred_check
      %p1862 = pneg %p1861
    $region38: #{_forward.4} parent=5 // pred_check_branch
      %1864 = sbr.rel (%p1862) target = $region40
    $region39: #{_forward.4} parent=5 // pred_region
      %s1865 = ssub.s32 %s9, 2
      // Predicated region
      $region41: #{_forward.4} parent=39 // pred_check
        %p1866 = pneg %p122
      $region42: #{_forward.4} parent=39 // pred_check_branch
        %1868 = sbr.rel (%p1866) target = $region44
      $region43: #{_forward.4} parent=39 // pred_region
        %s1869 = smul.u32 16, %s20
        %s1870 = smul.u32 2, %s21
        %p1871 = scmp.lt.s32.totalorder %s1869, 31
        %s1872 = scalar_select %p1871, %s1869, 31
        %p1873 = scmp.lt.s32.totalorder %s1870, 1
        %s1874 = scalar_select %p1873, %s1870, 1
        %s1875 = smul.addr %s1872, 2
        %s1876 = sadd.s32 %s1874, %s1875
        %s1877 = smul.addr %s1876, 4
        %s1878 = scalar_lea.vmem %s3, %s1877
      $region44: #{_forward.4} parent=39 // pred_fallthru
        _
    $region40: #{_forward.4} parent=5 // pred_fallthru
      _
  $region6: #{_forward.4} parent=0 // loop_footer
    %s13 = sadd.s32 1, %s9
  $region7: #{_forward.4} parent=0 // loop_footer_branch
    %8 = sbr.rel target = $region3
  $region8: #{_forward.4} parent=0 // loop_exit
    _

// kernel: _forward.6
$region0: #{_forward.6}
  #allocation0 [shape = 'u32[]', space=smem, size = 0x4, offset = 0x4, fixed_abs, tag = 'smem constant byte address 0x4 - core index']
  #allocation1 [shape = 'u32[144,128]{1,0:T(1,128)}', space=vmem, size = 0x12000, scoped, tag = 'internal scratch']
  %s0 = inlined_call_operand.vmem [shape: bf16[8,2,4,256], index: 0, kind: input, shape index: {}]
  %s1 = inlined_call_operand.vmem [shape: bf16[2,256,256], index: 1, kind: input, shape index: {}]
  %s2 = inlined_call_operand.vmem [shape: f32[1,256], index: 2, kind: input, shape index: {}]
  %s3 = inlined_call_operand.vmem [shape: bf16[8,4,256], index: 3, kind: output, shape index: {0}]
  %s4 = inlined_call_operand.hbm [shape: f32[8,4,256], index: 4, kind: output, shape index: {1}]
  %5 = xla_tuple %s3, %s4
  %s6 = sld [smem:[#allocation0]]
  $region53: #{_forward.6} parent=0
    _
  %s8 = ssub.s32 1, %s6
  %s9 = scalar_select 0, %s8, %s6
  $region1: #{_forward.6} parent=0
    #allocation2 [shape = 'u8[8192]{0}', space=vmem, size = 0x2000, scoped, tag = 'output window, operand 1']
    #allocation3 [shape = 's32[2]{0}', space=sflag, size = 0x8, scoped, tag = 'scoped memory for _forward.6']
    %10 = vsyncpa [#allocation3], 0
    %s11 = scalar_lea.sflag [#allocation3], 1
    %12 = vsyncpa %s11, 0
    loop: start=0, step=1, limit=10
    $region2: #{_forward.6} parent=1 // loop_pre_header
      _
    $region3: #{_forward.6} parent=1 // loop_header
      %s14 = sphi 0, %s18
      %p15 = scmp.ge.s32.totalorder %s14, 10
      %s21 = sphi 0, %s33
      %s22 = sphi 0, %s29
      %s23 = sphi 0, %s21
      %s24 = sphi 0, %s22
      %s25 = sphi 0, %s23
      %s26 = sphi 0, %s24
      %s38 = sphi 0, %s40
      %s41 = sphi 0, %s38
      %s42 = sphi 0, %s41
      %s58 = sphi 0, %s42
      %s62 = sphi 0, %s62
      %s64 = sphi 0, %s62
      %s65 = sphi 0, %s64
      %s79 = sphi 0, %s65
      %s83 = sphi 0, %s83
      %s85 = sphi 0, %s83
      %s86 = sphi 0, %s85
      %s100 = sphi 0, %s86
      %s108 = sphi 0, %s110
      %s111 = sphi 0, %s108
      %s112 = sphi 0, %s111
      %s128 = sphi 0, %s112
      %s136 = sphi 0, %s138
      %s139 = sphi 0, %s136
      %s140 = sphi 0, %s139
      %s156 = sphi 0, %s140
    $region4: #{_forward.6} parent=1 // loop_header_branch
      %17 = sbr.rel (%p15) target = $region8
    $region5: #{_forward.6} parent=1 // loop_body
      %s19 = ssub.s32 %s14, 1
      %s20 = ssub.s32 %s14, 2
      %s27 = sadd.s32 1, %s22
      %p28 = scmp.ge.s32.totalorder %s27, 1
      %s29 = scalar_select %p28, 0, %s27
      %s30 = sadd.s32 1, %s21
      %s31 = scalar_select %p28, %s30, %s21
      %p32 = scmp.ge.s32.totalorder %s31, 8
      %s33 = scalar_select %p32, 0, %s31
      %s34 = ssub.s32 %s21, %s33
      %s35 = ssub.s32 %s22, %s29
      %s36 = sor.u32 %s34, %s35
      %p37 = scmp.eq.s32.totalorder %s36, 0
      %s39 = sadd.s32 %s38, 1
      %s40 = scalar_select %p37, %s38, %s39
      %p43 = pneg %p37
      %p44 = scmp.eq.s32.totalorder %s14, 7
      %p45 = por %p43, %p44
      %p46 = scmp.ne.s32.totalorder %s38, %s41
      %p47 = scmp.eq.s32.totalorder %s14, 0
      %p48 = por %p46, %p47
      %p49 = scmp.ne.s32.totalorder %s38, %s41
      %p50 = scmp.eq.s32.totalorder %s19, 7
      %p51 = por %p49, %p50
      %p52 = scmp.ne.s32.totalorder %s41, %s42
      %p53 = scmp.eq.s32.totalorder %s19, 0
      %p54 = por %p52, %p53
      %p55 = scmp.ne.s32.totalorder %s41, %s42
      %p56 = scmp.eq.s32.totalorder %s20, 7
      %p57 = por %p55, %p56
      %p59 = scmp.ne.s32.totalorder %s42, %s58
      %p60 = scmp.eq.s32.totalorder %s20, 0
      %p61 = por %p59, %p60
      %s63 = sadd.s32 %s62, 1
      %p66 = scmp.eq.s32.totalorder %s14, 7
      %p67 = scmp.ne.s32.totalorder %s62, %s64
      %p68 = scmp.eq.s32.totalorder %s14, 0
      %p69 = por %p67, %p68
      %p70 = scmp.ne.s32.totalorder %s62, %s64
      %p71 = scmp.eq.s32.totalorder %s19, 7
      %p72 = por %p70, %p71
      %p73 = scmp.ne.s32.totalorder %s64, %s65
      %p74 = scmp.eq.s32.totalorder %s19, 0
      %p75 = por %p73, %p74
      %p76 = scmp.ne.s32.totalorder %s64, %s65
      %p77 = scmp.eq.s32.totalorder %s20, 7
      %p78 = por %p76, %p77
      %p80 = scmp.ne.s32.totalorder %s65, %s79
      %p81 = scmp.eq.s32.totalorder %s20, 0
      %p82 = por %p80, %p81
      %s84 = sadd.s32 %s83, 1
      %p87 = scmp.eq.s32.totalorder %s14, 7
      %p88 = scmp.ne.s32.totalorder %s83, %s85
      %p89 = scmp.eq.s32.totalorder %s14, 0
      %p90 = por %p88, %p89
      %p91 = scmp.ne.s32.totalorder %s83, %s85
      %p92 = scmp.eq.s32.totalorder %s19, 7
      %p93 = por %p91, %p92
      %p94 = scmp.ne.s32.totalorder %s85, %s86
      %p95 = scmp.eq.s32.totalorder %s19, 0
      %p96 = por %p94, %p95
      %p97 = scmp.ne.s32.totalorder %s85, %s86
      %p98 = scmp.eq.s32.totalorder %s20, 7
      %p99 = por %p97, %p98
      %p101 = scmp.ne.s32.totalorder %s86, %s100
      %p102 = scmp.eq.s32.totalorder %s20, 0
      %p103 = por %p101, %p102
      %s104 = ssub.s32 %s21, %s33
      %s105 = ssub.s32 %s22, %s29
      %s106 = sor.u32 %s104, %s105
      %p107 = scmp.eq.s32.totalorder %s106, 0
      %s109 = sadd.s32 %s108, 1
      %s110 = scalar_select %p107, %s108, %s109
      %p113 = pneg %p107
      %p114 = scmp.eq.s32.totalorder %s14, 7
      %p115 = por %p113, %p114
      %p116 = scmp.ne.s32.totalorder %s108, %s111
      %p117 = scmp.eq.s32.totalorder %s14, 0
      %p118 = por %p116, %p117
      %p119 = scmp.ne.s32.totalorder %s108, %s111
      %p120 = scmp.eq.s32.totalorder %s19, 7
      %p121 = por %p119, %p120
      %p122 = scmp.ne.s32.totalorder %s111, %s112
      %p123 = scmp.eq.s32.totalorder %s19, 0
      %p124 = por %p122, %p123
      %p125 = scmp.ne.s32.totalorder %s111, %s112
      %p126 = scmp.eq.s32.totalorder %s20, 7
      %p127 = por %p125, %p126
      %p129 = scmp.ne.s32.totalorder %s112, %s128
      %p130 = scmp.eq.s32.totalorder %s20, 0
      %p131 = por %p129, %p130
      %s132 = ssub.s32 %s21, %s33
      %s133 = ssub.s32 %s22, %s29
      %s134 = sor.u32 %s132, %s133
      %p135 = scmp.eq.s32.totalorder %s134, 0
      %s137 = sadd.s32 %s136, 1
      %s138 = scalar_select %p135, %s136, %s137
      %p141 = pneg %p135
      %p142 = scmp.eq.s32.totalorder %s14, 7
      %p143 = por %p141, %p142
      %p144 = scmp.ne.s32.totalorder %s136, %s139
      %p145 = scmp.eq.s32.totalorder %s14, 0
      %p146 = por %p144, %p145
      %p147 = scmp.ne.s32.totalorder %s136, %s139
      %p148 = scmp.eq.s32.totalorder %s19, 7
      %p149 = por %p147, %p148
      %p150 = scmp.ne.s32.totalorder %s139, %s140
      %p151 = scmp.eq.s32.totalorder %s19, 0
      %p152 = por %p150, %p151
      %p153 = scmp.ne.s32.totalorder %s139, %s140
      %p154 = scmp.eq.s32.totalorder %s20, 7
      %p155 = por %p153, %p154
      %p157 = scmp.ne.s32.totalorder %s140, %s156
      %p158 = scmp.eq.s32.totalorder %s20, 0
      %p159 = por %p157, %p158
      %p160 = scmp.le.s32.totalorder 1, %s14
      %p161 = scmp.lt.s32.totalorder %s14, 9
      %p162 = pnand %p160, %p161
      %p163 = pneg %p162
      // Predicated region
      $region9: #{_forward.6} parent=5 // pred_check
        _
      $region10: #{_forward.6} parent=5 // pred_check_branch
        %165 = sbr.rel (%p162) target = $region12
      $region11: #{_forward.6} parent=5 // pred_region
        %s166 = ssub.s32 %s14, 1
        // Predicated region
        $region13: #{_forward.6} parent=11 // pred_check
          %p167 = pneg %p75
        $region14: #{_forward.6} parent=11 // pred_check_branch
          %169 = sbr.rel (%p167) target = $region16
        $region15: #{_forward.6} parent=11 // pred_region
          _
        $region16: #{_forward.6} parent=11 // pred_fallthru
          _
        // Predicated region
        $region17: #{_forward.6} parent=11 // pred_check
          %p170 = pneg %p96
        $region18: #{_forward.6} parent=11 // pred_check_branch
          %172 = sbr.rel (%p170) target = $region20
        $region19: #{_forward.6} parent=11 // pred_region
          _
        $region20: #{_forward.6} parent=11 // pred_fallthru
          _
      $region12: #{_forward.6} parent=5 // pred_fallthru
        _
      %p173 = scmp.lt.s32.totalorder %s14, 8
      // Predicated region
      $region21: #{_forward.6} parent=5 // pred_check
        %p174 = pneg %p173
      $region22: #{_forward.6} parent=5 // pred_check_branch
        %176 = sbr.rel (%p174) target = $region24
      $region23: #{_forward.6} parent=5 // pred_region
        // Predicated region
        $region25: #{_forward.6} parent=23 // pred_check
          %p177 = pneg %p48
        $region26: #{_forward.6} parent=23 // pred_check_branch
          %179 = sbr.rel (%p177) target = $region28
        $region27: #{_forward.6} parent=23 // pred_region
          %p180 = scmp.lt.s32.totalorder %s21, 7
          %s181 = scalar_select %p180, %s21, 7
          %p182 = scmp.lt.s32.totalorder %s22, 0
          %s183 = scalar_select %p182, %s22, 0
          %s184 = smul.addr %s183, 2
          %s185 = smul.addr %s181, 4
          %s186 = sadd.s32 %s184, %s185
          %s187 = smul.addr %s186, 2
          %s188 = scalar_lea.vmem %s0, %s187
        $region28: #{_forward.6} parent=23 // pred_fallthru
          _
      $region24: #{_forward.6} parent=5 // pred_fallthru
        _
      %p189 = scmp.le.s32.totalorder 1, %s14
      %p190 = scmp.lt.s32.totalorder %s14, 9
      %p191 = pnand %p189, %p190
      %p192 = pneg %p191
      // Predicated region
      $region29: #{_forward.6} parent=5 // pred_check
        _
      $region30: #{_forward.6} parent=5 // pred_check_branch
        %194 = sbr.rel (%p191) target = $region32
      $region31: #{_forward.6} parent=5 // pred_region
        %s195 = ssub.s32 %s14, 1
        %p196 = scmp.lt.s32.totalorder %s23, 7
        %s197 = scalar_select %p196, %s23, 7
        %p198 = scmp.lt.s32.totalorder %s24, 0
        %s199 = scalar_select %p198, %s24, 0
        %s200 = smul.addr %s199, 2
        %s201 = smul.addr %s197, 4
        %s202 = sadd.s32 %s200, %s201
        %s203 = smul.addr %s202, 2
        %s204 = scalar_lea.vmem %s0, %s203
        %p205 = pneg %p54
        %p206 = pneg %p51
        %p207 = pneg %p75
        %p208 = pneg %p72
        %p209 = pneg %p96
        %p210 = pneg %p93
        %p211 = pneg %p124
        %p212 = pneg %p121
        %p213 = scmp.lt.s32.totalorder %s23, 7
        %s214 = scalar_select %p213, %s23, 7
        %p215 = scmp.lt.s32.totalorder %s24, 0
        %s216 = scalar_select %p215, %s24, 0
        %s217 = smul.addr %s216, 2
        %s218 = smul.addr %s214, 2
        %s219 = sadd.s32 %s217, %s218
        %s220 = smul.addr %s219, 2
        %s221 = scalar_lea.vmem %s3, %s220
        %p222 = pneg %p152
        %p223 = pneg %p149
        %s224 = sand.u32 %s139, 1
        %s225 = scalar_lea.sflag [#allocation3], %s224
        %s226 = sand.u32 %s139, 1
        %s227 = smul.addr %s226, 8
        %s228 = scalar_lea.vmem [#allocation2], %s227
        %p229 = scmp.lt.s32.totalorder %s23, 7
        %s230 = scalar_select %p229, %s23, 7
        %p231 = scmp.lt.s32.totalorder %s24, 0
        %s232 = scalar_select %p231, %s24, 0
        %s233 = smul.addr %s232, 2
        %s234 = smul.addr %s230, 4
        %s235 = sadd.s32 %s233, %s234
        %s236 = smul.addr %s235, 2
        %s237 = scalar_lea.vmem %s0, %s236
        %p238 = scmp.lt.s32.totalorder %s23, 7
        %s239 = scalar_select %p238, %s23, 7
        %p240 = scmp.lt.s32.totalorder %s24, 0
        %s241 = scalar_select %p240, %s24, 0
        %s242 = smul.addr %s241, 2
        %s243 = smul.addr %s239, 2
        %s244 = sadd.s32 %s242, %s243
        %s245 = smul.addr %s244, 2
        %s246 = scalar_lea.vmem %s3, %s245
        %v247 = vld [vmem:[%s237] sm:$0xf]
        %v248 = vld [vmem:[%s1] sm:$0xff]
        %v249 = vld [vmem:[%s1 + $0x8] sm:$0xff]
        %v250 = vld [vmem:[%s1 + $0x10] sm:$0xff]
        %v251 = vld [vmem:[%s1 + $0x18] sm:$0xff]
        %v252 = vld [vmem:[%s1 + $0x20] sm:$0xff]
        %v253 = vld [vmem:[%s1 + $0x28] sm:$0xff]
        %v254 = vld [vmem:[%s1 + $0x30] sm:$0xff]
        %v255 = vld [vmem:[%s1 + $0x38] sm:$0xff]
        %v256 = vld [vmem:[%s1 + $0x40] sm:$0xff]
        %v257 = vld [vmem:[%s1 + $0x48] sm:$0xff]
        %v258 = vld [vmem:[%s1 + $0x50] sm:$0xff]
        %v259 = vld [vmem:[%s1 + $0x58] sm:$0xff]
        %v260 = vld [vmem:[%s1 + $0x60] sm:$0xff]
        %v261 = vld [vmem:[%s1 + $0x68] sm:$0xff]
        %v262 = vld [vmem:[%s1 + $0x70] sm:$0xff]
        %v263 = vld [vmem:[%s1 + $0x78] sm:$0xff]
        %v264 = vld [vmem:[%s1 + $0x80] sm:$0xff]
        %v265 = vld [vmem:[%s1 + $0x88] sm:$0xff]
        %v266 = vld [vmem:[%s1 + $0x90] sm:$0xff]
        %v267 = vld [vmem:[%s1 + $0x98] sm:$0xff]
        %v268 = vld [vmem:[%s1 + $0xa0] sm:$0xff]
        %v269 = vld [vmem:[%s1 + $0xa8] sm:$0xff]
        %v270 = vld [vmem:[%s1 + $0xb0] sm:$0xff]
        %v271 = vld [vmem:[%s1 + $0xb8] sm:$0xff]
        %v272 = vld [vmem:[%s1 + $0xc0] sm:$0xff]
        %v273 = vld [vmem:[%s1 + $0xc8] sm:$0xff]
        %v274 = vld [vmem:[%s1 + $0xd0] sm:$0xff]
        %v275 = vld [vmem:[%s1 + $0xd8] sm:$0xff]
        %v276 = vld [vmem:[%s1 + $0xe0] sm:$0xff]
        %v277 = vld [vmem:[%s1 + $0xe8] sm:$0xff]
        %v278 = vld [vmem:[%s1 + $0xf0] sm:$0xff]
        %v279 = vld [vmem:[%s1 + $0xf8] sm:$0xff]
        %s280 = scalar_lea.vmem %s237, 4
        %v281 = vld [vmem:[%s280] sm:$0xf]
        %s282 = scalar_lea.vmem %s1, 256
        %v283 = vld [vmem:[%s282] sm:$0xff]
        %v284 = vld [vmem:[%s282 + $0x8] sm:$0xff]
        %v285 = vld [vmem:[%s282 + $0x10] sm:$0xff]
        %v286 = vld [vmem:[%s282 + $0x18] sm:$0xff]
        %v287 = vld [vmem:[%s282 + $0x20] sm:$0xff]
        %v288 = vld [vmem:[%s282 + $0x28] sm:$0xff]
        %v289 = vld [vmem:[%s282 + $0x30] sm:$0xff]
        %v290 = vld [vmem:[%s282 + $0x38] sm:$0xff]
        %v291 = vld [vmem:[%s282 + $0x40] sm:$0xff]
        %v292 = vld [vmem:[%s282 + $0x48] sm:$0xff]
        %v293 = vld [vmem:[%s282 + $0x50] sm:$0xff]
        %v294 = vld [vmem:[%s282 + $0x58] sm:$0xff]
        %v295 = vld [vmem:[%s282 + $0x60] sm:$0xff]
        %v296 = vld [vmem:[%s282 + $0x68] sm:$0xff]
        %v297 = vld [vmem:[%s282 + $0x70] sm:$0xff]
        %v298 = vld [vmem:[%s282 + $0x78] sm:$0xff]
        %v299 = vld [vmem:[%s282 + $0x80] sm:$0xff]
        %v300 = vld [vmem:[%s282 + $0x88] sm:$0xff]
        %v301 = vld [vmem:[%s282 + $0x90] sm:$0xff]
        %v302 = vld [vmem:[%s282 + $0x98] sm:$0xff]
        %v303 = vld [vmem:[%s282 + $0xa0] sm:$0xff]
        %v304 = vld [vmem:[%s282 + $0xa8] sm:$0xff]
        %v305 = vld [vmem:[%s282 + $0xb0] sm:$0xff]
        %v306 = vld [vmem:[%s282 + $0xb8] sm:$0xff]
        %v307 = vld [vmem:[%s282 + $0xc0] sm:$0xff]
        %v308 = vld [vmem:[%s282 + $0xc8] sm:$0xff]
        %v309 = vld [vmem:[%s282 + $0xd0] sm:$0xff]
        %v310 = vld [vmem:[%s282 + $0xd8] sm:$0xff]
        %v311 = vld [vmem:[%s282 + $0xe0] sm:$0xff]
        %v312 = vld [vmem:[%s282 + $0xe8] sm:$0xff]
        %v313 = vld [vmem:[%s282 + $0xf0] sm:$0xff]
        %v314 = vld [vmem:[%s282 + $0xf8] sm:$0xff]
        %v317 = vunpack.c.l.s4 1983009808
        %v318 = vunpack.c.0.s8 %v317
        %v319 = vlaneseq
        %v320 = vshrl.u32 %v319, 7
        %v321 = vsub.s32 %v318, %v320
        %v322 = vrot.slane %v281, %v321
        %v323 = vcombine.high %v322, %v322
        %v358 = vunpack.c.l.b16 %v283
        %v359 = vunpack.c.h.b16 %v283
        %v360 = vunpack.c.l.b16 %v284
        %v361 = vunpack.c.h.b16 %v284
        %v362 = vunpack.c.l.b16 %v285
        %v363 = vunpack.c.h.b16 %v285
        %v364 = vunpack.c.l.b16 %v286
        %v365 = vunpack.c.h.b16 %v286
        %v366 = vunpack.c.l.b16 %v287
        %v367 = vunpack.c.h.b16 %v287
        %v368 = vunpack.c.l.b16 %v288
        %v369 = vunpack.c.h.b16 %v288
        %v370 = vunpack.c.l.b16 %v289
        %v371 = vunpack.c.h.b16 %v289
        %v372 = vunpack.c.l.b16 %v290
        %v373 = vunpack.c.h.b16 %v290
        %v374 = vunpack.c.l.b16 %v291
        %v375 = vunpack.c.h.b16 %v291
        %v376 = vunpack.c.l.b16 %v292
        %v377 = vunpack.c.h.b16 %v292
        %v378 = vunpack.c.l.b16 %v293
        %v379 = vunpack.c.h.b16 %v293
        %v380 = vunpack.c.l.b16 %v294
        %v381 = vunpack.c.h.b16 %v294
        %v382 = vunpack.c.l.b16 %v295
        %v383 = vunpack.c.h.b16 %v295
        %v384 = vunpack.c.l.b16 %v296
        %v385 = vunpack.c.h.b16 %v296
        %v386 = vunpack.c.l.b16 %v297
        %v387 = vunpack.c.h.b16 %v297
        %v388 = vunpack.c.l.b16 %v298
        %v389 = vunpack.c.h.b16 %v298
        %v390 = vunpack.c.l.b16 %v299
        %v391 = vunpack.c.h.b16 %v299
        %v392 = vunpack.c.l.b16 %v300
        %v393 = vunpack.c.h.b16 %v300
        %v394 = vunpack.c.l.b16 %v301
        %v395 = vunpack.c.h.b16 %v301
        %v396 = vunpack.c.l.b16 %v302
        %v397 = vunpack.c.h.b16 %v302
        %v398 = vunpack.c.l.b16 %v303
        %v399 = vunpack.c.h.b16 %v303
        %v400 = vunpack.c.l.b16 %v304
        %v401 = vunpack.c.h.b16 %v304
        %v402 = vunpack.c.l.b16 %v305
        %v403 = vunpack.c.h.b16 %v305
        %v404 = vunpack.c.l.b16 %v306
        %v405 = vunpack.c.h.b16 %v306
        %v406 = vunpack.c.l.b16 %v307
        %v407 = vunpack.c.h.b16 %v307
        %v408 = vunpack.c.l.b16 %v308
        %v409 = vunpack.c.h.b16 %v308
        %v410 = vunpack.c.l.b16 %v309
        %v411 = vunpack.c.h.b16 %v309
        %v412 = vunpack.c.l.b16 %v310
        %v413 = vunpack.c.h.b16 %v310
        %v414 = vunpack.c.l.b16 %v311
        %v415 = vunpack.c.h.b16 %v311
        %v416 = vunpack.c.l.b16 %v312
        %v417 = vunpack.c.h.b16 %v312
        %v418 = vunpack.c.l.b16 %v313
        %v419 = vunpack.c.h.b16 %v313
        %v420 = vunpack.c.l.b16 %v314
        %v421 = vunpack.c.h.b16 %v314
        %v422 = vpack.c.b16 %v360, %v358
        %v423 = vpack.c.b16 %v361, %v359
        %v424 = vpack.c.b16 %v364, %v362
        %v425 = vpack.c.b16 %v365, %v363
        %v426 = vpack.c.b16 %v368, %v366
        %v427 = vpack.c.b16 %v369, %v367
        %v428 = vpack.c.b16 %v372, %v370
        %v429 = vpack.c.b16 %v373, %v371
        %v430 = vpack.c.b16 %v376, %v374
        %v431 = vpack.c.b16 %v377, %v375
        %v432 = vpack.c.b16 %v380, %v378
        %v433 = vpack.c.b16 %v381, %v379
        %v434 = vpack.c.b16 %v384, %v382
        %v435 = vpack.c.b16 %v385, %v383
        %v436 = vpack.c.b16 %v388, %v386
        %v437 = vpack.c.b16 %v389, %v387
        %v438 = vpack.c.b16 %v392, %v390
        %v439 = vpack.c.b16 %v393, %v391
        %v440 = vpack.c.b16 %v396, %v394
        %v441 = vpack.c.b16 %v397, %v395
        %v442 = vpack.c.b16 %v400, %v398
        %v443 = vpack.c.b16 %v401, %v399
        %v444 = vpack.c.b16 %v404, %v402
        %v445 = vpack.c.b16 %v405, %v403
        %v446 = vpack.c.b16 %v408, %v406
        %v447 = vpack.c.b16 %v409, %v407
        %v448 = vpack.c.b16 %v412, %v410
        %v449 = vpack.c.b16 %v413, %v411
        %v450 = vpack.c.b16 %v416, %v414
        %v451 = vpack.c.b16 %v417, %v415
        %v452 = vpack.c.b16 %v420, %v418
        %v453 = vpack.c.b16 %v421, %v419
        %486 = vmatprep.subr.bf16.mxu0 %v423
        %487 = vmatpush1.bf16.msra.mxu0 %v422
        %488 = vmatprep.subr.bf16.mxu0 %v425
        %489 = vmatpush1.bf16.msra.mxu0 %v424
        %490 = vmatprep.subr.bf16.mxu0 %v427
        %491 = vmatpush1.bf16.msra.mxu0 %v426
        %492 = vmatprep.subr.bf16.mxu0 %v429
        %493 = vmatpush1.bf16.msra.mxu0 %v428
        %494 = vmatprep.subr.bf16.mxu0 %v431
        %495 = vmatpush1.bf16.msra.mxu0 %v430
        %496 = vmatprep.subr.bf16.mxu0 %v433
        %497 = vmatpush1.bf16.msra.mxu0 %v432
        %498 = vmatprep.subr.bf16.mxu0 %v435
        %499 = vmatpush1.bf16.msra.mxu0 %v434
        %500 = vmatprep.subr.bf16.mxu0 %v437
        %501 = vmatpush1.bf16.msra.mxu0 %v436
        %502 = vmatprep.subr.bf16.mxu0 %v439
        %503 = vmatpush1.bf16.msra.mxu0 %v438
        %504 = vmatprep.subr.bf16.mxu0 %v441
        %505 = vmatpush1.bf16.msra.mxu0 %v440
        %506 = vmatprep.subr.bf16.mxu0 %v443
        %507 = vmatpush1.bf16.msra.mxu0 %v442
        %508 = vmatprep.subr.bf16.mxu0 %v445
        %509 = vmatpush1.bf16.msra.mxu0 %v444
        %510 = vmatprep.subr.bf16.mxu0 %v447
        %511 = vmatpush1.bf16.msra.mxu0 %v446
        %512 = vmatprep.subr.bf16.mxu0 %v449
        %513 = vmatpush1.bf16.msra.mxu0 %v448
        %514 = vmatprep.subr.bf16.mxu0 %v451
        %515 = vmatpush1.bf16.msra.mxu0 %v450
        %516 = vmatprep.subr.bf16.mxu0 %v453
        %517 = vmatpush1.bf16.msra.mxu0 %v452
        %518 = vmatprep.mubr.bf16.mxu0 %v323
        %519 = vmatmul.mubr.bf16.gmra.mrb[0].mxu0 %v322
        %v520 = vpop.f32.mrb[0].mxu0
        %v521 = vadd.f32 0.0, %v520
        %v522 = vpop.f32.mrb[0].mxu0
        %v523 = vadd.f32 0.0, %v522
        %v524 = vpop.f32.mrb[0].mxu0
        %v525 = vpop.f32.mrb[0].mxu0
        %526 = vdwg.mxu0
        %v529 = vunpack.c.l.s4 1983009808
        %v530 = vunpack.c.0.s8 %v529
        %v531 = vlaneseq
        %v532 = vshrl.u32 %v531, 7
        %v533 = vsub.s32 %v530, %v532
        %v534 = vrot.slane %v247, %v533
        %v535 = vcombine.high %v534, %v534
        %v570 = vunpack.c.l.b16 %v248
        %v571 = vunpack.c.h.b16 %v248
        %v572 = vunpack.c.l.b16 %v249
        %v573 = vunpack.c.h.b16 %v249
        %v574 = vunpack.c.l.b16 %v250
        %v575 = vunpack.c.h.b16 %v250
        %v576 = vunpack.c.l.b16 %v251
        %v577 = vunpack.c.h.b16 %v251
        %v578 = vunpack.c.l.b16 %v252
        %v579 = vunpack.c.h.b16 %v252
        %v580 = vunpack.c.l.b16 %v253
        %v581 = vunpack.c.h.b16 %v253
        %v582 = vunpack.c.l.b16 %v254
        %v583 = vunpack.c.h.b16 %v254
        %v584 = vunpack.c.l.b16 %v255
        %v585 = vunpack.c.h.b16 %v255
        %v586 = vunpack.c.l.b16 %v256
        %v587 = vunpack.c.h.b16 %v256
        %v588 = vunpack.c.l.b16 %v257
        %v589 = vunpack.c.h.b16 %v257
        %v590 = vunpack.c.l.b16 %v258
        %v591 = vunpack.c.h.b16 %v258
        %v592 = vunpack.c.l.b16 %v259
        %v593 = vunpack.c.h.b16 %v259
        %v594 = vunpack.c.l.b16 %v260
        %v595 = vunpack.c.h.b16 %v260
        %v596 = vunpack.c.l.b16 %v261
        %v597 = vunpack.c.h.b16 %v261
        %v598 = vunpack.c.l.b16 %v262
        %v599 = vunpack.c.h.b16 %v262
        %v600 = vunpack.c.l.b16 %v263
        %v601 = vunpack.c.h.b16 %v263
        %v602 = vunpack.c.l.b16 %v264
        %v603 = vunpack.c.h.b16 %v264
        %v604 = vunpack.c.l.b16 %v265
        %v605 = vunpack.c.h.b16 %v265
        %v606 = vunpack.c.l.b16 %v266
        %v607 = vunpack.c.h.b16 %v266
        %v608 = vunpack.c.l.b16 %v267
        %v609 = vunpack.c.h.b16 %v267
        %v610 = vunpack.c.l.b16 %v268
        %v611 = vunpack.c.h.b16 %v268
        %v612 = vunpack.c.l.b16 %v269
        %v613 = vunpack.c.h.b16 %v269
        %v614 = vunpack.c.l.b16 %v270
        %v615 = vunpack.c.h.b16 %v270
        %v616 = vunpack.c.l.b16 %v271
        %v617 = vunpack.c.h.b16 %v271
        %v618 = vunpack.c.l.b16 %v272
        %v619 = vunpack.c.h.b16 %v272
        %v620 = vunpack.c.l.b16 %v273
        %v621 = vunpack.c.h.b16 %v273
        %v622 = vunpack.c.l.b16 %v274
        %v623 = vunpack.c.h.b16 %v274
        %v624 = vunpack.c.l.b16 %v275
        %v625 = vunpack.c.h.b16 %v275
        %v626 = vunpack.c.l.b16 %v276
        %v627 = vunpack.c.h.b16 %v276
        %v628 = vunpack.c.l.b16 %v277
        %v629 = vunpack.c.h.b16 %v277
        %v630 = vunpack.c.l.b16 %v278
        %v631 = vunpack.c.h.b16 %v278
        %v632 = vunpack.c.l.b16 %v279
        %v633 = vunpack.c.h.b16 %v279
        %v634 = vpack.c.b16 %v572, %v570
        %v635 = vpack.c.b16 %v573, %v571
        %v636 = vpack.c.b16 %v576, %v574
        %v637 = vpack.c.b16 %v577, %v575
        %v638 = vpack.c.b16 %v580, %v578
        %v639 = vpack.c.b16 %v581, %v579
        %v640 = vpack.c.b16 %v584, %v582
        %v641 = vpack.c.b16 %v585, %v583
        %v642 = vpack.c.b16 %v588, %v586
        %v643 = vpack.c.b16 %v589, %v587
        %v644 = vpack.c.b16 %v592, %v590
        %v645 = vpack.c.b16 %v593, %v591
        %v646 = vpack.c.b16 %v596, %v594
        %v647 = vpack.c.b16 %v597, %v595
        %v648 = vpack.c.b16 %v600, %v598
        %v649 = vpack.c.b16 %v601, %v599
        %v650 = vpack.c.b16 %v604, %v602
        %v651 = vpack.c.b16 %v605, %v603
        %v652 = vpack.c.b16 %v608, %v606
        %v653 = vpack.c.b16 %v609, %v607
        %v654 = vpack.c.b16 %v612, %v610
        %v655 = vpack.c.b16 %v613, %v611
        %v656 = vpack.c.b16 %v616, %v614
        %v657 = vpack.c.b16 %v617, %v615
        %v658 = vpack.c.b16 %v620, %v618
        %v659 = vpack.c.b16 %v621, %v619
        %v660 = vpack.c.b16 %v624, %v622
        %v661 = vpack.c.b16 %v625, %v623
        %v662 = vpack.c.b16 %v628, %v626
        %v663 = vpack.c.b16 %v629, %v627
        %v664 = vpack.c.b16 %v632, %v630
        %v665 = vpack.c.b16 %v633, %v631
        %698 = vmatprep.subr.bf16.mxu0 %v635
        %699 = vmatpush1.bf16.msra.mxu0 %v634
        %700 = vmatprep.subr.bf16.mxu0 %v637
        %701 = vmatpush1.bf16.msra.mxu0 %v636
        %702 = vmatprep.subr.bf16.mxu0 %v639
        %703 = vmatpush1.bf16.msra.mxu0 %v638
        %704 = vmatprep.subr.bf16.mxu0 %v641
        %705 = vmatpush1.bf16.msra.mxu0 %v640
        %706 = vmatprep.subr.bf16.mxu0 %v643
        %707 = vmatpush1.bf16.msra.mxu0 %v642
        %708 = vmatprep.subr.bf16.mxu0 %v645
        %709 = vmatpush1.bf16.msra.mxu0 %v644
        %710 = vmatprep.subr.bf16.mxu0 %v647
        %711 = vmatpush1.bf16.msra.mxu0 %v646
        %712 = vmatprep.subr.bf16.mxu0 %v649
        %713 = vmatpush1.bf16.msra.mxu0 %v648
        %714 = vmatprep.subr.bf16.mxu0 %v651
        %715 = vmatpush1.bf16.msra.mxu0 %v650
        %716 = vmatprep.subr.bf16.mxu0 %v653
        %717 = vmatpush1.bf16.msra.mxu0 %v652
        %718 = vmatprep.subr.bf16.mxu0 %v655
        %719 = vmatpush1.bf16.msra.mxu0 %v654
        %720 = vmatprep.subr.bf16.mxu0 %v657
        %721 = vmatpush1.bf16.msra.mxu0 %v656
        %722 = vmatprep.subr.bf16.mxu0 %v659
        %723 = vmatpush1.bf16.msra.mxu0 %v658
        %724 = vmatprep.subr.bf16.mxu0 %v661
        %725 = vmatpush1.bf16.msra.mxu0 %v660
        %726 = vmatprep.subr.bf16.mxu0 %v663
        %727 = vmatpush1.bf16.msra.mxu0 %v662
        %728 = vmatprep.subr.bf16.mxu0 %v665
        %729 = vmatpush1.bf16.msra.mxu0 %v664
        %730 = vmatprep.mubr.bf16.mxu0 %v535
        %731 = vmatmul.mubr.bf16.gmra.mrb[0].mxu0 %v534
        %v732 = vpop.f32.mrb[0].mxu0
        %v733 = vadd.f32 %v521, %v732
        %v734 = vpop.f32.mrb[0].mxu0
        %v735 = vadd.f32 %v523, %v734
        %v736 = vpop.f32.mrb[0].mxu0
        %v737 = vpop.f32.mrb[0].mxu0
        %738 = vdwg.mxu0
        %v739 = vld [vmem:[%s2] sm:$0x3]
        %v741 = vlaneseq
        %v742 = vshrl.u32 %v741, 7
        %v743 = vsub.s32 0, %v742
        %v744 = vrot.slane %v739, %v743
        %v745 = vlaneseq
        %v746 = vshrl.u32 %v745, 7
        %v747 = vsub.s32 1, %v746
        %v748 = vrot.slane %v739, %v747
        %v751 = vadd.f32 %v733, %v744
        %v752 = vadd.f32 %v735, %v748
        %v753 = vmax.f32 %v751, 0.0
        %v754 = vmax.f32 %v752, 0.0
        %v755 = vpack.c.bf16 %v753, %v753
        %v756 = vpack.c.bf16 %v754, %v754
        %v759 = vcombine.low %v755, %v756
        %v761 = vunpack.c.l.s4 1983009808
        %v762 = vunpack.c.0.s8 %v761
        %v763 = vlaneseq
        %v764 = vshrl.u32 %v763, 7
        %v765 = vsub.s32 %v762, %v764
        %v766 = vrot.slane %v759, %v765
        %768 = vst [vmem:[%s246] sm:$0xf] %v766
        %v771 = vcombine.low %v753, %v754
        %773 = vst [vmem:[%s228] sm:$0xff] %v771
        %p774 = scmp.lt.s32.totalorder %s23, 7
        %s775 = scalar_select %p774, %s23, 7
        %p776 = scmp.lt.s32.totalorder %s24, 0
        %s777 = scalar_select %p776, %s24, 0
        %s778 = smul.addr %s777, 2
        %s779 = smul.addr %s775, 2
        %s780 = sadd.s32 %s778, %s779
        %s781 = smul.addr %s780, 2
        %s782 = scalar_lea.vmem %s3, %s781
        %s783 = sand.u32 %s139, 1
        %s784 = scalar_lea.sflag [#allocation3], %s783
        %s785 = sand.u32 %s139, 1
        %s786 = smul.addr %s785, 8
        %s787 = scalar_lea.vmem [#allocation2], %s786
        // Predicated region
        $region33: #{_forward.6} parent=31 // pred_check
          %p788 = pneg %p121
        $region34: #{_forward.6} parent=31 // pred_check_branch
          %790 = sbr.rel (%p788) target = $region36
        $region35: #{_forward.6} parent=31 // pred_region
          _
        $region36: #{_forward.6} parent=31 // pred_fallthru
          _
        // Predicated region
        $region37: #{_forward.6} parent=31 // pred_check
          %p791 = pneg %p149
        $region38: #{_forward.6} parent=31 // pred_check_branch
          %793 = sbr.rel (%p791) target = $region40
        $region39: #{_forward.6} parent=31 // pred_region
          %s795 = ssub.s32 128, 128
          %796 = vsyncadd %s784, %s795
          %s797 = smul.addr %s24, 2
          %s798 = smul.addr %s23, 2
          %s799 = sadd.s32 %s797, %s798
          %s800 = smul.addr %s799, 64
          %s801 = scalar_lea.hbm %s4, %s800
          %s803 = sshll.u32 %s787, 4
          %s804 = int_to_ptr.vmem [resolvable:$true] %s803
          %806 = dma.vmem_to_hbm [thread:$0]  %s804, 128, %s801, %s784
        $region40: #{_forward.6} parent=31 // pred_fallthru
          _
      $region32: #{_forward.6} parent=5 // pred_fallthru
        _
      %p807 = scmp.le.s32.totalorder 2, %s14
      // Predicated region
      $region41: #{_forward.6} parent=5 // pred_check
        %p808 = pneg %p807
      $region42: #{_forward.6} parent=5 // pred_check_branch
        %810 = sbr.rel (%p808) target = $region44
      $region43: #{_forward.6} parent=5 // pred_region
        %s811 = ssub.s32 %s14, 2
        // Predicated region
        $region45: #{_forward.6} parent=43 // pred_check
          %p812 = pneg %p127
        $region46: #{_forward.6} parent=43 // pred_check_branch
          %814 = sbr.rel (%p812) target = $region48
        $region47: #{_forward.6} parent=43 // pred_region
          %p815 = scmp.lt.s32.totalorder %s25, 7
          %s816 = scalar_select %p815, %s25, 7
          %p817 = scmp.lt.s32.totalorder %s26, 0
          %s818 = scalar_select %p817, %s26, 0
          %s819 = smul.addr %s818, 2
          %s820 = smul.addr %s816, 2
          %s821 = sadd.s32 %s819, %s820
          %s822 = smul.addr %s821, 2
          %s823 = scalar_lea.vmem %s3, %s822
        $region48: #{_forward.6} parent=43 // pred_fallthru
          _
        // Predicated region
        $region49: #{_forward.6} parent=43 // pred_check
          %p824 = pneg %p155
        $region50: #{_forward.6} parent=43 // pred_check_branch
          %826 = sbr.rel (%p824) target = $region52
        $region51: #{_forward.6} parent=43 // pred_region
          %s827 = sand.u32 %s140, 1
          %s828 = scalar_lea.sflag [#allocation3], %s827
          %s829 = sand.u32 %s140, 1
          %s830 = smul.addr %s829, 8
          %s831 = scalar_lea.vmem [#allocation2], %s830
          %832 = dma.done %s828, 128
        $region52: #{_forward.6} parent=43 // pred_fallthru
          _
      $region44: #{_forward.6} parent=5 // pred_fallthru
        _
    $region6: #{_forward.6} parent=1 // loop_footer
      %s18 = sadd.s32 1, %s14
    $region7: #{_forward.6} parent=1 // loop_footer_branch
      %13 = sbr.rel target = $region3
    $region8: #{_forward.6} parent=1 // loop_exit
      _
    %833 = vsyncpa [#allocation3], 1
    %s834 = scalar_lea.sflag [#allocation3], 1
    %835 = vsyncpa %s834, 1

// kernel: _forward.7
$region0: #{_forward.7}
  #allocation0 [shape = 'u32[]', space=smem, size = 0x4, offset = 0x4, fixed_abs, tag = 'smem constant byte address 0x4 - core index']
  #allocation1 [shape = 'u32[144,128]{1,0:T(1,128)}', space=vmem, size = 0x12000, scoped, tag = 'internal scratch']
  %s0 = inlined_call_operand.vmem [shape: bf16[4,2,2,512], index: 0, kind: input, shape index: {}]
  %s1 = inlined_call_operand.vmem [shape: bf16[2,512,512], index: 1, kind: input, shape index: {}]
  %s2 = inlined_call_operand.vmem [shape: f32[1,512], index: 2, kind: input, shape index: {}]
  %s3 = inlined_call_operand.hbm [shape: f32[4,2,512], index: 3, kind: output, shape index: {}]
  %s4 = sld [smem:[#allocation0]]
  $region45: #{_forward.7} parent=0
    _
  %s6 = ssub.s32 1, %s4
  %s7 = scalar_select 0, %s6, %s4
  $region1: #{_forward.7} parent=0
    #allocation2 [shape = 'u8[8192]{0}', space=vmem, size = 0x2000, scoped, tag = 'output window, operand 0']
    #allocation3 [shape = 's32[2]{0}', space=sflag, size = 0x8, scoped, tag = 'scoped memory for _forward.7']
    %8 = vsyncpa [#allocation3], 0
    %s9 = scalar_lea.sflag [#allocation3], 1
    %10 = vsyncpa %s9, 0
    loop: start=0, step=1, limit=6
    $region2: #{_forward.7} parent=1 // loop_pre_header
      _
    $region3: #{_forward.7} parent=1 // loop_header
      %s12 = sphi 0, %s16
      %p13 = scmp.ge.s32.totalorder %s12, 6
      %s19 = sphi 0, %s31
      %s20 = sphi 0, %s27
      %s21 = sphi 0, %s19
      %s22 = sphi 0, %s20
      %s23 = sphi 0, %s21
      %s24 = sphi 0, %s22
      %s36 = sphi 0, %s38
      %s39 = sphi 0, %s36
      %s40 = sphi 0, %s39
      %s56 = sphi 0, %s40
      %s60 = sphi 0, %s60
      %s62 = sphi 0, %s60
      %s63 = sphi 0, %s62
      %s77 = sphi 0, %s63
      %s81 = sphi 0, %s81
      %s83 = sphi 0, %s81
      %s84 = sphi 0, %s83
      %s98 = sphi 0, %s84
      %s106 = sphi 0, %s108
      %s109 = sphi 0, %s106
      %s110 = sphi 0, %s109
      %s126 = sphi 0, %s110
    $region4: #{_forward.7} parent=1 // loop_header_branch
      %15 = sbr.rel (%p13) target = $region8
    $region5: #{_forward.7} parent=1 // loop_body
      %s17 = ssub.s32 %s12, 1
      %s18 = ssub.s32 %s12, 2
      %s25 = sadd.s32 1, %s20
      %p26 = scmp.ge.s32.totalorder %s25, 1
      %s27 = scalar_select %p26, 0, %s25
      %s28 = sadd.s32 1, %s19
      %s29 = scalar_select %p26, %s28, %s19
      %p30 = scmp.ge.s32.totalorder %s29, 4
      %s31 = scalar_select %p30, 0, %s29
      %s32 = ssub.s32 %s19, %s31
      %s33 = ssub.s32 %s20, %s27
      %s34 = sor.u32 %s32, %s33
      %p35 = scmp.eq.s32.totalorder %s34, 0
      %s37 = sadd.s32 %s36, 1
      %s38 = scalar_select %p35, %s36, %s37
      %p41 = pneg %p35
      %p42 = scmp.eq.s32.totalorder %s12, 3
      %p43 = por %p41, %p42
      %p44 = scmp.ne.s32.totalorder %s36, %s39
      %p45 = scmp.eq.s32.totalorder %s12, 0
      %p46 = por %p44, %p45
      %p47 = scmp.ne.s32.totalorder %s36, %s39
      %p48 = scmp.eq.s32.totalorder %s17, 3
      %p49 = por %p47, %p48
      %p50 = scmp.ne.s32.totalorder %s39, %s40
      %p51 = scmp.eq.s32.totalorder %s17, 0
      %p52 = por %p50, %p51
      %p53 = scmp.ne.s32.totalorder %s39, %s40
      %p54 = scmp.eq.s32.totalorder %s18, 3
      %p55 = por %p53, %p54
      %p57 = scmp.ne.s32.totalorder %s40, %s56
      %p58 = scmp.eq.s32.totalorder %s18, 0
      %p59 = por %p57, %p58
      %s61 = sadd.s32 %s60, 1
      %p64 = scmp.eq.s32.totalorder %s12, 3
      %p65 = scmp.ne.s32.totalorder %s60, %s62
      %p66 = scmp.eq.s32.totalorder %s12, 0
      %p67 = por %p65, %p66
      %p68 = scmp.ne.s32.totalorder %s60, %s62
      %p69 = scmp.eq.s32.totalorder %s17, 3
      %p70 = por %p68, %p69
      %p71 = scmp.ne.s32.totalorder %s62, %s63
      %p72 = scmp.eq.s32.totalorder %s17, 0
      %p73 = por %p71, %p72
      %p74 = scmp.ne.s32.totalorder %s62, %s63
      %p75 = scmp.eq.s32.totalorder %s18, 3
      %p76 = por %p74, %p75
      %p78 = scmp.ne.s32.totalorder %s63, %s77
      %p79 = scmp.eq.s32.totalorder %s18, 0
      %p80 = por %p78, %p79
      %s82 = sadd.s32 %s81, 1
      %p85 = scmp.eq.s32.totalorder %s12, 3
      %p86 = scmp.ne.s32.totalorder %s81, %s83
      %p87 = scmp.eq.s32.totalorder %s12, 0
      %p88 = por %p86, %p87
      %p89 = scmp.ne.s32.totalorder %s81, %s83
      %p90 = scmp.eq.s32.totalorder %s17, 3
      %p91 = por %p89, %p90
      %p92 = scmp.ne.s32.totalorder %s83, %s84
      %p93 = scmp.eq.s32.totalorder %s17, 0
      %p94 = por %p92, %p93
      %p95 = scmp.ne.s32.totalorder %s83, %s84
      %p96 = scmp.eq.s32.totalorder %s18, 3
      %p97 = por %p95, %p96
      %p99 = scmp.ne.s32.totalorder %s84, %s98
      %p100 = scmp.eq.s32.totalorder %s18, 0
      %p101 = por %p99, %p100
      %s102 = ssub.s32 %s19, %s31
      %s103 = ssub.s32 %s20, %s27
      %s104 = sor.u32 %s102, %s103
      %p105 = scmp.eq.s32.totalorder %s104, 0
      %s107 = sadd.s32 %s106, 1
      %s108 = scalar_select %p105, %s106, %s107
      %p111 = pneg %p105
      %p112 = scmp.eq.s32.totalorder %s12, 3
      %p113 = por %p111, %p112
      %p114 = scmp.ne.s32.totalorder %s106, %s109
      %p115 = scmp.eq.s32.totalorder %s12, 0
      %p116 = por %p114, %p115
      %p117 = scmp.ne.s32.totalorder %s106, %s109
      %p118 = scmp.eq.s32.totalorder %s17, 3
      %p119 = por %p117, %p118
      %p120 = scmp.ne.s32.totalorder %s109, %s110
      %p121 = scmp.eq.s32.totalorder %s17, 0
      %p122 = por %p120, %p121
      %p123 = scmp.ne.s32.totalorder %s109, %s110
      %p124 = scmp.eq.s32.totalorder %s18, 3
      %p125 = por %p123, %p124
      %p127 = scmp.ne.s32.totalorder %s110, %s126
      %p128 = scmp.eq.s32.totalorder %s18, 0
      %p129 = por %p127, %p128
      %p130 = scmp.le.s32.totalorder 1, %s12
      %p131 = scmp.lt.s32.totalorder %s12, 5
      %p132 = pnand %p130, %p131
      %p133 = pneg %p132
      // Predicated region
      $region9: #{_forward.7} parent=5 // pred_check
        _
      $region10: #{_forward.7} parent=5 // pred_check_branch
        %135 = sbr.rel (%p132) target = $region12
      $region11: #{_forward.7} parent=5 // pred_region
        %s136 = ssub.s32 %s12, 1
        // Predicated region
        $region13: #{_forward.7} parent=11 // pred_check
          %p137 = pneg %p73
        $region14: #{_forward.7} parent=11 // pred_check_branch
          %139 = sbr.rel (%p137) target = $region16
        $region15: #{_forward.7} parent=11 // pred_region
          _
        $region16: #{_forward.7} parent=11 // pred_fallthru
          _
        // Predicated region
        $region17: #{_forward.7} parent=11 // pred_check
          %p140 = pneg %p94
        $region18: #{_forward.7} parent=11 // pred_check_branch
          %142 = sbr.rel (%p140) target = $region20
        $region19: #{_forward.7} parent=11 // pred_region
          _
        $region20: #{_forward.7} parent=11 // pred_fallthru
          _
      $region12: #{_forward.7} parent=5 // pred_fallthru
        _
      %p143 = scmp.lt.s32.totalorder %s12, 4
      // Predicated region
      $region21: #{_forward.7} parent=5 // pred_check
        %p144 = pneg %p143
      $region22: #{_forward.7} parent=5 // pred_check_branch
        %146 = sbr.rel (%p144) target = $region24
      $region23: #{_forward.7} parent=5 // pred_region
        // Predicated region
        $region25: #{_forward.7} parent=23 // pred_check
          %p147 = pneg %p46
        $region26: #{_forward.7} parent=23 // pred_check_branch
          %149 = sbr.rel (%p147) target = $region28
        $region27: #{_forward.7} parent=23 // pred_region
          %p150 = scmp.lt.s32.totalorder %s19, 3
          %s151 = scalar_select %p150, %s19, 3
          %p152 = scmp.lt.s32.totalorder %s20, 0
          %s153 = scalar_select %p152, %s20, 0
          %s154 = smul.addr %s153, 4
          %s155 = smul.addr %s151, 8
          %s156 = sadd.s32 %s154, %s155
          %s157 = scalar_lea.vmem %s0, %s156
        $region28: #{_forward.7} parent=23 // pred_fallthru
          _
      $region24: #{_forward.7} parent=5 // pred_fallthru
        _
      %p158 = scmp.le.s32.totalorder 1, %s12
      %p159 = scmp.lt.s32.totalorder %s12, 5
      %p160 = pnand %p158, %p159
      %p161 = pneg %p160
      // Predicated region
      $region29: #{_forward.7} parent=5 // pred_check
        _
      $region30: #{_forward.7} parent=5 // pred_check_branch
        %163 = sbr.rel (%p160) target = $region32
      $region31: #{_forward.7} parent=5 // pred_region
        %s164 = ssub.s32 %s12, 1
        %p165 = scmp.lt.s32.totalorder %s21, 3
        %s166 = scalar_select %p165, %s21, 3
        %p167 = scmp.lt.s32.totalorder %s22, 0
        %s168 = scalar_select %p167, %s22, 0
        %s169 = smul.addr %s168, 4
        %s170 = smul.addr %s166, 8
        %s171 = sadd.s32 %s169, %s170
        %s172 = scalar_lea.vmem %s0, %s171
        %p173 = pneg %p52
        %p174 = pneg %p49
        %p175 = pneg %p73
        %p176 = pneg %p70
        %p177 = pneg %p94
        %p178 = pneg %p91
        %p179 = pneg %p122
        %p180 = pneg %p119
        %s181 = sand.u32 %s109, 1
        %s182 = scalar_lea.sflag [#allocation3], %s181
        %s183 = sand.u32 %s109, 1
        %s184 = smul.addr %s183, 8
        %s185 = scalar_lea.vmem [#allocation2], %s184
        %p186 = scmp.lt.s32.totalorder %s21, 3
        %s187 = scalar_select %p186, %s21, 3
        %p188 = scmp.lt.s32.totalorder %s22, 0
        %s189 = scalar_select %p188, %s22, 0
        %s190 = smul.addr %s189, 4
        %s191 = smul.addr %s187, 8
        %s192 = sadd.s32 %s190, %s191
        %s193 = scalar_lea.vmem %s0, %s192
        %v194 = vld [vmem:[%s193] sm:$0xf]
        %v195 = vld [vmem:[%s1] sm:$0xff]
        %v196 = vld [vmem:[%s1 + $0x8] sm:$0xff]
        %v197 = vld [vmem:[%s1 + $0x10] sm:$0xff]
        %v198 = vld [vmem:[%s1 + $0x18] sm:$0xff]
        %v199 = vld [vmem:[%s1 + $0x20] sm:$0xff]
        %v200 = vld [vmem:[%s1 + $0x28] sm:$0xff]
        %v201 = vld [vmem:[%s1 + $0x30] sm:$0xff]
        %v202 = vld [vmem:[%s1 + $0x38] sm:$0xff]
        %v203 = vld [vmem:[%s1 + $0x40] sm:$0xff]
        %v204 = vld [vmem:[%s1 + $0x48] sm:$0xff]
        %v205 = vld [vmem:[%s1 + $0x50] sm:$0xff]
        %v206 = vld [vmem:[%s1 + $0x58] sm:$0xff]
        %v207 = vld [vmem:[%s1 + $0x60] sm:$0xff]
        %v208 = vld [vmem:[%s1 + $0x68] sm:$0xff]
        %v209 = vld [vmem:[%s1 + $0x70] sm:$0xff]
        %v210 = vld [vmem:[%s1 + $0x78] sm:$0xff]
        %v211 = vld [vmem:[%s1 + $0x80] sm:$0xff]
        %v212 = vld [vmem:[%s1 + $0x88] sm:$0xff]
        %v213 = vld [vmem:[%s1 + $0x90] sm:$0xff]
        %v214 = vld [vmem:[%s1 + $0x98] sm:$0xff]
        %v215 = vld [vmem:[%s1 + $0xa0] sm:$0xff]
        %v216 = vld [vmem:[%s1 + $0xa8] sm:$0xff]
        %v217 = vld [vmem:[%s1 + $0xb0] sm:$0xff]
        %v218 = vld [vmem:[%s1 + $0xb8] sm:$0xff]
        %v219 = vld [vmem:[%s1 + $0xc0] sm:$0xff]
        %v220 = vld [vmem:[%s1 + $0xc8] sm:$0xff]
        %v221 = vld [vmem:[%s1 + $0xd0] sm:$0xff]
        %v222 = vld [vmem:[%s1 + $0xd8] sm:$0xff]
        %v223 = vld [vmem:[%s1 + $0xe0] sm:$0xff]
        %v224 = vld [vmem:[%s1 + $0xe8] sm:$0xff]
        %v225 = vld [vmem:[%s1 + $0xf0] sm:$0xff]
        %v226 = vld [vmem:[%s1 + $0xf8] sm:$0xff]
        %v227 = vld [vmem:[%s1 + $0x100] sm:$0xff]
        %v228 = vld [vmem:[%s1 + $0x108] sm:$0xff]
        %v229 = vld [vmem:[%s1 + $0x110] sm:$0xff]
        %v230 = vld [vmem:[%s1 + $0x118] sm:$0xff]
        %v231 = vld [vmem:[%s1 + $0x120] sm:$0xff]
        %v232 = vld [vmem:[%s1 + $0x128] sm:$0xff]
        %v233 = vld [vmem:[%s1 + $0x130] sm:$0xff]
        %v234 = vld [vmem:[%s1 + $0x138] sm:$0xff]
        %v235 = vld [vmem:[%s1 + $0x140] sm:$0xff]
        %v236 = vld [vmem:[%s1 + $0x148] sm:$0xff]
        %v237 = vld [vmem:[%s1 + $0x150] sm:$0xff]
        %v238 = vld [vmem:[%s1 + $0x158] sm:$0xff]
        %v239 = vld [vmem:[%s1 + $0x160] sm:$0xff]
        %v240 = vld [vmem:[%s1 + $0x168] sm:$0xff]
        %v241 = vld [vmem:[%s1 + $0x170] sm:$0xff]
        %v242 = vld [vmem:[%s1 + $0x178] sm:$0xff]
        %v243 = vld [vmem:[%s1 + $0x180] sm:$0xff]
        %v244 = vld [vmem:[%s1 + $0x188] sm:$0xff]
        %v245 = vld [vmem:[%s1 + $0x190] sm:$0xff]
        %v246 = vld [vmem:[%s1 + $0x198] sm:$0xff]
        %v247 = vld [vmem:[%s1 + $0x1a0] sm:$0xff]
        %v248 = vld [vmem:[%s1 + $0x1a8] sm:$0xff]
        %v249 = vld [vmem:[%s1 + $0x1b0] sm:$0xff]
        %v250 = vld [vmem:[%s1 + $0x1b8] sm:$0xff]
        %v251 = vld [vmem:[%s1 + $0x1c0] sm:$0xff]
        %v252 = vld [vmem:[%s1 + $0x1c8] sm:$0xff]
        %v253 = vld [vmem:[%s1 + $0x1d0] sm:$0xff]
        %v254 = vld [vmem:[%s1 + $0x1d8] sm:$0xff]
        %v255 = vld [vmem:[%s1 + $0x1e0] sm:$0xff]
        %v256 = vld [vmem:[%s1 + $0x1e8] sm:$0xff]
        %v257 = vld [vmem:[%s1 + $0x1f0] sm:$0xff]
        %v258 = vld [vmem:[%s1 + $0x1f8] sm:$0xff]
        %v259 = vld [vmem:[%s1 + $0x200] sm:$0xff]
        %v260 = vld [vmem:[%s1 + $0x208] sm:$0xff]
        %v261 = vld [vmem:[%s1 + $0x210] sm:$0xff]
        %v262 = vld [vmem:[%s1 + $0x218] sm:$0xff]
        %v263 = vld [vmem:[%s1 + $0x220] sm:$0xff]
        %v264 = vld [vmem:[%s1 + $0x228] sm:$0xff]
        %v265 = vld [vmem:[%s1 + $0x230] sm:$0xff]
        %v266 = vld [vmem:[%s1 + $0x238] sm:$0xff]
        %v267 = vld [vmem:[%s1 + $0x240] sm:$0xff]
        %v268 = vld [vmem:[%s1 + $0x248] sm:$0xff]
        %v269 = vld [vmem:[%s1 + $0x250] sm:$0xff]
        %v270 = vld [vmem:[%s1 + $0x258] sm:$0xff]
        %v271 = vld [vmem:[%s1 + $0x260] sm:$0xff]
        %v272 = vld [vmem:[%s1 + $0x268] sm:$0xff]
        %v273 = vld [vmem:[%s1 + $0x270] sm:$0xff]
        %v274 = vld [vmem:[%s1 + $0x278] sm:$0xff]
        %v275 = vld [vmem:[%s1 + $0x280] sm:$0xff]
        %v276 = vld [vmem:[%s1 + $0x288] sm:$0xff]
        %v277 = vld [vmem:[%s1 + $0x290] sm:$0xff]
        %v278 = vld [vmem:[%s1 + $0x298] sm:$0xff]
        %v279 = vld [vmem:[%s1 + $0x2a0] sm:$0xff]
        %v280 = vld [vmem:[%s1 + $0x2a8] sm:$0xff]
        %v281 = vld [vmem:[%s1 + $0x2b0] sm:$0xff]
        %v282 = vld [vmem:[%s1 + $0x2b8] sm:$0xff]
        %v283 = vld [vmem:[%s1 + $0x2c0] sm:$0xff]
        %v284 = vld [vmem:[%s1 + $0x2c8] sm:$0xff]
        %v285 = vld [vmem:[%s1 + $0x2d0] sm:$0xff]
        %v286 = vld [vmem:[%s1 + $0x2d8] sm:$0xff]
        %v287 = vld [vmem:[%s1 + $0x2e0] sm:$0xff]
        %v288 = vld [vmem:[%s1 + $0x2e8] sm:$0xff]
        %v289 = vld [vmem:[%s1 + $0x2f0] sm:$0xff]
        %v290 = vld [vmem:[%s1 + $0x2f8] sm:$0xff]
        %v291 = vld [vmem:[%s1 + $0x300] sm:$0xff]
        %v292 = vld [vmem:[%s1 + $0x308] sm:$0xff]
        %v293 = vld [vmem:[%s1 + $0x310] sm:$0xff]
        %v294 = vld [vmem:[%s1 + $0x318] sm:$0xff]
        %v295 = vld [vmem:[%s1 + $0x320] sm:$0xff]
        %v296 = vld [vmem:[%s1 + $0x328] sm:$0xff]
        %v297 = vld [vmem:[%s1 + $0x330] sm:$0xff]
        %v298 = vld [vmem:[%s1 + $0x338] sm:$0xff]
        %v299 = vld [vmem:[%s1 + $0x340] sm:$0xff]
        %v300 = vld [vmem:[%s1 + $0x348] sm:$0xff]
        %v301 = vld [vmem:[%s1 + $0x350] sm:$0xff]
        %v302 = vld [vmem:[%s1 + $0x358] sm:$0xff]
        %v303 = vld [vmem:[%s1 + $0x360] sm:$0xff]
        %v304 = vld [vmem:[%s1 + $0x368] sm:$0xff]
        %v305 = vld [vmem:[%s1 + $0x370] sm:$0xff]
        %v306 = vld [vmem:[%s1 + $0x378] sm:$0xff]
        %v307 = vld [vmem:[%s1 + $0x380] sm:$0xff]
        %v308 = vld [vmem:[%s1 + $0x388] sm:$0xff]
        %v309 = vld [vmem:[%s1 + $0x390] sm:$0xff]
        %v310 = vld [vmem:[%s1 + $0x398] sm:$0xff]
        %v311 = vld [vmem:[%s1 + $0x3a0] sm:$0xff]
        %v312 = vld [vmem:[%s1 + $0x3a8] sm:$0xff]
        %v313 = vld [vmem:[%s1 + $0x3b0] sm:$0xff]
        %v314 = vld [vmem:[%s1 + $0x3b8] sm:$0xff]
        %v315 = vld [vmem:[%s1 + $0x3c0] sm:$0xff]
        %v316 = vld [vmem:[%s1 + $0x3c8] sm:$0xff]
        %v317 = vld [vmem:[%s1 + $0x3d0] sm:$0xff]
        %v318 = vld [vmem:[%s1 + $0x3d8] sm:$0xff]
        %v319 = vld [vmem:[%s1 + $0x3e0] sm:$0xff]
        %v320 = vld [vmem:[%s1 + $0x3e8] sm:$0xff]
        %v321 = vld [vmem:[%s1 + $0x3f0] sm:$0xff]
        %v322 = vld [vmem:[%s1 + $0x3f8] sm:$0xff]
        %s323 = scalar_lea.vmem %s193, 4
        %v324 = vld [vmem:[%s323] sm:$0xf]
        %s325 = scalar_lea.vmem %s1, 1024
        %v326 = vld [vmem:[%s325] sm:$0xff]
        %v327 = vld [vmem:[%s325 + $0x8] sm:$0xff]
        %v328 = vld [vmem:[%s325 + $0x10] sm:$0xff]
        %v329 = vld [vmem:[%s325 + $0x18] sm:$0xff]
        %v330 = vld [vmem:[%s325 + $0x20] sm:$0xff]
        %v331 = vld [vmem:[%s325 + $0x28] sm:$0xff]
        %v332 = vld [vmem:[%s325 + $0x30] sm:$0xff]
        %v333 = vld [vmem:[%s325 + $0x38] sm:$0xff]
        %v334 = vld [vmem:[%s325 + $0x40] sm:$0xff]
        %v335 = vld [vmem:[%s325 + $0x48] sm:$0xff]
        %v336 = vld [vmem:[%s325 + $0x50] sm:$0xff]
        %v337 = vld [vmem:[%s325 + $0x58] sm:$0xff]
        %v338 = vld [vmem:[%s325 + $0x60] sm:$0xff]
        %v339 = vld [vmem:[%s325 + $0x68] sm:$0xff]
        %v340 = vld [vmem:[%s325 + $0x70] sm:$0xff]
        %v341 = vld [vmem:[%s325 + $0x78] sm:$0xff]
        %v342 = vld [vmem:[%s325 + $0x80] sm:$0xff]
        %v343 = vld [vmem:[%s325 + $0x88] sm:$0xff]
        %v344 = vld [vmem:[%s325 + $0x90] sm:$0xff]
        %v345 = vld [vmem:[%s325 + $0x98] sm:$0xff]
        %v346 = vld [vmem:[%s325 + $0xa0] sm:$0xff]
        %v347 = vld [vmem:[%s325 + $0xa8] sm:$0xff]
        %v348 = vld [vmem:[%s325 + $0xb0] sm:$0xff]
        %v349 = vld [vmem:[%s325 + $0xb8] sm:$0xff]
        %v350 = vld [vmem:[%s325 + $0xc0] sm:$0xff]
        %v351 = vld [vmem:[%s325 + $0xc8] sm:$0xff]
        %v352 = vld [vmem:[%s325 + $0xd0] sm:$0xff]
        %v353 = vld [vmem:[%s325 + $0xd8] sm:$0xff]
        %v354 = vld [vmem:[%s325 + $0xe0] sm:$0xff]
        %v355 = vld [vmem:[%s325 + $0xe8] sm:$0xff]
        %v356 = vld [vmem:[%s325 + $0xf0] sm:$0xff]
        %v357 = vld [vmem:[%s325 + $0xf8] sm:$0xff]
        %v358 = vld [vmem:[%s325 + $0x100] sm:$0xff]
        %v359 = vld [vmem:[%s325 + $0x108] sm:$0xff]
        %v360 = vld [vmem:[%s325 + $0x110] sm:$0xff]
        %v361 = vld [vmem:[%s325 + $0x118] sm:$0xff]
        %v362 = vld [vmem:[%s325 + $0x120] sm:$0xff]
        %v363 = vld [vmem:[%s325 + $0x128] sm:$0xff]
        %v364 = vld [vmem:[%s325 + $0x130] sm:$0xff]
        %v365 = vld [vmem:[%s325 + $0x138] sm:$0xff]
        %v366 = vld [vmem:[%s325 + $0x140] sm:$0xff]
        %v367 = vld [vmem:[%s325 + $0x148] sm:$0xff]
        %v368 = vld [vmem:[%s325 + $0x150] sm:$0xff]
        %v369 = vld [vmem:[%s325 + $0x158] sm:$0xff]
        %v370 = vld [vmem:[%s325 + $0x160] sm:$0xff]
        %v371 = vld [vmem:[%s325 + $0x168] sm:$0xff]
        %v372 = vld [vmem:[%s325 + $0x170] sm:$0xff]
        %v373 = vld [vmem:[%s325 + $0x178] sm:$0xff]
        %v374 = vld [vmem:[%s325 + $0x180] sm:$0xff]
        %v375 = vld [vmem:[%s325 + $0x188] sm:$0xff]
        %v376 = vld [vmem:[%s325 + $0x190] sm:$0xff]
        %v377 = vld [vmem:[%s325 + $0x198] sm:$0xff]
        %v378 = vld [vmem:[%s325 + $0x1a0] sm:$0xff]
        %v379 = vld [vmem:[%s325 + $0x1a8] sm:$0xff]
        %v380 = vld [vmem:[%s325 + $0x1b0] sm:$0xff]
        %v381 = vld [vmem:[%s325 + $0x1b8] sm:$0xff]
        %v382 = vld [vmem:[%s325 + $0x1c0] sm:$0xff]
        %v383 = vld [vmem:[%s325 + $0x1c8] sm:$0xff]
        %v384 = vld [vmem:[%s325 + $0x1d0] sm:$0xff]
        %v385 = vld [vmem:[%s325 + $0x1d8] sm:$0xff]
        %v386 = vld [vmem:[%s325 + $0x1e0] sm:$0xff]
        %v387 = vld [vmem:[%s325 + $0x1e8] sm:$0xff]
        %v388 = vld [vmem:[%s325 + $0x1f0] sm:$0xff]
        %v389 = vld [vmem:[%s325 + $0x1f8] sm:$0xff]
        %v390 = vld [vmem:[%s325 + $0x200] sm:$0xff]
        %v391 = vld [vmem:[%s325 + $0x208] sm:$0xff]
        %v392 = vld [vmem:[%s325 + $0x210] sm:$0xff]
        %v393 = vld [vmem:[%s325 + $0x218] sm:$0xff]
        %v394 = vld [vmem:[%s325 + $0x220] sm:$0xff]
        %v395 = vld [vmem:[%s325 + $0x228] sm:$0xff]
        %v396 = vld [vmem:[%s325 + $0x230] sm:$0xff]
        %v397 = vld [vmem:[%s325 + $0x238] sm:$0xff]
        %v398 = vld [vmem:[%s325 + $0x240] sm:$0xff]
        %v399 = vld [vmem:[%s325 + $0x248] sm:$0xff]
        %v400 = vld [vmem:[%s325 + $0x250] sm:$0xff]
        %v401 = vld [vmem:[%s325 + $0x258] sm:$0xff]
        %v402 = vld [vmem:[%s325 + $0x260] sm:$0xff]
        %v403 = vld [vmem:[%s325 + $0x268] sm:$0xff]
        %v404 = vld [vmem:[%s325 + $0x270] sm:$0xff]
        %v405 = vld [vmem:[%s325 + $0x278] sm:$0xff]
        %v406 = vld [vmem:[%s325 + $0x280] sm:$0xff]
        %v407 = vld [vmem:[%s325 + $0x288] sm:$0xff]
        %v408 = vld [vmem:[%s325 + $0x290] sm:$0xff]
        %v409 = vld [vmem:[%s325 + $0x298] sm:$0xff]
        %v410 = vld [vmem:[%s325 + $0x2a0] sm:$0xff]
        %v411 = vld [vmem:[%s325 + $0x2a8] sm:$0xff]
        %v412 = vld [vmem:[%s325 + $0x2b0] sm:$0xff]
        %v413 = vld [vmem:[%s325 + $0x2b8] sm:$0xff]
        %v414 = vld [vmem:[%s325 + $0x2c0] sm:$0xff]
        %v415 = vld [vmem:[%s325 + $0x2c8] sm:$0xff]
        %v416 = vld [vmem:[%s325 + $0x2d0] sm:$0xff]
        %v417 = vld [vmem:[%s325 + $0x2d8] sm:$0xff]
        %v418 = vld [vmem:[%s325 + $0x2e0] sm:$0xff]
        %v419 = vld [vmem:[%s325 + $0x2e8] sm:$0xff]
        %v420 = vld [vmem:[%s325 + $0x2f0] sm:$0xff]
        %v421 = vld [vmem:[%s325 + $0x2f8] sm:$0xff]
        %v422 = vld [vmem:[%s325 + $0x300] sm:$0xff]
        %v423 = vld [vmem:[%s325 + $0x308] sm:$0xff]
        %v424 = vld [vmem:[%s325 + $0x310] sm:$0xff]
        %v425 = vld [vmem:[%s325 + $0x318] sm:$0xff]
        %v426 = vld [vmem:[%s325 + $0x320] sm:$0xff]
        %v427 = vld [vmem:[%s325 + $0x328] sm:$0xff]
        %v428 = vld [vmem:[%s325 + $0x330] sm:$0xff]
        %v429 = vld [vmem:[%s325 + $0x338] sm:$0xff]
        %v430 = vld [vmem:[%s325 + $0x340] sm:$0xff]
        %v431 = vld [vmem:[%s325 + $0x348] sm:$0xff]
        %v432 = vld [vmem:[%s325 + $0x350] sm:$0xff]
        %v433 = vld [vmem:[%s325 + $0x358] sm:$0xff]
        %v434 = vld [vmem:[%s325 + $0x360] sm:$0xff]
        %v435 = vld [vmem:[%s325 + $0x368] sm:$0xff]
        %v436 = vld [vmem:[%s325 + $0x370] sm:$0xff]
        %v437 = vld [vmem:[%s325 + $0x378] sm:$0xff]
        %v438 = vld [vmem:[%s325 + $0x380] sm:$0xff]
        %v439 = vld [vmem:[%s325 + $0x388] sm:$0xff]
        %v440 = vld [vmem:[%s325 + $0x390] sm:$0xff]
        %v441 = vld [vmem:[%s325 + $0x398] sm:$0xff]
        %v442 = vld [vmem:[%s325 + $0x3a0] sm:$0xff]
        %v443 = vld [vmem:[%s325 + $0x3a8] sm:$0xff]
        %v444 = vld [vmem:[%s325 + $0x3b0] sm:$0xff]
        %v445 = vld [vmem:[%s325 + $0x3b8] sm:$0xff]
        %v446 = vld [vmem:[%s325 + $0x3c0] sm:$0xff]
        %v447 = vld [vmem:[%s325 + $0x3c8] sm:$0xff]
        %v448 = vld [vmem:[%s325 + $0x3d0] sm:$0xff]
        %v449 = vld [vmem:[%s325 + $0x3d8] sm:$0xff]
        %v450 = vld [vmem:[%s325 + $0x3e0] sm:$0xff]
        %v451 = vld [vmem:[%s325 + $0x3e8] sm:$0xff]
        %v452 = vld [vmem:[%s325 + $0x3f0] sm:$0xff]
        %v453 = vld [vmem:[%s325 + $0x3f8] sm:$0xff]
        %v456 = vunpack.c.l.s4 1966171168
        %v457 = vunpack.c.0.s8 %v456
        %v458 = vlaneseq
        %v459 = vshrl.u32 %v458, 7
        %v460 = vsub.s32 %v457, %v459
        %v461 = vrot.slane %v324, %v460
        %v462 = vcombine.high %v461, %v461
        %v464 = vunpack.c.l.s4 1966171168
        %v465 = vunpack.c.0.s8 %v464
        %v466 = vlaneseq
        %v467 = vshrl.u32 %v466, 7
        %v468 = vsub.s32 %v465, %v467
        %v469 = vrot.slane %v461, %v468
        %v471 = vunpack.c.l.s4 1966171168
        %v472 = vunpack.c.0.s8 %v471
        %v473 = vlaneseq
        %v474 = vshrl.u32 %v473, 7
        %v475 = vsub.s32 %v472, %v474
        %v476 = vrot.slane %v462, %v475
        %v477 = vcombine.high %v469, %v469
        %v478 = vcombine.high %v476, %v476
        %v611 = vunpack.c.l.b16 %v326
        %v612 = vunpack.c.h.b16 %v326
        %v613 = vunpack.c.l.b16 %v327
        %v614 = vunpack.c.h.b16 %v327
        %v615 = vunpack.c.l.b16 %v328
        %v616 = vunpack.c.h.b16 %v328
        %v617 = vunpack.c.l.b16 %v329
        %v618 = vunpack.c.h.b16 %v329
        %v619 = vunpack.c.l.b16 %v330
        %v620 = vunpack.c.h.b16 %v330
        %v621 = vunpack.c.l.b16 %v331
        %v622 = vunpack.c.h.b16 %v331
        %v623 = vunpack.c.l.b16 %v332
        %v624 = vunpack.c.h.b16 %v332
        %v625 = vunpack.c.l.b16 %v333
        %v626 = vunpack.c.h.b16 %v333
        %v627 = vunpack.c.l.b16 %v334
        %v628 = vunpack.c.h.b16 %v334
        %v629 = vunpack.c.l.b16 %v335
        %v630 = vunpack.c.h.b16 %v335
        %v631 = vunpack.c.l.b16 %v336
        %v632 = vunpack.c.h.b16 %v336
        %v633 = vunpack.c.l.b16 %v337
        %v634 = vunpack.c.h.b16 %v337
        %v635 = vunpack.c.l.b16 %v338
        %v636 = vunpack.c.h.b16 %v338
        %v637 = vunpack.c.l.b16 %v339
        %v638 = vunpack.c.h.b16 %v339
        %v639 = vunpack.c.l.b16 %v340
        %v640 = vunpack.c.h.b16 %v340
        %v641 = vunpack.c.l.b16 %v341
        %v642 = vunpack.c.h.b16 %v341
        %v643 = vunpack.c.l.b16 %v342
        %v644 = vunpack.c.h.b16 %v342
        %v645 = vunpack.c.l.b16 %v343
        %v646 = vunpack.c.h.b16 %v343
        %v647 = vunpack.c.l.b16 %v344
        %v648 = vunpack.c.h.b16 %v344
        %v649 = vunpack.c.l.b16 %v345
        %v650 = vunpack.c.h.b16 %v345
        %v651 = vunpack.c.l.b16 %v346
        %v652 = vunpack.c.h.b16 %v346
        %v653 = vunpack.c.l.b16 %v347
        %v654 = vunpack.c.h.b16 %v347
        %v655 = vunpack.c.l.b16 %v348
        %v656 = vunpack.c.h.b16 %v348
        %v657 = vunpack.c.l.b16 %v349
        %v658 = vunpack.c.h.b16 %v349
        %v659 = vunpack.c.l.b16 %v350
        %v660 = vunpack.c.h.b16 %v350
        %v661 = vunpack.c.l.b16 %v351
        %v662 = vunpack.c.h.b16 %v351
        %v663 = vunpack.c.l.b16 %v352
        %v664 = vunpack.c.h.b16 %v352
        %v665 = vunpack.c.l.b16 %v353
        %v666 = vunpack.c.h.b16 %v353
        %v667 = vunpack.c.l.b16 %v354
        %v668 = vunpack.c.h.b16 %v354
        %v669 = vunpack.c.l.b16 %v355
        %v670 = vunpack.c.h.b16 %v355
        %v671 = vunpack.c.l.b16 %v356
        %v672 = vunpack.c.h.b16 %v356
        %v673 = vunpack.c.l.b16 %v357
        %v674 = vunpack.c.h.b16 %v357
        %v675 = vunpack.c.l.b16 %v358
        %v676 = vunpack.c.h.b16 %v358
        %v677 = vunpack.c.l.b16 %v359
        %v678 = vunpack.c.h.b16 %v359
        %v679 = vunpack.c.l.b16 %v360
        %v680 = vunpack.c.h.b16 %v360
        %v681 = vunpack.c.l.b16 %v361
        %v682 = vunpack.c.h.b16 %v361
        %v683 = vunpack.c.l.b16 %v362
        %v684 = vunpack.c.h.b16 %v362
        %v685 = vunpack.c.l.b16 %v363
        %v686 = vunpack.c.h.b16 %v363
        %v687 = vunpack.c.l.b16 %v364
        %v688 = vunpack.c.h.b16 %v364
        %v689 = vunpack.c.l.b16 %v365
        %v690 = vunpack.c.h.b16 %v365
        %v691 = vunpack.c.l.b16 %v366
        %v692 = vunpack.c.h.b16 %v366
        %v693 = vunpack.c.l.b16 %v367
        %v694 = vunpack.c.h.b16 %v367
        %v695 = vunpack.c.l.b16 %v368
        %v696 = vunpack.c.h.b16 %v368
        %v697 = vunpack.c.l.b16 %v369
        %v698 = vunpack.c.h.b16 %v369
        %v699 = vunpack.c.l.b16 %v370
        %v700 = vunpack.c.h.b16 %v370
        %v701 = vunpack.c.l.b16 %v371
        %v702 = vunpack.c.h.b16 %v371
        %v703 = vunpack.c.l.b16 %v372
        %v704 = vunpack.c.h.b16 %v372
        %v705 = vunpack.c.l.b16 %v373
        %v706 = vunpack.c.h.b16 %v373
        %v707 = vunpack.c.l.b16 %v374
        %v708 = vunpack.c.h.b16 %v374
        %v709 = vunpack.c.l.b16 %v375
        %v710 = vunpack.c.h.b16 %v375
        %v711 = vunpack.c.l.b16 %v376
        %v712 = vunpack.c.h.b16 %v376
        %v713 = vunpack.c.l.b16 %v377
        %v714 = vunpack.c.h.b16 %v377
        %v715 = vunpack.c.l.b16 %v378
        %v716 = vunpack.c.h.b16 %v378
        %v717 = vunpack.c.l.b16 %v379
        %v718 = vunpack.c.h.b16 %v379
        %v719 = vunpack.c.l.b16 %v380
        %v720 = vunpack.c.h.b16 %v380
        %v721 = vunpack.c.l.b16 %v381
        %v722 = vunpack.c.h.b16 %v381
        %v723 = vunpack.c.l.b16 %v382
        %v724 = vunpack.c.h.b16 %v382
        %v725 = vunpack.c.l.b16 %v383
        %v726 = vunpack.c.h.b16 %v383
        %v727 = vunpack.c.l.b16 %v384
        %v728 = vunpack.c.h.b16 %v384
        %v729 = vunpack.c.l.b16 %v385
        %v730 = vunpack.c.h.b16 %v385
        %v731 = vunpack.c.l.b16 %v386
        %v732 = vunpack.c.h.b16 %v386
        %v733 = vunpack.c.l.b16 %v387
        %v734 = vunpack.c.h.b16 %v387
        %v735 = vunpack.c.l.b16 %v388
        %v736 = vunpack.c.h.b16 %v388
        %v737 = vunpack.c.l.b16 %v389
        %v738 = vunpack.c.h.b16 %v389
        %v739 = vunpack.c.l.b16 %v390
        %v740 = vunpack.c.h.b16 %v390
        %v741 = vunpack.c.l.b16 %v391
        %v742 = vunpack.c.h.b16 %v391
        %v743 = vunpack.c.l.b16 %v392
        %v744 = vunpack.c.h.b16 %v392
        %v745 = vunpack.c.l.b16 %v393
        %v746 = vunpack.c.h.b16 %v393
        %v747 = vunpack.c.l.b16 %v394
        %v748 = vunpack.c.h.b16 %v394
        %v749 = vunpack.c.l.b16 %v395
        %v750 = vunpack.c.h.b16 %v395
        %v751 = vunpack.c.l.b16 %v396
        %v752 = vunpack.c.h.b16 %v396
        %v753 = vunpack.c.l.b16 %v397
        %v754 = vunpack.c.h.b16 %v397
        %v755 = vunpack.c.l.b16 %v398
        %v756 = vunpack.c.h.b16 %v398
        %v757 = vunpack.c.l.b16 %v399
        %v758 = vunpack.c.h.b16 %v399
        %v759 = vunpack.c.l.b16 %v400
        %v760 = vunpack.c.h.b16 %v400
        %v761 = vunpack.c.l.b16 %v401
        %v762 = vunpack.c.h.b16 %v401
        %v763 = vunpack.c.l.b16 %v402
        %v764 = vunpack.c.h.b16 %v402
        %v765 = vunpack.c.l.b16 %v403
        %v766 = vunpack.c.h.b16 %v403
        %v767 = vunpack.c.l.b16 %v404
        %v768 = vunpack.c.h.b16 %v404
        %v769 = vunpack.c.l.b16 %v405
        %v770 = vunpack.c.h.b16 %v405
        %v771 = vunpack.c.l.b16 %v406
        %v772 = vunpack.c.h.b16 %v406
        %v773 = vunpack.c.l.b16 %v407
        %v774 = vunpack.c.h.b16 %v407
        %v775 = vunpack.c.l.b16 %v408
        %v776 = vunpack.c.h.b16 %v408
        %v777 = vunpack.c.l.b16 %v409
        %v778 = vunpack.c.h.b16 %v409
        %v779 = vunpack.c.l.b16 %v410
        %v780 = vunpack.c.h.b16 %v410
        %v781 = vunpack.c.l.b16 %v411
        %v782 = vunpack.c.h.b16 %v411
        %v783 = vunpack.c.l.b16 %v412
        %v784 = vunpack.c.h.b16 %v412
        %v785 = vunpack.c.l.b16 %v413
        %v786 = vunpack.c.h.b16 %v413
        %v787 = vunpack.c.l.b16 %v414
        %v788 = vunpack.c.h.b16 %v414
        %v789 = vunpack.c.l.b16 %v415
        %v790 = vunpack.c.h.b16 %v415
        %v791 = vunpack.c.l.b16 %v416
        %v792 = vunpack.c.h.b16 %v416
        %v793 = vunpack.c.l.b16 %v417
        %v794 = vunpack.c.h.b16 %v417
        %v795 = vunpack.c.l.b16 %v418
        %v796 = vunpack.c.h.b16 %v418
        %v797 = vunpack.c.l.b16 %v419
        %v798 = vunpack.c.h.b16 %v419
        %v799 = vunpack.c.l.b16 %v420
        %v800 = vunpack.c.h.b16 %v420
        %v801 = vunpack.c.l.b16 %v421
        %v802 = vunpack.c.h.b16 %v421
        %v803 = vunpack.c.l.b16 %v422
        %v804 = vunpack.c.h.b16 %v422
        %v805 = vunpack.c.l.b16 %v423
        %v806 = vunpack.c.h.b16 %v423
        %v807 = vunpack.c.l.b16 %v424
        %v808 = vunpack.c.h.b16 %v424
        %v809 = vunpack.c.l.b16 %v425
        %v810 = vunpack.c.h.b16 %v425
        %v811 = vunpack.c.l.b16 %v426
        %v812 = vunpack.c.h.b16 %v426
        %v813 = vunpack.c.l.b16 %v427
        %v814 = vunpack.c.h.b16 %v427
        %v815 = vunpack.c.l.b16 %v428
        %v816 = vunpack.c.h.b16 %v428
        %v817 = vunpack.c.l.b16 %v429
        %v818 = vunpack.c.h.b16 %v429
        %v819 = vunpack.c.l.b16 %v430
        %v820 = vunpack.c.h.b16 %v430
        %v821 = vunpack.c.l.b16 %v431
        %v822 = vunpack.c.h.b16 %v431
        %v823 = vunpack.c.l.b16 %v432
        %v824 = vunpack.c.h.b16 %v432
        %v825 = vunpack.c.l.b16 %v433
        %v826 = vunpack.c.h.b16 %v433
        %v827 = vunpack.c.l.b16 %v434
        %v828 = vunpack.c.h.b16 %v434
        %v829 = vunpack.c.l.b16 %v435
        %v830 = vunpack.c.h.b16 %v435
        %v831 = vunpack.c.l.b16 %v436
        %v832 = vunpack.c.h.b16 %v436
        %v833 = vunpack.c.l.b16 %v437
        %v834 = vunpack.c.h.b16 %v437
        %v835 = vunpack.c.l.b16 %v438
        %v836 = vunpack.c.h.b16 %v438
        %v837 = vunpack.c.l.b16 %v439
        %v838 = vunpack.c.h.b16 %v439
        %v839 = vunpack.c.l.b16 %v440
        %v840 = vunpack.c.h.b16 %v440
        %v841 = vunpack.c.l.b16 %v441
        %v842 = vunpack.c.h.b16 %v441
        %v843 = vunpack.c.l.b16 %v442
        %v844 = vunpack.c.h.b16 %v442
        %v845 = vunpack.c.l.b16 %v443
        %v846 = vunpack.c.h.b16 %v443
        %v847 = vunpack.c.l.b16 %v444
        %v848 = vunpack.c.h.b16 %v444
        %v849 = vunpack.c.l.b16 %v445
        %v850 = vunpack.c.h.b16 %v445
        %v851 = vunpack.c.l.b16 %v446
        %v852 = vunpack.c.h.b16 %v446
        %v853 = vunpack.c.l.b16 %v447
        %v854 = vunpack.c.h.b16 %v447
        %v855 = vunpack.c.l.b16 %v448
        %v856 = vunpack.c.h.b16 %v448
        %v857 = vunpack.c.l.b16 %v449
        %v858 = vunpack.c.h.b16 %v449
        %v859 = vunpack.c.l.b16 %v450
        %v860 = vunpack.c.h.b16 %v450
        %v861 = vunpack.c.l.b16 %v451
        %v862 = vunpack.c.h.b16 %v451
        %v863 = vunpack.c.l.b16 %v452
        %v864 = vunpack.c.h.b16 %v452
        %v865 = vunpack.c.l.b16 %v453
        %v866 = vunpack.c.h.b16 %v453
        %v867 = vpack.c.b16 %v615, %v611
        %v868 = vpack.c.b16 %v616, %v612
        %v869 = vpack.c.b16 %v617, %v613
        %v870 = vpack.c.b16 %v618, %v614
        %v871 = vpack.c.b16 %v623, %v619
        %v872 = vpack.c.b16 %v624, %v620
        %v873 = vpack.c.b16 %v625, %v621
        %v874 = vpack.c.b16 %v626, %v622
        %v875 = vpack.c.b16 %v631, %v627
        %v876 = vpack.c.b16 %v632, %v628
        %v877 = vpack.c.b16 %v633, %v629
        %v878 = vpack.c.b16 %v634, %v630
        %v879 = vpack.c.b16 %v639, %v635
        %v880 = vpack.c.b16 %v640, %v636
        %v881 = vpack.c.b16 %v641, %v637
        %v882 = vpack.c.b16 %v642, %v638
        %v883 = vpack.c.b16 %v647, %v643
        %v884 = vpack.c.b16 %v648, %v644
        %v885 = vpack.c.b16 %v649, %v645
        %v886 = vpack.c.b16 %v650, %v646
        %v887 = vpack.c.b16 %v655, %v651
        %v888 = vpack.c.b16 %v656, %v652
        %v889 = vpack.c.b16 %v657, %v653
        %v890 = vpack.c.b16 %v658, %v654
        %v891 = vpack.c.b16 %v663, %v659
        %v892 = vpack.c.b16 %v664, %v660
        %v893 = vpack.c.b16 %v665, %v661
        %v894 = vpack.c.b16 %v666, %v662
        %v895 = vpack.c.b16 %v671, %v667
        %v896 = vpack.c.b16 %v672, %v668
        %v897 = vpack.c.b16 %v673, %v669
        %v898 = vpack.c.b16 %v674, %v670
        %v899 = vpack.c.b16 %v679, %v675
        %v900 = vpack.c.b16 %v680, %v676
        %v901 = vpack.c.b16 %v681, %v677
        %v902 = vpack.c.b16 %v682, %v678
        %v903 = vpack.c.b16 %v687, %v683
        %v904 = vpack.c.b16 %v688, %v684
        %v905 = vpack.c.b16 %v689, %v685
        %v906 = vpack.c.b16 %v690, %v686
        %v907 = vpack.c.b16 %v695, %v691
        %v908 = vpack.c.b16 %v696, %v692
        %v909 = vpack.c.b16 %v697, %v693
        %v910 = vpack.c.b16 %v698, %v694
        %v911 = vpack.c.b16 %v703, %v699
        %v912 = vpack.c.b16 %v704, %v700
        %v913 = vpack.c.b16 %v705, %v701
        %v914 = vpack.c.b16 %v706, %v702
        %v915 = vpack.c.b16 %v711, %v707
        %v916 = vpack.c.b16 %v712, %v708
        %v917 = vpack.c.b16 %v713, %v709
        %v918 = vpack.c.b16 %v714, %v710
        %v919 = vpack.c.b16 %v719, %v715
        %v920 = vpack.c.b16 %v720, %v716
        %v921 = vpack.c.b16 %v721, %v717
        %v922 = vpack.c.b16 %v722, %v718
        %v923 = vpack.c.b16 %v727, %v723
        %v924 = vpack.c.b16 %v728, %v724
        %v925 = vpack.c.b16 %v729, %v725
        %v926 = vpack.c.b16 %v730, %v726
        %v927 = vpack.c.b16 %v735, %v731
        %v928 = vpack.c.b16 %v736, %v732
        %v929 = vpack.c.b16 %v737, %v733
        %v930 = vpack.c.b16 %v738, %v734
        %v931 = vpack.c.b16 %v743, %v739
        %v932 = vpack.c.b16 %v744, %v740
        %v933 = vpack.c.b16 %v745, %v741
        %v934 = vpack.c.b16 %v746, %v742
        %v935 = vpack.c.b16 %v751, %v747
        %v936 = vpack.c.b16 %v752, %v748
        %v937 = vpack.c.b16 %v753, %v749
        %v938 = vpack.c.b16 %v754, %v750
        %v939 = vpack.c.b16 %v759, %v755
        %v940 = vpack.c.b16 %v760, %v756
        %v941 = vpack.c.b16 %v761, %v757
        %v942 = vpack.c.b16 %v762, %v758
        %v943 = vpack.c.b16 %v767, %v763
        %v944 = vpack.c.b16 %v768, %v764
        %v945 = vpack.c.b16 %v769, %v765
        %v946 = vpack.c.b16 %v770, %v766
        %v947 = vpack.c.b16 %v775, %v771
        %v948 = vpack.c.b16 %v776, %v772
        %v949 = vpack.c.b16 %v777, %v773
        %v950 = vpack.c.b16 %v778, %v774
        %v951 = vpack.c.b16 %v783, %v779
        %v952 = vpack.c.b16 %v784, %v780
        %v953 = vpack.c.b16 %v785, %v781
        %v954 = vpack.c.b16 %v786, %v782
        %v955 = vpack.c.b16 %v791, %v787
        %v956 = vpack.c.b16 %v792, %v788
        %v957 = vpack.c.b16 %v793, %v789
        %v958 = vpack.c.b16 %v794, %v790
        %v959 = vpack.c.b16 %v799, %v795
        %v960 = vpack.c.b16 %v800, %v796
        %v961 = vpack.c.b16 %v801, %v797
        %v962 = vpack.c.b16 %v802, %v798
        %v963 = vpack.c.b16 %v807, %v803
        %v964 = vpack.c.b16 %v808, %v804
        %v965 = vpack.c.b16 %v809, %v805
        %v966 = vpack.c.b16 %v810, %v806
        %v967 = vpack.c.b16 %v815, %v811
        %v968 = vpack.c.b16 %v816, %v812
        %v969 = vpack.c.b16 %v817, %v813
        %v970 = vpack.c.b16 %v818, %v814
        %v971 = vpack.c.b16 %v823, %v819
        %v972 = vpack.c.b16 %v824, %v820
        %v973 = vpack.c.b16 %v825, %v821
        %v974 = vpack.c.b16 %v826, %v822
        %v975 = vpack.c.b16 %v831, %v827
        %v976 = vpack.c.b16 %v832, %v828
        %v977 = vpack.c.b16 %v833, %v829
        %v978 = vpack.c.b16 %v834, %v830
        %v979 = vpack.c.b16 %v839, %v835
        %v980 = vpack.c.b16 %v840, %v836
        %v981 = vpack.c.b16 %v841, %v837
        %v982 = vpack.c.b16 %v842, %v838
        %v983 = vpack.c.b16 %v847, %v843
        %v984 = vpack.c.b16 %v848, %v844
        %v985 = vpack.c.b16 %v849, %v845
        %v986 = vpack.c.b16 %v850, %v846
        %v987 = vpack.c.b16 %v855, %v851
        %v988 = vpack.c.b16 %v856, %v852
        %v989 = vpack.c.b16 %v857, %v853
        %v990 = vpack.c.b16 %v858, %v854
        %v991 = vpack.c.b16 %v863, %v859
        %v992 = vpack.c.b16 %v864, %v860
        %v993 = vpack.c.b16 %v865, %v861
        %v994 = vpack.c.b16 %v866, %v862
        %1123 = vmatprep.subr.bf16.mxu0 %v868
        %1124 = vmatpush1.bf16.msra.mxu0 %v867
        %1125 = vmatprep.subr.bf16.mxu0 %v872
        %1126 = vmatpush1.bf16.msra.mxu0 %v871
        %1127 = vmatprep.subr.bf16.mxu0 %v876
        %1128 = vmatpush1.bf16.msra.mxu0 %v875
        %1129 = vmatprep.subr.bf16.mxu0 %v880
        %1130 = vmatpush1.bf16.msra.mxu0 %v879
        %1131 = vmatprep.subr.bf16.mxu0 %v884
        %1132 = vmatpush1.bf16.msra.mxu0 %v883
        %1133 = vmatprep.subr.bf16.mxu0 %v888
        %1134 = vmatpush1.bf16.msra.mxu0 %v887
        %1135 = vmatprep.subr.bf16.mxu0 %v892
        %1136 = vmatpush1.bf16.msra.mxu0 %v891
        %1137 = vmatprep.subr.bf16.mxu0 %v896
        %1138 = vmatpush1.bf16.msra.mxu0 %v895
        %1139 = vmatprep.subr.bf16.mxu0 %v900
        %1140 = vmatpush1.bf16.msra.mxu0 %v899
        %1141 = vmatprep.subr.bf16.mxu0 %v904
        %1142 = vmatpush1.bf16.msra.mxu0 %v903
        %1143 = vmatprep.subr.bf16.mxu0 %v908
        %1144 = vmatpush1.bf16.msra.mxu0 %v907
        %1145 = vmatprep.subr.bf16.mxu0 %v912
        %1146 = vmatpush1.bf16.msra.mxu0 %v911
        %1147 = vmatprep.subr.bf16.mxu0 %v916
        %1148 = vmatpush1.bf16.msra.mxu0 %v915
        %1149 = vmatprep.subr.bf16.mxu0 %v920
        %1150 = vmatpush1.bf16.msra.mxu0 %v919
        %1151 = vmatprep.subr.bf16.mxu0 %v924
        %1152 = vmatpush1.bf16.msra.mxu0 %v923
        %1153 = vmatprep.subr.bf16.mxu0 %v928
        %1154 = vmatpush1.bf16.msra.mxu0 %v927
        %1155 = vmatprep.mubr.bf16.mxu0 %v476
        %1156 = vmatmul.mubr.bf16.gmra.mrb[0].mxu0 %v469
        %v1157 = vpop.f32.mrb[0].mxu0
        %v1158 = vadd.f32 0.0, %v1157
        %v1159 = vpop.f32.mrb[0].mxu0
        %v1160 = vadd.f32 0.0, %v1159
        %v1161 = vpop.f32.mrb[0].mxu0
        %v1162 = vpop.f32.mrb[0].mxu0
        %1163 = vdwg.mxu0
        %1164 = vmatprep.subr.bf16.mxu0 %v932
        %1165 = vmatpush1.bf16.msra.mxu0 %v931
        %1166 = vmatprep.subr.bf16.mxu0 %v936
        %1167 = vmatpush1.bf16.msra.mxu0 %v935
        %1168 = vmatprep.subr.bf16.mxu0 %v940
        %1169 = vmatpush1.bf16.msra.mxu0 %v939
        %1170 = vmatprep.subr.bf16.mxu0 %v944
        %1171 = vmatpush1.bf16.msra.mxu0 %v943
        %1172 = vmatprep.subr.bf16.mxu0 %v948
        %1173 = vmatpush1.bf16.msra.mxu0 %v947
        %1174 = vmatprep.subr.bf16.mxu0 %v952
        %1175 = vmatpush1.bf16.msra.mxu0 %v951
        %1176 = vmatprep.subr.bf16.mxu0 %v956
        %1177 = vmatpush1.bf16.msra.mxu0 %v955
        %1178 = vmatprep.subr.bf16.mxu0 %v960
        %1179 = vmatpush1.bf16.msra.mxu0 %v959
        %1180 = vmatprep.subr.bf16.mxu0 %v964
        %1181 = vmatpush1.bf16.msra.mxu0 %v963
        %1182 = vmatprep.subr.bf16.mxu0 %v968
        %1183 = vmatpush1.bf16.msra.mxu0 %v967
        %1184 = vmatprep.subr.bf16.mxu0 %v972
        %1185 = vmatpush1.bf16.msra.mxu0 %v971
        %1186 = vmatprep.subr.bf16.mxu0 %v976
        %1187 = vmatpush1.bf16.msra.mxu0 %v975
        %1188 = vmatprep.subr.bf16.mxu0 %v980
        %1189 = vmatpush1.bf16.msra.mxu0 %v979
        %1190 = vmatprep.subr.bf16.mxu0 %v984
        %1191 = vmatpush1.bf16.msra.mxu0 %v983
        %1192 = vmatprep.subr.bf16.mxu0 %v988
        %1193 = vmatpush1.bf16.msra.mxu0 %v987
        %1194 = vmatprep.subr.bf16.mxu0 %v992
        %1195 = vmatpush1.bf16.msra.mxu0 %v991
        %1196 = vmatprep.mubr.bf16.mxu0 %v478
        %1197 = vmatmul.mubr.bf16.gmra.mrb[0].mxu0 %v477
        %v1198 = vpop.f32.mrb[0].mxu0
        %v1199 = vadd.f32 %v1158, %v1198
        %v1200 = vpop.f32.mrb[0].mxu0
        %v1201 = vadd.f32 %v1160, %v1200
        %v1202 = vpop.f32.mrb[0].mxu0
        %v1203 = vpop.f32.mrb[0].mxu0
        %1204 = vdwg.mxu0
        %1205 = vmatprep.subr.bf16.mxu0 %v870
        %1206 = vmatpush1.bf16.msra.mxu0 %v869
        %1207 = vmatprep.subr.bf16.mxu0 %v874
        %1208 = vmatpush1.bf16.msra.mxu0 %v873
        %1209 = vmatprep.subr.bf16.mxu0 %v878
        %1210 = vmatpush1.bf16.msra.mxu0 %v877
        %1211 = vmatprep.subr.bf16.mxu0 %v882
        %1212 = vmatpush1.bf16.msra.mxu0 %v881
        %1213 = vmatprep.subr.bf16.mxu0 %v886
        %1214 = vmatpush1.bf16.msra.mxu0 %v885
        %1215 = vmatprep.subr.bf16.mxu0 %v890
        %1216 = vmatpush1.bf16.msra.mxu0 %v889
        %1217 = vmatprep.subr.bf16.mxu0 %v894
        %1218 = vmatpush1.bf16.msra.mxu0 %v893
        %1219 = vmatprep.subr.bf16.mxu0 %v898
        %1220 = vmatpush1.bf16.msra.mxu0 %v897
        %1221 = vmatprep.subr.bf16.mxu0 %v902
        %1222 = vmatpush1.bf16.msra.mxu0 %v901
        %1223 = vmatprep.subr.bf16.mxu0 %v906
        %1224 = vmatpush1.bf16.msra.mxu0 %v905
        %1225 = vmatprep.subr.bf16.mxu0 %v910
        %1226 = vmatpush1.bf16.msra.mxu0 %v909
        %1227 = vmatprep.subr.bf16.mxu0 %v914
        %1228 = vmatpush1.bf16.msra.mxu0 %v913
        %1229 = vmatprep.subr.bf16.mxu0 %v918
        %1230 = vmatpush1.bf16.msra.mxu0 %v917
        %1231 = vmatprep.subr.bf16.mxu0 %v922
        %1232 = vmatpush1.bf16.msra.mxu0 %v921
        %1233 = vmatprep.subr.bf16.mxu0 %v926
        %1234 = vmatpush1.bf16.msra.mxu0 %v925
        %1235 = vmatprep.subr.bf16.mxu0 %v930
        %1236 = vmatpush1.bf16.msra.mxu0 %v929
        %1237 = vmatprep.mubr.bf16.mxu0 %v476
        %1238 = vmatmul.mubr.bf16.gmra.mrb[0].mxu0 %v469
        %v1239 = vpop.f32.mrb[0].mxu0
        %v1240 = vadd.f32 0.0, %v1239
        %v1241 = vpop.f32.mrb[0].mxu0
        %v1242 = vadd.f32 0.0, %v1241
        %v1243 = vpop.f32.mrb[0].mxu0
        %v1244 = vpop.f32.mrb[0].mxu0
        %1245 = vdwg.mxu0
        %1246 = vmatprep.subr.bf16.mxu0 %v934
        %1247 = vmatpush1.bf16.msra.mxu0 %v933
        %1248 = vmatprep.subr.bf16.mxu0 %v938
        %1249 = vmatpush1.bf16.msra.mxu0 %v937
        %1250 = vmatprep.subr.bf16.mxu0 %v942
        %1251 = vmatpush1.bf16.msra.mxu0 %v941
        %1252 = vmatprep.subr.bf16.mxu0 %v946
        %1253 = vmatpush1.bf16.msra.mxu0 %v945
        %1254 = vmatprep.subr.bf16.mxu0 %v950
        %1255 = vmatpush1.bf16.msra.mxu0 %v949
        %1256 = vmatprep.subr.bf16.mxu0 %v954
        %1257 = vmatpush1.bf16.msra.mxu0 %v953
        %1258 = vmatprep.subr.bf16.mxu0 %v958
        %1259 = vmatpush1.bf16.msra.mxu0 %v957
        %1260 = vmatprep.subr.bf16.mxu0 %v962
        %1261 = vmatpush1.bf16.msra.mxu0 %v961
        %1262 = vmatprep.subr.bf16.mxu0 %v966
        %1263 = vmatpush1.bf16.msra.mxu0 %v965
        %1264 = vmatprep.subr.bf16.mxu0 %v970
        %1265 = vmatpush1.bf16.msra.mxu0 %v969
        %1266 = vmatprep.subr.bf16.mxu0 %v974
        %1267 = vmatpush1.bf16.msra.mxu0 %v973
        %1268 = vmatprep.subr.bf16.mxu0 %v978
        %1269 = vmatpush1.bf16.msra.mxu0 %v977
        %1270 = vmatprep.subr.bf16.mxu0 %v982
        %1271 = vmatpush1.bf16.msra.mxu0 %v981
        %1272 = vmatprep.subr.bf16.mxu0 %v986
        %1273 = vmatpush1.bf16.msra.mxu0 %v985
        %1274 = vmatprep.subr.bf16.mxu0 %v990
        %1275 = vmatpush1.bf16.msra.mxu0 %v989
        %1276 = vmatprep.subr.bf16.mxu0 %v994
        %1277 = vmatpush1.bf16.msra.mxu0 %v993
        %1278 = vmatprep.mubr.bf16.mxu0 %v478
        %1279 = vmatmul.mubr.bf16.gmra.mrb[0].mxu0 %v477
        %v1280 = vpop.f32.mrb[0].mxu0
        %v1281 = vadd.f32 %v1240, %v1280
        %v1282 = vpop.f32.mrb[0].mxu0
        %v1283 = vadd.f32 %v1242, %v1282
        %v1284 = vpop.f32.mrb[0].mxu0
        %v1285 = vpop.f32.mrb[0].mxu0
        %1286 = vdwg.mxu0
        %v1289 = vunpack.c.l.s4 1966171168
        %v1290 = vunpack.c.0.s8 %v1289
        %v1291 = vlaneseq
        %v1292 = vshrl.u32 %v1291, 7
        %v1293 = vsub.s32 %v1290, %v1292
        %v1294 = vrot.slane %v194, %v1293
        %v1295 = vcombine.high %v1294, %v1294
        %v1297 = vunpack.c.l.s4 1966171168
        %v1298 = vunpack.c.0.s8 %v1297
        %v1299 = vlaneseq
        %v1300 = vshrl.u32 %v1299, 7
        %v1301 = vsub.s32 %v1298, %v1300
        %v1302 = vrot.slane %v1294, %v1301
        %v1304 = vunpack.c.l.s4 1966171168
        %v1305 = vunpack.c.0.s8 %v1304
        %v1306 = vlaneseq
        %v1307 = vshrl.u32 %v1306, 7
        %v1308 = vsub.s32 %v1305, %v1307
        %v1309 = vrot.slane %v1295, %v1308
        %v1310 = vcombine.high %v1302, %v1302
        %v1311 = vcombine.high %v1309, %v1309
        %v1444 = vunpack.c.l.b16 %v195
        %v1445 = vunpack.c.h.b16 %v195
        %v1446 = vunpack.c.l.b16 %v196
        %v1447 = vunpack.c.h.b16 %v196
        %v1448 = vunpack.c.l.b16 %v197
        %v1449 = vunpack.c.h.b16 %v197
        %v1450 = vunpack.c.l.b16 %v198
        %v1451 = vunpack.c.h.b16 %v198
        %v1452 = vunpack.c.l.b16 %v199
        %v1453 = vunpack.c.h.b16 %v199
        %v1454 = vunpack.c.l.b16 %v200
        %v1455 = vunpack.c.h.b16 %v200
        %v1456 = vunpack.c.l.b16 %v201
        %v1457 = vunpack.c.h.b16 %v201
        %v1458 = vunpack.c.l.b16 %v202
        %v1459 = vunpack.c.h.b16 %v202
        %v1460 = vunpack.c.l.b16 %v203
        %v1461 = vunpack.c.h.b16 %v203
        %v1462 = vunpack.c.l.b16 %v204
        %v1463 = vunpack.c.h.b16 %v204
        %v1464 = vunpack.c.l.b16 %v205
        %v1465 = vunpack.c.h.b16 %v205
        %v1466 = vunpack.c.l.b16 %v206
        %v1467 = vunpack.c.h.b16 %v206
        %v1468 = vunpack.c.l.b16 %v207
        %v1469 = vunpack.c.h.b16 %v207
        %v1470 = vunpack.c.l.b16 %v208
        %v1471 = vunpack.c.h.b16 %v208
        %v1472 = vunpack.c.l.b16 %v209
        %v1473 = vunpack.c.h.b16 %v209
        %v1474 = vunpack.c.l.b16 %v210
        %v1475 = vunpack.c.h.b16 %v210
        %v1476 = vunpack.c.l.b16 %v211
        %v1477 = vunpack.c.h.b16 %v211
        %v1478 = vunpack.c.l.b16 %v212
        %v1479 = vunpack.c.h.b16 %v212
        %v1480 = vunpack.c.l.b16 %v213
        %v1481 = vunpack.c.h.b16 %v213
        %v1482 = vunpack.c.l.b16 %v214
        %v1483 = vunpack.c.h.b16 %v214
        %v1484 = vunpack.c.l.b16 %v215
        %v1485 = vunpack.c.h.b16 %v215
        %v1486 = vunpack.c.l.b16 %v216
        %v1487 = vunpack.c.h.b16 %v216
        %v1488 = vunpack.c.l.b16 %v217
        %v1489 = vunpack.c.h.b16 %v217
        %v1490 = vunpack.c.l.b16 %v218
        %v1491 = vunpack.c.h.b16 %v218
        %v1492 = vunpack.c.l.b16 %v219
        %v1493 = vunpack.c.h.b16 %v219
        %v1494 = vunpack.c.l.b16 %v220
        %v1495 = vunpack.c.h.b16 %v220
        %v1496 = vunpack.c.l.b16 %v221
        %v1497 = vunpack.c.h.b16 %v221
        %v1498 = vunpack.c.l.b16 %v222
        %v1499 = vunpack.c.h.b16 %v222
        %v1500 = vunpack.c.l.b16 %v223
        %v1501 = vunpack.c.h.b16 %v223
        %v1502 = vunpack.c.l.b16 %v224
        %v1503 = vunpack.c.h.b16 %v224
        %v1504 = vunpack.c.l.b16 %v225
        %v1505 = vunpack.c.h.b16 %v225
        %v1506 = vunpack.c.l.b16 %v226
        %v1507 = vunpack.c.h.b16 %v226
        %v1508 = vunpack.c.l.b16 %v227
        %v1509 = vunpack.c.h.b16 %v227
        %v1510 = vunpack.c.l.b16 %v228
        %v1511 = vunpack.c.h.b16 %v228
        %v1512 = vunpack.c.l.b16 %v229
        %v1513 = vunpack.c.h.b16 %v229
        %v1514 = vunpack.c.l.b16 %v230
        %v1515 = vunpack.c.h.b16 %v230
        %v1516 = vunpack.c.l.b16 %v231
        %v1517 = vunpack.c.h.b16 %v231
        %v1518 = vunpack.c.l.b16 %v232
        %v1519 = vunpack.c.h.b16 %v232
        %v1520 = vunpack.c.l.b16 %v233
        %v1521 = vunpack.c.h.b16 %v233
        %v1522 = vunpack.c.l.b16 %v234
        %v1523 = vunpack.c.h.b16 %v234
        %v1524 = vunpack.c.l.b16 %v235
        %v1525 = vunpack.c.h.b16 %v235
        %v1526 = vunpack.c.l.b16 %v236
        %v1527 = vunpack.c.h.b16 %v236
        %v1528 = vunpack.c.l.b16 %v237
        %v1529 = vunpack.c.h.b16 %v237
        %v1530 = vunpack.c.l.b16 %v238
        %v1531 = vunpack.c.h.b16 %v238
        %v1532 = vunpack.c.l.b16 %v239
        %v1533 = vunpack.c.h.b16 %v239
        %v1534 = vunpack.c.l.b16 %v240
        %v1535 = vunpack.c.h.b16 %v240
        %v1536 = vunpack.c.l.b16 %v241
        %v1537 = vunpack.c.h.b16 %v241
        %v1538 = vunpack.c.l.b16 %v242
        %v1539 = vunpack.c.h.b16 %v242
        %v1540 = vunpack.c.l.b16 %v243
        %v1541 = vunpack.c.h.b16 %v243
        %v1542 = vunpack.c.l.b16 %v244
        %v1543 = vunpack.c.h.b16 %v244
        %v1544 = vunpack.c.l.b16 %v245
        %v1545 = vunpack.c.h.b16 %v245
        %v1546 = vunpack.c.l.b16 %v246
        %v1547 = vunpack.c.h.b16 %v246
        %v1548 = vunpack.c.l.b16 %v247
        %v1549 = vunpack.c.h.b16 %v247
        %v1550 = vunpack.c.l.b16 %v248
        %v1551 = vunpack.c.h.b16 %v248
        %v1552 = vunpack.c.l.b16 %v249
        %v1553 = vunpack.c.h.b16 %v249
        %v1554 = vunpack.c.l.b16 %v250
        %v1555 = vunpack.c.h.b16 %v250
        %v1556 = vunpack.c.l.b16 %v251
        %v1557 = vunpack.c.h.b16 %v251
        %v1558 = vunpack.c.l.b16 %v252
        %v1559 = vunpack.c.h.b16 %v252
        %v1560 = vunpack.c.l.b16 %v253
        %v1561 = vunpack.c.h.b16 %v253
        %v1562 = vunpack.c.l.b16 %v254
        %v1563 = vunpack.c.h.b16 %v254
        %v1564 = vunpack.c.l.b16 %v255
        %v1565 = vunpack.c.h.b16 %v255
        %v1566 = vunpack.c.l.b16 %v256
        %v1567 = vunpack.c.h.b16 %v256
        %v1568 = vunpack.c.l.b16 %v257
        %v1569 = vunpack.c.h.b16 %v257
        %v1570 = vunpack.c.l.b16 %v258
        %v1571 = vunpack.c.h.b16 %v258
        %v1572 = vunpack.c.l.b16 %v259
        %v1573 = vunpack.c.h.b16 %v259
        %v1574 = vunpack.c.l.b16 %v260
        %v1575 = vunpack.c.h.b16 %v260
        %v1576 = vunpack.c.l.b16 %v261
        %v1577 = vunpack.c.h.b16 %v261
        %v1578 = vunpack.c.l.b16 %v262
        %v1579 = vunpack.c.h.b16 %v262
        %v1580 = vunpack.c.l.b16 %v263
        %v1581 = vunpack.c.h.b16 %v263
        %v1582 = vunpack.c.l.b16 %v264
        %v1583 = vunpack.c.h.b16 %v264
        %v1584 = vunpack.c.l.b16 %v265
        %v1585 = vunpack.c.h.b16 %v265
        %v1586 = vunpack.c.l.b16 %v266
        %v1587 = vunpack.c.h.b16 %v266
        %v1588 = vunpack.c.l.b16 %v267
        %v1589 = vunpack.c.h.b16 %v267
        %v1590 = vunpack.c.l.b16 %v268
        %v1591 = vunpack.c.h.b16 %v268
        %v1592 = vunpack.c.l.b16 %v269
        %v1593 = vunpack.c.h.b16 %v269
        %v1594 = vunpack.c.l.b16 %v270
        %v1595 = vunpack.c.h.b16 %v270
        %v1596 = vunpack.c.l.b16 %v271
        %v1597 = vunpack.c.h.b16 %v271
        %v1598 = vunpack.c.l.b16 %v272
        %v1599 = vunpack.c.h.b16 %v272
        %v1600 = vunpack.c.l.b16 %v273
        %v1601 = vunpack.c.h.b16 %v273
        %v1602 = vunpack.c.l.b16 %v274
        %v1603 = vunpack.c.h.b16 %v274
        %v1604 = vunpack.c.l.b16 %v275
        %v1605 = vunpack.c.h.b16 %v275
        %v1606 = vunpack.c.l.b16 %v276
        %v1607 = vunpack.c.h.b16 %v276
        %v1608 = vunpack.c.l.b16 %v277
        %v1609 = vunpack.c.h.b16 %v277
        %v1610 = vunpack.c.l.b16 %v278
        %v1611 = vunpack.c.h.b16 %v278
        %v1612 = vunpack.c.l.b16 %v279
        %v1613 = vunpack.c.h.b16 %v279
        %v1614 = vunpack.c.l.b16 %v280
        %v1615 = vunpack.c.h.b16 %v280
        %v1616 = vunpack.c.l.b16 %v281
        %v1617 = vunpack.c.h.b16 %v281
        %v1618 = vunpack.c.l.b16 %v282
        %v1619 = vunpack.c.h.b16 %v282
        %v1620 = vunpack.c.l.b16 %v283
        %v1621 = vunpack.c.h.b16 %v283
        %v1622 = vunpack.c.l.b16 %v284
        %v1623 = vunpack.c.h.b16 %v284
        %v1624 = vunpack.c.l.b16 %v285
        %v1625 = vunpack.c.h.b16 %v285
        %v1626 = vunpack.c.l.b16 %v286
        %v1627 = vunpack.c.h.b16 %v286
        %v1628 = vunpack.c.l.b16 %v287
        %v1629 = vunpack.c.h.b16 %v287
        %v1630 = vunpack.c.l.b16 %v288
        %v1631 = vunpack.c.h.b16 %v288
        %v1632 = vunpack.c.l.b16 %v289
        %v1633 = vunpack.c.h.b16 %v289
        %v1634 = vunpack.c.l.b16 %v290
        %v1635 = vunpack.c.h.b16 %v290
        %v1636 = vunpack.c.l.b16 %v291
        %v1637 = vunpack.c.h.b16 %v291
        %v1638 = vunpack.c.l.b16 %v292
        %v1639 = vunpack.c.h.b16 %v292
        %v1640 = vunpack.c.l.b16 %v293
        %v1641 = vunpack.c.h.b16 %v293
        %v1642 = vunpack.c.l.b16 %v294
        %v1643 = vunpack.c.h.b16 %v294
        %v1644 = vunpack.c.l.b16 %v295
        %v1645 = vunpack.c.h.b16 %v295
        %v1646 = vunpack.c.l.b16 %v296
        %v1647 = vunpack.c.h.b16 %v296
        %v1648 = vunpack.c.l.b16 %v297
        %v1649 = vunpack.c.h.b16 %v297
        %v1650 = vunpack.c.l.b16 %v298
        %v1651 = vunpack.c.h.b16 %v298
        %v1652 = vunpack.c.l.b16 %v299
        %v1653 = vunpack.c.h.b16 %v299
        %v1654 = vunpack.c.l.b16 %v300
        %v1655 = vunpack.c.h.b16 %v300
        %v1656 = vunpack.c.l.b16 %v301
        %v1657 = vunpack.c.h.b16 %v301
        %v1658 = vunpack.c.l.b16 %v302
        %v1659 = vunpack.c.h.b16 %v302
        %v1660 = vunpack.c.l.b16 %v303
        %v1661 = vunpack.c.h.b16 %v303
        %v1662 = vunpack.c.l.b16 %v304
        %v1663 = vunpack.c.h.b16 %v304
        %v1664 = vunpack.c.l.b16 %v305
        %v1665 = vunpack.c.h.b16 %v305
        %v1666 = vunpack.c.l.b16 %v306
        %v1667 = vunpack.c.h.b16 %v306
        %v1668 = vunpack.c.l.b16 %v307
        %v1669 = vunpack.c.h.b16 %v307
        %v1670 = vunpack.c.l.b16 %v308
        %v1671 = vunpack.c.h.b16 %v308
        %v1672 = vunpack.c.l.b16 %v309
        %v1673 = vunpack.c.h.b16 %v309
        %v1674 = vunpack.c.l.b16 %v310
        %v1675 = vunpack.c.h.b16 %v310
        %v1676 = vunpack.c.l.b16 %v311
        %v1677 = vunpack.c.h.b16 %v311
        %v1678 = vunpack.c.l.b16 %v312
        %v1679 = vunpack.c.h.b16 %v312
        %v1680 = vunpack.c.l.b16 %v313
        %v1681 = vunpack.c.h.b16 %v313
        %v1682 = vunpack.c.l.b16 %v314
        %v1683 = vunpack.c.h.b16 %v314
        %v1684 = vunpack.c.l.b16 %v315
        %v1685 = vunpack.c.h.b16 %v315
        %v1686 = vunpack.c.l.b16 %v316
        %v1687 = vunpack.c.h.b16 %v316
        %v1688 = vunpack.c.l.b16 %v317
        %v1689 = vunpack.c.h.b16 %v317
        %v1690 = vunpack.c.l.b16 %v318
        %v1691 = vunpack.c.h.b16 %v318
        %v1692 = vunpack.c.l.b16 %v319
        %v1693 = vunpack.c.h.b16 %v319
        %v1694 = vunpack.c.l.b16 %v320
        %v1695 = vunpack.c.h.b16 %v320
        %v1696 = vunpack.c.l.b16 %v321
        %v1697 = vunpack.c.h.b16 %v321
        %v1698 = vunpack.c.l.b16 %v322
        %v1699 = vunpack.c.h.b16 %v322
        %v1700 = vpack.c.b16 %v1448, %v1444
        %v1701 = vpack.c.b16 %v1449, %v1445
        %v1702 = vpack.c.b16 %v1450, %v1446
        %v1703 = vpack.c.b16 %v1451, %v1447
        %v1704 = vpack.c.b16 %v1456, %v1452
        %v1705 = vpack.c.b16 %v1457, %v1453
        %v1706 = vpack.c.b16 %v1458, %v1454
        %v1707 = vpack.c.b16 %v1459, %v1455
        %v1708 = vpack.c.b16 %v1464, %v1460
        %v1709 = vpack.c.b16 %v1465, %v1461
        %v1710 = vpack.c.b16 %v1466, %v1462
        %v1711 = vpack.c.b16 %v1467, %v1463
        %v1712 = vpack.c.b16 %v1472, %v1468
        %v1713 = vpack.c.b16 %v1473, %v1469
        %v1714 = vpack.c.b16 %v1474, %v1470
        %v1715 = vpack.c.b16 %v1475, %v1471
        %v1716 = vpack.c.b16 %v1480, %v1476
        %v1717 = vpack.c.b16 %v1481, %v1477
        %v1718 = vpack.c.b16 %v1482, %v1478
        %v1719 = vpack.c.b16 %v1483, %v1479
        %v1720 = vpack.c.b16 %v1488, %v1484
        %v1721 = vpack.c.b16 %v1489, %v1485
        %v1722 = vpack.c.b16 %v1490, %v1486
        %v1723 = vpack.c.b16 %v1491, %v1487
        %v1724 = vpack.c.b16 %v1496, %v1492
        %v1725 = vpack.c.b16 %v1497, %v1493
        %v1726 = vpack.c.b16 %v1498, %v1494
        %v1727 = vpack.c.b16 %v1499, %v1495
        %v1728 = vpack.c.b16 %v1504, %v1500
        %v1729 = vpack.c.b16 %v1505, %v1501
        %v1730 = vpack.c.b16 %v1506, %v1502
        %v1731 = vpack.c.b16 %v1507, %v1503
        %v1732 = vpack.c.b16 %v1512, %v1508
        %v1733 = vpack.c.b16 %v1513, %v1509
        %v1734 = vpack.c.b16 %v1514, %v1510
        %v1735 = vpack.c.b16 %v1515, %v1511
        %v1736 = vpack.c.b16 %v1520, %v1516
        %v1737 = vpack.c.b16 %v1521, %v1517
        %v1738 = vpack.c.b16 %v1522, %v1518
        %v1739 = vpack.c.b16 %v1523, %v1519
        %v1740 = vpack.c.b16 %v1528, %v1524
        %v1741 = vpack.c.b16 %v1529, %v1525
        %v1742 = vpack.c.b16 %v1530, %v1526
        %v1743 = vpack.c.b16 %v1531, %v1527
        %v1744 = vpack.c.b16 %v1536, %v1532
        %v1745 = vpack.c.b16 %v1537, %v1533
        %v1746 = vpack.c.b16 %v1538, %v1534
        %v1747 = vpack.c.b16 %v1539, %v1535
        %v1748 = vpack.c.b16 %v1544, %v1540
        %v1749 = vpack.c.b16 %v1545, %v1541
        %v1750 = vpack.c.b16 %v1546, %v1542
        %v1751 = vpack.c.b16 %v1547, %v1543
        %v1752 = vpack.c.b16 %v1552, %v1548
        %v1753 = vpack.c.b16 %v1553, %v1549
        %v1754 = vpack.c.b16 %v1554, %v1550
        %v1755 = vpack.c.b16 %v1555, %v1551
        %v1756 = vpack.c.b16 %v1560, %v1556
        %v1757 = vpack.c.b16 %v1561, %v1557
        %v1758 = vpack.c.b16 %v1562, %v1558
        %v1759 = vpack.c.b16 %v1563, %v1559
        %v1760 = vpack.c.b16 %v1568, %v1564
        %v1761 = vpack.c.b16 %v1569, %v1565
        %v1762 = vpack.c.b16 %v1570, %v1566
        %v1763 = vpack.c.b16 %v1571, %v1567
        %v1764 = vpack.c.b16 %v1576, %v1572
        %v1765 = vpack.c.b16 %v1577, %v1573
        %v1766 = vpack.c.b16 %v1578, %v1574
        %v1767 = vpack.c.b16 %v1579, %v1575
        %v1768 = vpack.c.b16 %v1584, %v1580
        %v1769 = vpack.c.b16 %v1585, %v1581
        %v1770 = vpack.c.b16 %v1586, %v1582
        %v1771 = vpack.c.b16 %v1587, %v1583
        %v1772 = vpack.c.b16 %v1592, %v1588
        %v1773 = vpack.c.b16 %v1593, %v1589
        %v1774 = vpack.c.b16 %v1594, %v1590
        %v1775 = vpack.c.b16 %v1595, %v1591
        %v1776 = vpack.c.b16 %v1600, %v1596
        %v1777 = vpack.c.b16 %v1601, %v1597
        %v1778 = vpack.c.b16 %v1602, %v1598
        %v1779 = vpack.c.b16 %v1603, %v1599
        %v1780 = vpack.c.b16 %v1608, %v1604
        %v1781 = vpack.c.b16 %v1609, %v1605
        %v1782 = vpack.c.b16 %v1610, %v1606
        %v1783 = vpack.c.b16 %v1611, %v1607
        %v1784 = vpack.c.b16 %v1616, %v1612
        %v1785 = vpack.c.b16 %v1617, %v1613
        %v1786 = vpack.c.b16 %v1618, %v1614
        %v1787 = vpack.c.b16 %v1619, %v1615
        %v1788 = vpack.c.b16 %v1624, %v1620
        %v1789 = vpack.c.b16 %v1625, %v1621
        %v1790 = vpack.c.b16 %v1626, %v1622
        %v1791 = vpack.c.b16 %v1627, %v1623
        %v1792 = vpack.c.b16 %v1632, %v1628
        %v1793 = vpack.c.b16 %v1633, %v1629
        %v1794 = vpack.c.b16 %v1634, %v1630
        %v1795 = vpack.c.b16 %v1635, %v1631
        %v1796 = vpack.c.b16 %v1640, %v1636
        %v1797 = vpack.c.b16 %v1641, %v1637
        %v1798 = vpack.c.b16 %v1642, %v1638
        %v1799 = vpack.c.b16 %v1643, %v1639
        %v1800 = vpack.c.b16 %v1648, %v1644
        %v1801 = vpack.c.b16 %v1649, %v1645
        %v1802 = vpack.c.b16 %v1650, %v1646
        %v1803 = vpack.c.b16 %v1651, %v1647
        %v1804 = vpack.c.b16 %v1656, %v1652
        %v1805 = vpack.c.b16 %v1657, %v1653
        %v1806 = vpack.c.b16 %v1658, %v1654
        %v1807 = vpack.c.b16 %v1659, %v1655
        %v1808 = vpack.c.b16 %v1664, %v1660
        %v1809 = vpack.c.b16 %v1665, %v1661
        %v1810 = vpack.c.b16 %v1666, %v1662
        %v1811 = vpack.c.b16 %v1667, %v1663
        %v1812 = vpack.c.b16 %v1672, %v1668
        %v1813 = vpack.c.b16 %v1673, %v1669
        %v1814 = vpack.c.b16 %v1674, %v1670
        %v1815 = vpack.c.b16 %v1675, %v1671
        %v1816 = vpack.c.b16 %v1680, %v1676
        %v1817 = vpack.c.b16 %v1681, %v1677
        %v1818 = vpack.c.b16 %v1682, %v1678
        %v1819 = vpack.c.b16 %v1683, %v1679
        %v1820 = vpack.c.b16 %v1688, %v1684
        %v1821 = vpack.c.b16 %v1689, %v1685
        %v1822 = vpack.c.b16 %v1690, %v1686
        %v1823 = vpack.c.b16 %v1691, %v1687
        %v1824 = vpack.c.b16 %v1696, %v1692
        %v1825 = vpack.c.b16 %v1697, %v1693
        %v1826 = vpack.c.b16 %v1698, %v1694
        %v1827 = vpack.c.b16 %v1699, %v1695
        %1956 = vmatprep.subr.bf16.mxu0 %v1701
        %1957 = vmatpush1.bf16.msra.mxu0 %v1700
        %1958 = vmatprep.subr.bf16.mxu0 %v1705
        %1959 = vmatpush1.bf16.msra.mxu0 %v1704
        %1960 = vmatprep.subr.bf16.mxu0 %v1709
        %1961 = vmatpush1.bf16.msra.mxu0 %v1708
        %1962 = vmatprep.subr.bf16.mxu0 %v1713
        %1963 = vmatpush1.bf16.msra.mxu0 %v1712
        %1964 = vmatprep.subr.bf16.mxu0 %v1717
        %1965 = vmatpush1.bf16.msra.mxu0 %v1716
        %1966 = vmatprep.subr.bf16.mxu0 %v1721
        %1967 = vmatpush1.bf16.msra.mxu0 %v1720
        %1968 = vmatprep.subr.bf16.mxu0 %v1725
        %1969 = vmatpush1.bf16.msra.mxu0 %v1724
        %1970 = vmatprep.subr.bf16.mxu0 %v1729
        %1971 = vmatpush1.bf16.msra.mxu0 %v1728
        %1972 = vmatprep.subr.bf16.mxu0 %v1733
        %1973 = vmatpush1.bf16.msra.mxu0 %v1732
        %1974 = vmatprep.subr.bf16.mxu0 %v1737
        %1975 = vmatpush1.bf16.msra.mxu0 %v1736
        %1976 = vmatprep.subr.bf16.mxu0 %v1741
        %1977 = vmatpush1.bf16.msra.mxu0 %v1740
        %1978 = vmatprep.subr.bf16.mxu0 %v1745
        %1979 = vmatpush1.bf16.msra.mxu0 %v1744
        %1980 = vmatprep.subr.bf16.mxu0 %v1749
        %1981 = vmatpush1.bf16.msra.mxu0 %v1748
        %1982 = vmatprep.subr.bf16.mxu0 %v1753
        %1983 = vmatpush1.bf16.msra.mxu0 %v1752
        %1984 = vmatprep.subr.bf16.mxu0 %v1757
        %1985 = vmatpush1.bf16.msra.mxu0 %v1756
        %1986 = vmatprep.subr.bf16.mxu0 %v1761
        %1987 = vmatpush1.bf16.msra.mxu0 %v1760
        %1988 = vmatprep.mubr.bf16.mxu0 %v1309
        %1989 = vmatmul.mubr.bf16.gmra.mrb[0].mxu0 %v1302
        %v1990 = vpop.f32.mrb[0].mxu0
        %v1991 = vadd.f32 %v1199, %v1990
        %v1992 = vpop.f32.mrb[0].mxu0
        %v1993 = vadd.f32 %v1201, %v1992
        %v1994 = vpop.f32.mrb[0].mxu0
        %v1995 = vpop.f32.mrb[0].mxu0
        %1996 = vdwg.mxu0
        %1997 = vmatprep.subr.bf16.mxu0 %v1765
        %1998 = vmatpush1.bf16.msra.mxu0 %v1764
        %1999 = vmatprep.subr.bf16.mxu0 %v1769
        %2000 = vmatpush1.bf16.msra.mxu0 %v1768
        %2001 = vmatprep.subr.bf16.mxu0 %v1773
        %2002 = vmatpush1.bf16.msra.mxu0 %v1772
        %2003 = vmatprep.subr.bf16.mxu0 %v1777
        %2004 = vmatpush1.bf16.msra.mxu0 %v1776
        %2005 = vmatprep.subr.bf16.mxu0 %v1781
        %2006 = vmatpush1.bf16.msra.mxu0 %v1780
        %2007 = vmatprep.subr.bf16.mxu0 %v1785
        %2008 = vmatpush1.bf16.msra.mxu0 %v1784
        %2009 = vmatprep.subr.bf16.mxu0 %v1789
        %2010 = vmatpush1.bf16.msra.mxu0 %v1788
        %2011 = vmatprep.subr.bf16.mxu0 %v1793
        %2012 = vmatpush1.bf16.msra.mxu0 %v1792
        %2013 = vmatprep.subr.bf16.mxu0 %v1797
        %2014 = vmatpush1.bf16.msra.mxu0 %v1796
        %2015 = vmatprep.subr.bf16.mxu0 %v1801
        %2016 = vmatpush1.bf16.msra.mxu0 %v1800
        %2017 = vmatprep.subr.bf16.mxu0 %v1805
        %2018 = vmatpush1.bf16.msra.mxu0 %v1804
        %2019 = vmatprep.subr.bf16.mxu0 %v1809
        %2020 = vmatpush1.bf16.msra.mxu0 %v1808
        %2021 = vmatprep.subr.bf16.mxu0 %v1813
        %2022 = vmatpush1.bf16.msra.mxu0 %v1812
        %2023 = vmatprep.subr.bf16.mxu0 %v1817
        %2024 = vmatpush1.bf16.msra.mxu0 %v1816
        %2025 = vmatprep.subr.bf16.mxu0 %v1821
        %2026 = vmatpush1.bf16.msra.mxu0 %v1820
        %2027 = vmatprep.subr.bf16.mxu0 %v1825
        %2028 = vmatpush1.bf16.msra.mxu0 %v1824
        %2029 = vmatprep.mubr.bf16.mxu0 %v1311
        %2030 = vmatmul.mubr.bf16.gmra.mrb[0].mxu0 %v1310
        %v2031 = vpop.f32.mrb[0].mxu0
        %v2032 = vadd.f32 %v1991, %v2031
        %v2033 = vpop.f32.mrb[0].mxu0
        %v2034 = vadd.f32 %v1993, %v2033
        %v2035 = vpop.f32.mrb[0].mxu0
        %v2036 = vpop.f32.mrb[0].mxu0
        %2037 = vdwg.mxu0
        %2038 = vmatprep.subr.bf16.mxu0 %v1703
        %2039 = vmatpush1.bf16.msra.mxu0 %v1702
        %2040 = vmatprep.subr.bf16.mxu0 %v1707
        %2041 = vmatpush1.bf16.msra.mxu0 %v1706
        %2042 = vmatprep.subr.bf16.mxu0 %v1711
        %2043 = vmatpush1.bf16.msra.mxu0 %v1710
        %2044 = vmatprep.subr.bf16.mxu0 %v1715
        %2045 = vmatpush1.bf16.msra.mxu0 %v1714
        %2046 = vmatprep.subr.bf16.mxu0 %v1719
        %2047 = vmatpush1.bf16.msra.mxu0 %v1718
        %2048 = vmatprep.subr.bf16.mxu0 %v1723
        %2049 = vmatpush1.bf16.msra.mxu0 %v1722
        %2050 = vmatprep.subr.bf16.mxu0 %v1727
        %2051 = vmatpush1.bf16.msra.mxu0 %v1726
        %2052 = vmatprep.subr.bf16.mxu0 %v1731
        %2053 = vmatpush1.bf16.msra.mxu0 %v1730
        %2054 = vmatprep.subr.bf16.mxu0 %v1735
        %2055 = vmatpush1.bf16.msra.mxu0 %v1734
        %2056 = vmatprep.subr.bf16.mxu0 %v1739
        %2057 = vmatpush1.bf16.msra.mxu0 %v1738
        %2058 = vmatprep.subr.bf16.mxu0 %v1743
        %2059 = vmatpush1.bf16.msra.mxu0 %v1742
        %2060 = vmatprep.subr.bf16.mxu0 %v1747
        %2061 = vmatpush1.bf16.msra.mxu0 %v1746
        %2062 = vmatprep.subr.bf16.mxu0 %v1751
        %2063 = vmatpush1.bf16.msra.mxu0 %v1750
        %2064 = vmatprep.subr.bf16.mxu0 %v1755
        %2065 = vmatpush1.bf16.msra.mxu0 %v1754
        %2066 = vmatprep.subr.bf16.mxu0 %v1759
        %2067 = vmatpush1.bf16.msra.mxu0 %v1758
        %2068 = vmatprep.subr.bf16.mxu0 %v1763
        %2069 = vmatpush1.bf16.msra.mxu0 %v1762
        %2070 = vmatprep.mubr.bf16.mxu0 %v1309
        %2071 = vmatmul.mubr.bf16.gmra.mrb[0].mxu0 %v1302
        %v2072 = vpop.f32.mrb[0].mxu0
        %v2073 = vadd.f32 %v1281, %v2072
        %v2074 = vpop.f32.mrb[0].mxu0
        %v2075 = vadd.f32 %v1283, %v2074
        %v2076 = vpop.f32.mrb[0].mxu0
        %v2077 = vpop.f32.mrb[0].mxu0
        %2078 = vdwg.mxu0
        %2079 = vmatprep.subr.bf16.mxu0 %v1767
        %2080 = vmatpush1.bf16.msra.mxu0 %v1766
        %2081 = vmatprep.subr.bf16.mxu0 %v1771
        %2082 = vmatpush1.bf16.msra.mxu0 %v1770
        %2083 = vmatprep.subr.bf16.mxu0 %v1775
        %2084 = vmatpush1.bf16.msra.mxu0 %v1774
        %2085 = vmatprep.subr.bf16.mxu0 %v1779
        %2086 = vmatpush1.bf16.msra.mxu0 %v1778
        %2087 = vmatprep.subr.bf16.mxu0 %v1783
        %2088 = vmatpush1.bf16.msra.mxu0 %v1782
        %2089 = vmatprep.subr.bf16.mxu0 %v1787
        %2090 = vmatpush1.bf16.msra.mxu0 %v1786
        %2091 = vmatprep.subr.bf16.mxu0 %v1791
        %2092 = vmatpush1.bf16.msra.mxu0 %v1790
        %2093 = vmatprep.subr.bf16.mxu0 %v1795
        %2094 = vmatpush1.bf16.msra.mxu0 %v1794
        %2095 = vmatprep.subr.bf16.mxu0 %v1799
        %2096 = vmatpush1.bf16.msra.mxu0 %v1798
        %2097 = vmatprep.subr.bf16.mxu0 %v1803
        %2098 = vmatpush1.bf16.msra.mxu0 %v1802
        %2099 = vmatprep.subr.bf16.mxu0 %v1807
        %2100 = vmatpush1.bf16.msra.mxu0 %v1806
        %2101 = vmatprep.subr.bf16.mxu0 %v1811
        %2102 = vmatpush1.bf16.msra.mxu0 %v1810
        %2103 = vmatprep.subr.bf16.mxu0 %v1815
        %2104 = vmatpush1.bf16.msra.mxu0 %v1814
        %2105 = vmatprep.subr.bf16.mxu0 %v1819
        %2106 = vmatpush1.bf16.msra.mxu0 %v1818
        %2107 = vmatprep.subr.bf16.mxu0 %v1823
        %2108 = vmatpush1.bf16.msra.mxu0 %v1822
        %2109 = vmatprep.subr.bf16.mxu0 %v1827
        %2110 = vmatpush1.bf16.msra.mxu0 %v1826
        %2111 = vmatprep.mubr.bf16.mxu0 %v1311
        %2112 = vmatmul.mubr.bf16.gmra.mrb[0].mxu0 %v1310
        %v2113 = vpop.f32.mrb[0].mxu0
        %v2114 = vadd.f32 %v2073, %v2113
        %v2115 = vpop.f32.mrb[0].mxu0
        %v2116 = vadd.f32 %v2075, %v2115
        %v2117 = vpop.f32.mrb[0].mxu0
        %v2118 = vpop.f32.mrb[0].mxu0
        %2119 = vdwg.mxu0
        %v2120 = vld [vmem:[%s2] sm:$0xf]
        %v2122 = vlaneseq
        %v2123 = vshrl.u32 %v2122, 7
        %v2124 = vsub.s32 0, %v2123
        %v2125 = vrot.slane %v2120, %v2124
        %v2126 = vlaneseq
        %v2127 = vshrl.u32 %v2126, 7
        %v2128 = vsub.s32 1, %v2127
        %v2129 = vrot.slane %v2120, %v2128
        %v2130 = vlaneseq
        %v2131 = vshrl.u32 %v2130, 7
        %v2132 = vsub.s32 2, %v2131
        %v2133 = vrot.slane %v2120, %v2132
        %v2134 = vlaneseq
        %v2135 = vshrl.u32 %v2134, 7
        %v2136 = vsub.s32 3, %v2135
        %v2137 = vrot.slane %v2120, %v2136
        %v2142 = vadd.f32 %v2032, %v2125
        %v2143 = vadd.f32 %v2034, %v2129
        %v2144 = vadd.f32 %v2114, %v2133
        %v2145 = vadd.f32 %v2116, %v2137
        %v2146 = vmax.f32 %v2142, 0.0
        %v2147 = vmax.f32 %v2143, 0.0
        %v2148 = vmax.f32 %v2144, 0.0
        %v2149 = vmax.f32 %v2145, 0.0
        %v2154 = vcombine.low %v2146, %v2147
        %v2155 = vcombine.low %v2148, %v2149
        %v2157 = vunpack.c.l.s4 1983009808
        %v2158 = vunpack.c.0.s8 %v2157
        %v2159 = vlaneseq
        %v2160 = vshrl.u32 %v2159, 7
        %v2161 = vsub.s32 %v2158, %v2160
        %v2162 = vrot.slane %v2154, %v2161
        %v2164 = vunpack.c.l.s4 1983009808
        %v2165 = vunpack.c.0.s8 %v2164
        %v2166 = vlaneseq
        %v2167 = vshrl.u32 %v2166, 7
        %v2168 = vsub.s32 %v2165, %v2167
        %v2169 = vrot.slane %v2155, %v2168
        %v2170 = vcombine.low %v2162, %v2169
        %2172 = vst [vmem:[%s185] sm:$0xff] %v2170
        %s2173 = sand.u32 %s109, 1
        %s2174 = scalar_lea.sflag [#allocation3], %s2173
        %s2175 = sand.u32 %s109, 1
        %s2176 = smul.addr %s2175, 8
        %s2177 = scalar_lea.vmem [#allocation2], %s2176
        // Predicated region
        $region33: #{_forward.7} parent=31 // pred_check
          %p2178 = pneg %p119
        $region34: #{_forward.7} parent=31 // pred_check_branch
          %2180 = sbr.rel (%p2178) target = $region36
        $region35: #{_forward.7} parent=31 // pred_region
          %s2182 = ssub.s32 128, 128
          %2183 = vsyncadd %s2174, %s2182
          %s2184 = smul.addr %s22, 4
          %s2185 = smul.addr %s21, 4
          %s2186 = sadd.s32 %s2184, %s2185
          %s2187 = smul.addr %s2186, 32
          %s2188 = scalar_lea.hbm %s3, %s2187
          %s2190 = sshll.u32 %s2177, 4
          %s2191 = int_to_ptr.vmem [resolvable:$true] %s2190
          %2193 = dma.vmem_to_hbm [thread:$0]  %s2191, 128, %s2188, %s2174
        $region36: #{_forward.7} parent=31 // pred_fallthru
          _
      $region32: #{_forward.7} parent=5 // pred_fallthru
        _
      %p2194 = scmp.le.s32.totalorder 2, %s12
      // Predicated region
      $region37: #{_forward.7} parent=5 // pred_check
        %p2195 = pneg %p2194
      $region38: #{_forward.7} parent=5 // pred_check_branch
        %2197 = sbr.rel (%p2195) target = $region40
      $region39: #{_forward.7} parent=5 // pred_region
        %s2198 = ssub.s32 %s12, 2
        // Predicated region
        $region41: #{_forward.7} parent=39 // pred_check
          %p2199 = pneg %p125
        $region42: #{_forward.7} parent=39 // pred_check_branch
          %2201 = sbr.rel (%p2199) target = $region44
        $region43: #{_forward.7} parent=39 // pred_region
          %s2202 = sand.u32 %s110, 1
          %s2203 = scalar_lea.sflag [#allocation3], %s2202
          %s2204 = sand.u32 %s110, 1
          %s2205 = smul.addr %s2204, 8
          %s2206 = scalar_lea.vmem [#allocation2], %s2205
          %2207 = dma.done %s2203, 128
        $region44: #{_forward.7} parent=39 // pred_fallthru
          _
      $region40: #{_forward.7} parent=5 // pred_fallthru
        _
    $region6: #{_forward.7} parent=1 // loop_footer
      %s16 = sadd.s32 1, %s12
    $region7: #{_forward.7} parent=1 // loop_footer_branch
      %11 = sbr.rel target = $region3
    $region8: #{_forward.7} parent=1 // loop_exit
      _
    %2208 = vsyncpa [#allocation3], 1
    %s2209 = scalar_lea.sflag [#allocation3], 1
    %2210 = vsyncpa %s2209, 1

</llo_original>
